<compile_context>
chip_gen: v7x
topology: tpu7x:2x2x1
jax: 0.10.0
libtpu: 0.0.40
codegen_flags: <defaults>
</compile_context>

<pallas_src>
import jax
import jax.numpy as jnp
from jax.experimental import pallas as pl
from jax.experimental.pallas import tpu as pltpu


CP = 128  # channel padding: one full lane width


def _elu(y):
    # F.elu(alpha=1): clamp exp argument so the untaken branch never overflows.
    return jnp.where(y > 0, y, jnp.exp(jnp.minimum(y, 0.0)) - 1.0)


# ---------------------------------------------------------------------------
# Fused whole-model kernel builder.
#   refs = (x_pad, A_bf16, S_vert_bf16,
#           <2 refs per layer: stacked weight, bias>, Wf_pad, bf_pad,   # inputs
#           out)                                                        # output
# ---------------------------------------------------------------------------
def build_fused_kernel(layer_types, N, K):
    L = len(layer_types)

    def kernel(*refs):
        x_ref, a_ref, s_ref = refs[0], refs[1], refs[2]
        wrefs = refs[3:3 + 2 * L + 2]
        out_ref = refs[3 + 2 * L + 2]

        x_bf = x_ref[...].astype(jnp.bfloat16)        # [N, CP], zero-padded channels
        acts = [x_bf]                                 # xs[0] = input features

        wi = 0
        for lt in layer_types:
            w_ref, b_ref = wrefs[wi], wrefs[wi + 1]
            wi += 2
            if lt == "spline":
                # One big S contraction: [K*N, N] @ [N, CP], bf16 x bf16, f32 acc.
                sx = jnp.dot(s_ref[...], x_bf, preferred_element_type=jnp.float32)
                sx_bf = sx.astype(jnp.bfloat16)       # single rounding of S@x
                # Fold root + all K basis weights into ONE long matmul:
                #   lanes [0:CP)            -> x      (root term)
                #   lanes [(k+1)*CP:(k+2)*CP) -> S_k@x (basis k term)
                blocks = [x_bf] + [sx_bf[k * N:(k + 1) * N, :] for k in range(K)]
                big = jnp.concatenate(blocks, axis=-1)            # [N, (K+1)*CP]
                y = jnp.dot(big, w_ref[...], preferred_element_type=jnp.float32)
            else:  # sage (mean aggregation, lin_l on neighbors, lin_r on root)
                h = jnp.dot(a_ref[...], x_bf, preferred_element_type=jnp.float32)
                hx = jnp.concatenate([h.astype(jnp.bfloat16), x_bf], axis=-1)
                y = jnp.dot(hx, w_ref[...], preferred_element_type=jnp.float32)
            y = y + b_ref[...]                         # f32 bias
            x_bf = _elu(y).astype(jnp.bfloat16)        # fused ELU; padded cols stay 0
            acts.append(x_bf)

        # Final Linear over the lane-aligned concat of (input, all layer outputs).
        # (cat=True; dropout p=0 in eval == identity.)
        wf_ref, bf_ref = wrefs[2 * L], wrefs[2 * L + 1]
        cat = jnp.concatenate(acts, axis=-1)           # [N, (L+1)*CP] bf16
        out = jnp.dot(cat, wf_ref[...], preferred_element_type=jnp.float32) + bf_ref[...]
        out_ref[...] = out.astype(out_ref.dtype)

    return kernel


# ---------------------------------------------------------------------------
# Glue: dense graph operators from (edge_index, edge_attr).
# ---------------------------------------------------------------------------
def build_graph_operators(edge_index, edge_attr, num_nodes, kernel_size, dim):
    src = edge_index[0]   # message source j
    dst = edge_index[1]   # message target i (PyG flow: source_to_target)
    E = edge_attr.shape[0]

    deg = jnp.zeros((num_nodes,), jnp.float32).at[dst].add(1.0)
    inv_deg = jnp.where(deg > 0, 1.0 / deg, 0.0)

    # SAGE mean-aggregation operator.
    A = jnp.zeros((num_nodes, num_nodes), jnp.float32).at[dst, src].add(1.0)
    A_mean = A * inv_deg[:, None]

    # SplineConv degree-1 open-spline basis over pseudo-coords in [0, 1)^dim.
    K = kernel_size ** dim
    v = jnp.clip(edge_attr, 0.0, 1.0) * (kernel_size - 1)
    v = jnp.clip(v, 0.0, kernel_size - 1 - 1e-6)
    lo = jnp.floor(v)
    frac = v - lo
    lo = lo.astype(jnp.int32)

    S = jnp.zeros((K, num_nodes, num_nodes), jnp.float32)
    for s in range(2 ** dim):
        b = jnp.ones((E,), jnp.float32)
        kidx = jnp.zeros((E,), jnp.int32)
        offset = 1
        for d in range(dim):
            bit = (s >> d) & 1
            b = b * (frac[:, d] if bit else (1.0 - frac[:, d]))
            kidx = kidx + (lo[:, d] + bit) * offset
            offset *= kernel_size
        S = S.at[kidx, dst, src].add(b)
    S = S * inv_deg[None, :, None]   # mean aggregation

    # Vertical stacking: S_vert[k*N + i, j] = S_k[i, j]  -> one big S@x matmul.
    S_vert = S.reshape(K * num_nodes, num_nodes)
    return A_mean, S_vert


# ---------------------------------------------------------------------------
# Deterministic parameter init (shapes follow the PyTorch module's __init__).
# ---------------------------------------------------------------------------
def init_params(key, in_channels, out_channels, dim, num_layers, kernel_size=5):
    params = []
    c_in = in_channels
    K = kernel_size ** dim
    for i in range(num_layers):
        key, k1, k2, k3 = jax.random.split(key, 4)
        if i % 2 == 0:   # SplineConv(c_in, out_channels, dim, kernel_size=5)
            params.append(dict(
                type="spline",
                weight=0.1 * jax.random.normal(k1, (K, c_in, out_channels), jnp.float32),
                root=0.1 * jax.random.normal(k2, (c_in, out_channels), jnp.float32),
                bias=0.1 * jax.random.normal(k3, (out_channels,), jnp.float32),
            ))
        else:            # SAGEConv(c_in, out_channels)
            params.append(dict(
                type="sage",
                wl=0.1 * jax.random.normal(k1, (c_in, out_channels), jnp.float32),
                wr=0.1 * jax.random.normal(k2, (c_in, out_channels), jnp.float32),
                bias=0.1 * jax.random.normal(k3, (out_channels,), jnp.float32),
            ))
        c_in = out_channels
    cat_channels = in_channels + num_layers * out_channels   # cat=True
    key, kf1, kf2 = jax.random.split(key, 3)
    final = dict(
        weight=0.1 * jax.random.normal(kf1, (cat_channels, out_channels), jnp.float32),
        bias=0.1 * jax.random.normal(kf2, (out_channels,), jnp.float32),
    )
    return params, final


# ---------------------------------------------------------------------------
# Padding helpers (zero-pad channel dims to CP lanes).
# ---------------------------------------------------------------------------
def _pad2(a, rows, cols, dtype=None):
    dtype = a.dtype if dtype is None else dtype
    return (jnp.zeros((rows, cols), dtype)
            .at[:a.shape[0], :a.shape[1]].set(a.astype(dtype)))


def _stack_spline_weights(weight, root, K):
    # -> [(K+1)*CP, CP] bf16, row-block 0 = root, row-block k+1 = W_k.
    c_in, c_out = root.shape
    root_pad = jnp.zeros((1, CP, CP), jnp.float32).at[0, :c_in, :c_out].set(root)
    w_pad = jnp.zeros((K, CP, CP), jnp.float32).at[:, :c_in, :c_out].set(weight)
    wall = jnp.concatenate([root_pad, w_pad], axis=0).reshape((K + 1) * CP, CP)
    return wall.astype(jnp.bfloat16)


def _stack_sage_weights(wl, wr):
    # -> [2*CP, CP] bf16: rows 0:CP apply to A_mean@x (lin_l), rows CP:2CP to x (lin_r).
    wl_pad = _pad2(wl, CP, CP, jnp.float32)
    wr_pad = _pad2(wr, CP, CP, jnp.float32)
    return jnp.concatenate([wl_pad, wr_pad], axis=0).astype(jnp.bfloat16)


# ---------------------------------------------------------------------------
# Model wrapper: one fused pallas_call.
# ---------------------------------------------------------------------------
def hybrid_graph_model(x, A_mean, S_vert, params, final, out_channels):
    N, Cin = x.shape
    assert N % 16 == 0, "node count must be a multiple of 16 (bf16 sublane packing)"
    L = len(params)
    K = S_vert.shape[0] // N
    layer_types = [p["type"] for p in params]

    # Operands: padded f32 input, bf16 graph operators, bf16 stacked weights, f32 biases.
    operands = [
        _pad2(x, N, CP, jnp.float32),
        A_mean.astype(jnp.bfloat16),
        S_vert.astype(jnp.bfloat16),
    ]
    for p in params:
        if p["type"] == "spline":
            operands.append(_stack_spline_weights(p["weight"], p["root"], K))
        else:
            operands.append(_stack_sage_weights(p["wl"], p["wr"]))
        operands.append(_pad2(p["bias"].reshape(1, -1), 1, CP, jnp.float32))

    # Final Linear weight, scattered into the padded concat layout
    # (segment 0 = input channels, segment i>=1 = layer i-1 output channels).
    wf = final["weight"]                    # [Cin + L*Cout, Cout]
    Cout = wf.shape[1]
    wf_pad = jnp.zeros(((L + 1) * CP, CP), jnp.float32)
    wf_pad = wf_pad.at[0:Cin, 0:Cout].set(wf[0:Cin])
    for i in range(L):
        wf_pad = wf_pad.at[(i + 1) * CP:(i + 1) * CP + Cout, 0:Cout].set(
            wf[Cin + i * Cout: Cin + (i + 1) * Cout])
    bf_pad = _pad2(final["bias"].reshape(1, -1), 1, CP, jnp.float32)
    operands += [wf_pad.astype(jnp.bfloat16), bf_pad]

    # Scoped VMEM budget from the actual operand set (+ intermediates margin).
    total_bytes = sum(int(o.size) * o.dtype.itemsize for o in operands) + N * CP * 4
    vmem_limit = int(min(64 << 20, max(16 << 20, 3 * total_bytes + (4 << 20))))

    kernel = build_fused_kernel(layer_types, N, K)
    vspec = pl.BlockSpec(memory_space=pltpu.MemorySpace.VMEM)

    out_pad = pl.pallas_call(
        kernel,
        out_shape=jax.ShapeDtypeStruct((N, CP), jnp.float32),
        in_specs=[vspec] * len(operands),
        out_specs=vspec,
        compiler_params=pltpu.CompilerParams(vmem_limit_bytes=vmem_limit),
    )(*operands)

    return out_pad[:, :out_channels]   # drop lane padding


if __name__ == "__main__":
    key = jax.random.PRNGKey(0)
    N, E = 16, 48
    in_channels, out_channels, dim, num_layers = 4, 8, 2, 3
    kernel_size = 5

    key, kx, ke, ka, kp = jax.random.split(key, 5)
    x = jax.random.normal(kx, (N, in_channels), jnp.float32)
    edge_index = jax.random.randint(ke, (2, E), 0, N, dtype=jnp.int32)
    edge_attr = jax.random.uniform(ka, (E, dim), jnp.float32)

    A_mean, S_vert = build_graph_operators(edge_index, edge_attr, N, kernel_size, dim)
    params, final = init_params(kp, in_channels, out_channels, dim, num_layers, kernel_size)

    out = hybrid_graph_model(x, A_mean, S_vert, params, final, out_channels)
    jax.block_until_ready(out)
    assert out.shape == (N, out_channels) and out.dtype == jnp.float32
    print("KERNEL_OK")
</pallas_src>

<mosaic_0001>
module attributes {stable_mosaic.version = 11 : i64} {
  func.func @kernel(%arg0: memref<16x128xf32, #tpu.memory_space<vmem>>, %arg1: memref<16x16xbf16, #tpu.memory_space<vmem>>, %arg2: memref<400x16xbf16, #tpu.memory_space<vmem>>, %arg3: memref<3328x128xbf16, #tpu.memory_space<vmem>>, %arg4: memref<1x128xf32, #tpu.memory_space<vmem>>, %arg5: memref<256x128xbf16, #tpu.memory_space<vmem>>, %arg6: memref<1x128xf32, #tpu.memory_space<vmem>>, %arg7: memref<3328x128xbf16, #tpu.memory_space<vmem>>, %arg8: memref<1x128xf32, #tpu.memory_space<vmem>>, %arg9: memref<512x128xbf16, #tpu.memory_space<vmem>>, %arg10: memref<1x128xf32, #tpu.memory_space<vmem>>, %arg11: memref<16x128xf32, #tpu.memory_space<vmem>>) attributes {dimension_semantics = [], scalar_prefetch = 0 : i64, scratch_operands = 0 : i64, tpu.core_type = #tpu.core_type<tc>} {
    %c0 = arith.constant 0 : index
    %c0_0 = arith.constant 0 : index
    %0 = vector.load %arg0[%c0, %c0_0] : memref<16x128xf32, #tpu.memory_space<vmem>>, vector<16x128xf32>
    %1 = arith.truncf %0 : vector<16x128xf32> to vector<16x128xbf16>
    %c0_1 = arith.constant 0 : index
    %c0_2 = arith.constant 0 : index
    %2 = vector.load %arg2[%c0_1, %c0_2] : memref<400x16xbf16, #tpu.memory_space<vmem>>, vector<400x16xbf16>
    %cst = arith.constant dense<0.000000e+00> : vector<400x128xf32>
    %3 = tpu.matmul %2, %1, %cst {dimension_numbers = #tpu.dot_dimension_numbers<[1], [0], [0], [1], [0, 0, 1, 1], [], []>} : vector<400x16xbf16>, vector<16x128xbf16>, vector<400x128xf32> -> vector<400x128xf32>
    %4 = arith.truncf %3 : vector<400x128xf32> to vector<400x128xbf16>
    %5 = vector.extract_strided_slice %4 {offsets = [0, 0], sizes = [16, 128], strides = [1, 1]} : vector<400x128xbf16> to vector<16x128xbf16>
    %6 = vector.extract_strided_slice %4 {offsets = [16, 0], sizes = [16, 128], strides = [1, 1]} : vector<400x128xbf16> to vector<16x128xbf16>
    %7 = vector.extract_strided_slice %4 {offsets = [32, 0], sizes = [16, 128], strides = [1, 1]} : vector<400x128xbf16> to vector<16x128xbf16>
    %8 = vector.extract_strided_slice %4 {offsets = [48, 0], sizes = [16, 128], strides = [1, 1]} : vector<400x128xbf16> to vector<16x128xbf16>
    %9 = vector.extract_strided_slice %4 {offsets = [64, 0], sizes = [16, 128], strides = [1, 1]} : vector<400x128xbf16> to vector<16x128xbf16>
    %10 = vector.extract_strided_slice %4 {offsets = [80, 0], sizes = [16, 128], strides = [1, 1]} : vector<400x128xbf16> to vector<16x128xbf16>
    %11 = vector.extract_strided_slice %4 {offsets = [96, 0], sizes = [16, 128], strides = [1, 1]} : vector<400x128xbf16> to vector<16x128xbf16>
    %12 = vector.extract_strided_slice %4 {offsets = [112, 0], sizes = [16, 128], strides = [1, 1]} : vector<400x128xbf16> to vector<16x128xbf16>
    %13 = vector.extract_strided_slice %4 {offsets = [128, 0], sizes = [16, 128], strides = [1, 1]} : vector<400x128xbf16> to vector<16x128xbf16>
    %14 = vector.extract_strided_slice %4 {offsets = [144, 0], sizes = [16, 128], strides = [1, 1]} : vector<400x128xbf16> to vector<16x128xbf16>
    %15 = vector.extract_strided_slice %4 {offsets = [160, 0], sizes = [16, 128], strides = [1, 1]} : vector<400x128xbf16> to vector<16x128xbf16>
    %16 = vector.extract_strided_slice %4 {offsets = [176, 0], sizes = [16, 128], strides = [1, 1]} : vector<400x128xbf16> to vector<16x128xbf16>
    %17 = vector.extract_strided_slice %4 {offsets = [192, 0], sizes = [16, 128], strides = [1, 1]} : vector<400x128xbf16> to vector<16x128xbf16>
    %18 = vector.extract_strided_slice %4 {offsets = [208, 0], sizes = [16, 128], strides = [1, 1]} : vector<400x128xbf16> to vector<16x128xbf16>
    %19 = vector.extract_strided_slice %4 {offsets = [224, 0], sizes = [16, 128], strides = [1, 1]} : vector<400x128xbf16> to vector<16x128xbf16>
    %20 = vector.extract_strided_slice %4 {offsets = [240, 0], sizes = [16, 128], strides = [1, 1]} : vector<400x128xbf16> to vector<16x128xbf16>
    %21 = vector.extract_strided_slice %4 {offsets = [256, 0], sizes = [16, 128], strides = [1, 1]} : vector<400x128xbf16> to vector<16x128xbf16>
    %22 = vector.extract_strided_slice %4 {offsets = [272, 0], sizes = [16, 128], strides = [1, 1]} : vector<400x128xbf16> to vector<16x128xbf16>
    %23 = vector.extract_strided_slice %4 {offsets = [288, 0], sizes = [16, 128], strides = [1, 1]} : vector<400x128xbf16> to vector<16x128xbf16>
    %24 = vector.extract_strided_slice %4 {offsets = [304, 0], sizes = [16, 128], strides = [1, 1]} : vector<400x128xbf16> to vector<16x128xbf16>
    %25 = vector.extract_strided_slice %4 {offsets = [320, 0], sizes = [16, 128], strides = [1, 1]} : vector<400x128xbf16> to vector<16x128xbf16>
    %26 = vector.extract_strided_slice %4 {offsets = [336, 0], sizes = [16, 128], strides = [1, 1]} : vector<400x128xbf16> to vector<16x128xbf16>
    %27 = vector.extract_strided_slice %4 {offsets = [352, 0], sizes = [16, 128], strides = [1, 1]} : vector<400x128xbf16> to vector<16x128xbf16>
    %28 = vector.extract_strided_slice %4 {offsets = [368, 0], sizes = [16, 128], strides = [1, 1]} : vector<400x128xbf16> to vector<16x128xbf16>
    %29 = vector.extract_strided_slice %4 {offsets = [384, 0], sizes = [16, 128], strides = [1, 1]} : vector<400x128xbf16> to vector<16x128xbf16>
    %30 = tpu.concatenate %1, %5, %6, %7, %8, %9, %10, %11, %12, %13, %14, %15, %16, %17, %18, %19 in 1 : vector<16x128xbf16>, vector<16x128xbf16>, vector<16x128xbf16>, vector<16x128xbf16>, vector<16x128xbf16>, vector<16x128xbf16>, vector<16x128xbf16>, vector<16x128xbf16>, vector<16x128xbf16>, vector<16x128xbf16>, vector<16x128xbf16>, vector<16x128xbf16>, vector<16x128xbf16>, vector<16x128xbf16>, vector<16x128xbf16>, vector<16x128xbf16> -> vector<16x2048xbf16>
    %31 = tpu.concatenate %20, %21, %22, %23, %24, %25, %26, %27, %28, %29 in 1 : vector<16x128xbf16>, vector<16x128xbf16>, vector<16x128xbf16>, vector<16x128xbf16>, vector<16x128xbf16>, vector<16x128xbf16>, vector<16x128xbf16>, vector<16x128xbf16>, vector<16x128xbf16>, vector<16x128xbf16> -> vector<16x1280xbf16>
    %32 = tpu.concatenate %30, %31 in 1 : vector<16x2048xbf16>, vector<16x1280xbf16> -> vector<16x3328xbf16>
    %c0_3 = arith.constant 0 : index
    %c0_4 = arith.constant 0 : index
    %33 = vector.load %arg3[%c0_3, %c0_4] : memref<3328x128xbf16, #tpu.memory_space<vmem>>, vector<3328x128xbf16>
    %cst_5 = arith.constant dense<0.000000e+00> : vector<16x128xf32>
    %34 = tpu.matmul %32, %33, %cst_5 {dimension_numbers = #tpu.dot_dimension_numbers<[1], [0], [0], [1], [0, 0, 1, 1], [], []>} : vector<16x3328xbf16>, vector<3328x128xbf16>, vector<16x128xf32> -> vector<16x128xf32>
    %c0_6 = arith.constant 0 : index
    %c0_7 = arith.constant 0 : index
    %35 = vector.load %arg4[%c0_6, %c0_7] : memref<1x128xf32, #tpu.memory_space<vmem>>, vector<1x128xf32>
    %36 = vector.broadcast %35 : vector<1x128xf32> to vector<16x128xf32>
    %37 = arith.addf %34, %36 : vector<16x128xf32>
    %cst_8 = arith.constant 0.000000e+00 : f32
    %38 = vector.broadcast %cst_8 : f32 to vector<16x128xf32>
    %39 = arith.cmpf ogt, %37, %38 : vector<16x128xf32>
    %cst_9 = arith.constant 0.000000e+00 : f32
    %40 = vector.broadcast %cst_9 : f32 to vector<16x128xf32>
    %41 = arith.minimumf %37, %40 : vector<16x128xf32>
    %42 = math.exp %41 : vector<16x128xf32>
    %cst_10 = arith.constant 1.000000e+00 : f32
    %43 = vector.broadcast %cst_10 : f32 to vector<16x128xf32>
    %44 = arith.subf %42, %43 : vector<16x128xf32>
    %45 = arith.select %39, %37, %44 : vector<16x128xi1>, vector<16x128xf32>
    %46 = arith.truncf %45 : vector<16x128xf32> to vector<16x128xbf16>
    %c0_11 = arith.constant 0 : index
    %c0_12 = arith.constant 0 : index
    %47 = vector.load %arg1[%c0_11, %c0_12] : memref<16x16xbf16, #tpu.memory_space<vmem>>, vector<16x16xbf16>
    %cst_13 = arith.constant dense<0.000000e+00> : vector<16x128xf32>
    %48 = tpu.matmul %47, %46, %cst_13 {dimension_numbers = #tpu.dot_dimension_numbers<[1], [0], [0], [1], [0, 0, 1, 1], [], []>} : vector<16x16xbf16>, vector<16x128xbf16>, vector<16x128xf32> -> vector<16x128xf32>
    %49 = arith.truncf %48 : vector<16x128xf32> to vector<16x128xbf16>
    %50 = tpu.concatenate %49, %46 in 1 : vector<16x128xbf16>, vector<16x128xbf16> -> vector<16x256xbf16>
    %c0_14 = arith.constant 0 : index
    %c0_15 = arith.constant 0 : index
    %51 = vector.load %arg5[%c0_14, %c0_15] : memref<256x128xbf16, #tpu.memory_space<vmem>>, vector<256x128xbf16>
    %cst_16 = arith.constant dense<0.000000e+00> : vector<16x128xf32>
    %52 = tpu.matmul %50, %51, %cst_16 {dimension_numbers = #tpu.dot_dimension_numbers<[1], [0], [0], [1], [0, 0, 1, 1], [], []>} : vector<16x256xbf16>, vector<256x128xbf16>, vector<16x128xf32> -> vector<16x128xf32>
    %c0_17 = arith.constant 0 : index
    %c0_18 = arith.constant 0 : index
    %53 = vector.load %arg6[%c0_17, %c0_18] : memref<1x128xf32, #tpu.memory_space<vmem>>, vector<1x128xf32>
    %54 = vector.broadcast %53 : vector<1x128xf32> to vector<16x128xf32>
    %55 = arith.addf %52, %54 : vector<16x128xf32>
    %cst_19 = arith.constant 0.000000e+00 : f32
    %56 = vector.broadcast %cst_19 : f32 to vector<16x128xf32>
    %57 = arith.cmpf ogt, %55, %56 : vector<16x128xf32>
    %cst_20 = arith.constant 0.000000e+00 : f32
    %58 = vector.broadcast %cst_20 : f32 to vector<16x128xf32>
    %59 = arith.minimumf %55, %58 : vector<16x128xf32>
    %60 = math.exp %59 : vector<16x128xf32>
    %cst_21 = arith.constant 1.000000e+00 : f32
    %61 = vector.broadcast %cst_21 : f32 to vector<16x128xf32>
    %62 = arith.subf %60, %61 : vector<16x128xf32>
    %63 = arith.select %57, %55, %62 : vector<16x128xi1>, vector<16x128xf32>
    %64 = arith.truncf %63 : vector<16x128xf32> to vector<16x128xbf16>
    %c0_22 = arith.constant 0 : index
    %c0_23 = arith.constant 0 : index
    %65 = vector.load %arg2[%c0_22, %c0_23] : memref<400x16xbf16, #tpu.memory_space<vmem>>, vector<400x16xbf16>
    %cst_24 = arith.constant dense<0.000000e+00> : vector<400x128xf32>
    %66 = tpu.matmul %65, %64, %cst_24 {dimension_numbers = #tpu.dot_dimension_numbers<[1], [0], [0], [1], [0, 0, 1, 1], [], []>} : vector<400x16xbf16>, vector<16x128xbf16>, vector<400x128xf32> -> vector<400x128xf32>
    %67 = arith.truncf %66 : vector<400x128xf32> to vector<400x128xbf16>
    %68 = vector.extract_strided_slice %67 {offsets = [0, 0], sizes = [16, 128], strides = [1, 1]} : vector<400x128xbf16> to vector<16x128xbf16>
    %69 = vector.extract_strided_slice %67 {offsets = [16, 0], sizes = [16, 128], strides = [1, 1]} : vector<400x128xbf16> to vector<16x128xbf16>
    %70 = vector.extract_strided_slice %67 {offsets = [32, 0], sizes = [16, 128], strides = [1, 1]} : vector<400x128xbf16> to vector<16x128xbf16>
    %71 = vector.extract_strided_slice %67 {offsets = [48, 0], sizes = [16, 128], strides = [1, 1]} : vector<400x128xbf16> to vector<16x128xbf16>
    %72 = vector.extract_strided_slice %67 {offsets = [64, 0], sizes = [16, 128], strides = [1, 1]} : vector<400x128xbf16> to vector<16x128xbf16>
    %73 = vector.extract_strided_slice %67 {offsets = [80, 0], sizes = [16, 128], strides = [1, 1]} : vector<400x128xbf16> to vector<16x128xbf16>
    %74 = vector.extract_strided_slice %67 {offsets = [96, 0], sizes = [16, 128], strides = [1, 1]} : vector<400x128xbf16> to vector<16x128xbf16>
    %75 = vector.extract_strided_slice %67 {offsets = [112, 0], sizes = [16, 128], strides = [1, 1]} : vector<400x128xbf16> to vector<16x128xbf16>
    %76 = vector.extract_strided_slice %67 {offsets = [128, 0], sizes = [16, 128], strides = [1, 1]} : vector<400x128xbf16> to vector<16x128xbf16>
    %77 = vector.extract_strided_slice %67 {offsets = [144, 0], sizes = [16, 128], strides = [1, 1]} : vector<400x128xbf16> to vector<16x128xbf16>
    %78 = vector.extract_strided_slice %67 {offsets = [160, 0], sizes = [16, 128], strides = [1, 1]} : vector<400x128xbf16> to vector<16x128xbf16>
    %79 = vector.extract_strided_slice %67 {offsets = [176, 0], sizes = [16, 128], strides = [1, 1]} : vector<400x128xbf16> to vector<16x128xbf16>
    %80 = vector.extract_strided_slice %67 {offsets = [192, 0], sizes = [16, 128], strides = [1, 1]} : vector<400x128xbf16> to vector<16x128xbf16>
    %81 = vector.extract_strided_slice %67 {offsets = [208, 0], sizes = [16, 128], strides = [1, 1]} : vector<400x128xbf16> to vector<16x128xbf16>
    %82 = vector.extract_strided_slice %67 {offsets = [224, 0], sizes = [16, 128], strides = [1, 1]} : vector<400x128xbf16> to vector<16x128xbf16>
    %83 = vector.extract_strided_slice %67 {offsets = [240, 0], sizes = [16, 128], strides = [1, 1]} : vector<400x128xbf16> to vector<16x128xbf16>
    %84 = vector.extract_strided_slice %67 {offsets = [256, 0], sizes = [16, 128], strides = [1, 1]} : vector<400x128xbf16> to vector<16x128xbf16>
    %85 = vector.extract_strided_slice %67 {offsets = [272, 0], sizes = [16, 128], strides = [1, 1]} : vector<400x128xbf16> to vector<16x128xbf16>
    %86 = vector.extract_strided_slice %67 {offsets = [288, 0], sizes = [16, 128], strides = [1, 1]} : vector<400x128xbf16> to vector<16x128xbf16>
    %87 = vector.extract_strided_slice %67 {offsets = [304, 0], sizes = [16, 128], strides = [1, 1]} : vector<400x128xbf16> to vector<16x128xbf16>
    %88 = vector.extract_strided_slice %67 {offsets = [320, 0], sizes = [16, 128], strides = [1, 1]} : vector<400x128xbf16> to vector<16x128xbf16>
    %89 = vector.extract_strided_slice %67 {offsets = [336, 0], sizes = [16, 128], strides = [1, 1]} : vector<400x128xbf16> to vector<16x128xbf16>
    %90 = vector.extract_strided_slice %67 {offsets = [352, 0], sizes = [16, 128], strides = [1, 1]} : vector<400x128xbf16> to vector<16x128xbf16>
    %91 = vector.extract_strided_slice %67 {offsets = [368, 0], sizes = [16, 128], strides = [1, 1]} : vector<400x128xbf16> to vector<16x128xbf16>
    %92 = vector.extract_strided_slice %67 {offsets = [384, 0], sizes = [16, 128], strides = [1, 1]} : vector<400x128xbf16> to vector<16x128xbf16>
    %93 = tpu.concatenate %64, %68, %69, %70, %71, %72, %73, %74, %75, %76, %77, %78, %79, %80, %81, %82 in 1 : vector<16x128xbf16>, vector<16x128xbf16>, vector<16x128xbf16>, vector<16x128xbf16>, vector<16x128xbf16>, vector<16x128xbf16>, vector<16x128xbf16>, vector<16x128xbf16>, vector<16x128xbf16>, vector<16x128xbf16>, vector<16x128xbf16>, vector<16x128xbf16>, vector<16x128xbf16>, vector<16x128xbf16>, vector<16x128xbf16>, vector<16x128xbf16> -> vector<16x2048xbf16>
    %94 = tpu.concatenate %83, %84, %85, %86, %87, %88, %89, %90, %91, %92 in 1 : vector<16x128xbf16>, vector<16x128xbf16>, vector<16x128xbf16>, vector<16x128xbf16>, vector<16x128xbf16>, vector<16x128xbf16>, vector<16x128xbf16>, vector<16x128xbf16>, vector<16x128xbf16>, vector<16x128xbf16> -> vector<16x1280xbf16>
    %95 = tpu.concatenate %93, %94 in 1 : vector<16x2048xbf16>, vector<16x1280xbf16> -> vector<16x3328xbf16>
    %c0_25 = arith.constant 0 : index
    %c0_26 = arith.constant 0 : index
    %96 = vector.load %arg7[%c0_25, %c0_26] : memref<3328x128xbf16, #tpu.memory_space<vmem>>, vector<3328x128xbf16>
    %cst_27 = arith.constant dense<0.000000e+00> : vector<16x128xf32>
    %97 = tpu.matmul %95, %96, %cst_27 {dimension_numbers = #tpu.dot_dimension_numbers<[1], [0], [0], [1], [0, 0, 1, 1], [], []>} : vector<16x3328xbf16>, vector<3328x128xbf16>, vector<16x128xf32> -> vector<16x128xf32>
    %c0_28 = arith.constant 0 : index
    %c0_29 = arith.constant 0 : index
    %98 = vector.load %arg8[%c0_28, %c0_29] : memref<1x128xf32, #tpu.memory_space<vmem>>, vector<1x128xf32>
    %99 = vector.broadcast %98 : vector<1x128xf32> to vector<16x128xf32>
    %100 = arith.addf %97, %99 : vector<16x128xf32>
    %cst_30 = arith.constant 0.000000e+00 : f32
    %101 = vector.broadcast %cst_30 : f32 to vector<16x128xf32>
    %102 = arith.cmpf ogt, %100, %101 : vector<16x128xf32>
    %cst_31 = arith.constant 0.000000e+00 : f32
    %103 = vector.broadcast %cst_31 : f32 to vector<16x128xf32>
    %104 = arith.minimumf %100, %103 : vector<16x128xf32>
    %105 = math.exp %104 : vector<16x128xf32>
    %cst_32 = arith.constant 1.000000e+00 : f32
    %106 = vector.broadcast %cst_32 : f32 to vector<16x128xf32>
    %107 = arith.subf %105, %106 : vector<16x128xf32>
    %108 = arith.select %102, %100, %107 : vector<16x128xi1>, vector<16x128xf32>
    %109 = arith.truncf %108 : vector<16x128xf32> to vector<16x128xbf16>
    %110 = tpu.concatenate %1, %46, %64, %109 in 1 : vector<16x128xbf16>, vector<16x128xbf16>, vector<16x128xbf16>, vector<16x128xbf16> -> vector<16x512xbf16>
    %c0_33 = arith.constant 0 : index
    %c0_34 = arith.constant 0 : index
    %111 = vector.load %arg9[%c0_33, %c0_34] : memref<512x128xbf16, #tpu.memory_space<vmem>>, vector<512x128xbf16>
    %cst_35 = arith.constant dense<0.000000e+00> : vector<16x128xf32>
    %112 = tpu.matmul %110, %111, %cst_35 {dimension_numbers = #tpu.dot_dimension_numbers<[1], [0], [0], [1], [0, 0, 1, 1], [], []>} : vector<16x512xbf16>, vector<512x128xbf16>, vector<16x128xf32> -> vector<16x128xf32>
    %c0_36 = arith.constant 0 : index
    %c0_37 = arith.constant 0 : index
    %113 = vector.load %arg10[%c0_36, %c0_37] : memref<1x128xf32, #tpu.memory_space<vmem>>, vector<1x128xf32>
    %114 = vector.broadcast %113 : vector<1x128xf32> to vector<16x128xf32>
    %115 = arith.addf %112, %114 : vector<16x128xf32>
    %c0_38 = arith.constant 0 : index
    %c0_39 = arith.constant 0 : index
    %116 = vector.load %arg11[%c0_38, %c0_39] : memref<16x128xf32, #tpu.memory_space<vmem>>, vector<16x128xf32>
    tpu.vector_store %arg11[%c0_38, %c0_39], %115 {strides = array<i32>} : memref<16x128xf32, #tpu.memory_space<vmem>>, vector<16x128xf32>,
    return
  }
}

</mosaic_0001>

<llo_original>
// kernel: tpu_custom_call.1
$region0: #{tpu_custom_call.1}
  #allocation0 [shape = 'u32[]', space=smem, size = 0x4, offset = 0x4, fixed_abs, tag = 'smem constant byte address 0x4 - core index']
  #allocation1 [shape = 'u32[144,128]{1,0:T(1,128)}', space=vmem, size = 0x12000, scoped, tag = 'internal scratch']
  %s0 = inlined_call_operand.hbm [shape: f32[16,128], index: 0, kind: input, shape index: {}]
  %s1 = inlined_call_operand.vmem [shape: bf16[16,16], index: 1, kind: input, shape index: {}]
  %s2 = inlined_call_operand.vmem [shape: bf16[400,16], index: 2, kind: input, shape index: {}]
  %s3 = inlined_call_operand.hbm [shape: bf16[3328,128], index: 3, kind: input, shape index: {}]
  %s4 = inlined_call_operand.vmem [shape: f32[1,128], index: 4, kind: input, shape index: {}]
  %s5 = inlined_call_operand.hbm [shape: bf16[256,128], index: 5, kind: input, shape index: {}]
  %s6 = inlined_call_operand.vmem [shape: f32[1,128], index: 6, kind: input, shape index: {}]
  %s7 = inlined_call_operand.hbm [shape: bf16[3328,128], index: 7, kind: input, shape index: {}]
  %s8 = inlined_call_operand.hbm [shape: f32[1,128], index: 8, kind: input, shape index: {}]
  %s9 = inlined_call_operand.vmem [shape: bf16[512,128], index: 9, kind: input, shape index: {}]
  %s10 = inlined_call_operand.vmem [shape: f32[1,128], index: 10, kind: input, shape index: {}]
  %s11 = inlined_call_operand.hbm [shape: f32[16,128], index: 11, kind: output, shape index: {}]
  %s12 = sld [smem:[#allocation0]]
  $region74: #{tpu_custom_call.1} parent=0
    _
  %s14 = ssub.s32 1, %s12
  %s15 = scalar_select 0, %s14, %s12
  $region1: #{tpu_custom_call.1} parent=0
    #allocation2 [shape = 'u8[8192]{0}', space=vmem, size = 0x2000, scoped, tag = 'input window, operand 0, single buffered']
    #allocation3 [shape = 's32[1]{0}', space=sflag, size = 0x4, scoped, tag = 'scoped memory for tpu_custom_call.1']
    #allocation4 [shape = 's32[1]{0}', space=sflag, size = 0x4, scoped, tag = 'scoped memory for tpu_custom_call.1']
    #allocation5 [shape = 'u8[851968]{0}', space=vmem, size = 0xd0000, scoped, tag = 'input window, operand 3, single buffered']
    #allocation6 [shape = 's32[1]{0}', space=sflag, size = 0x4, scoped, tag = 'scoped memory for tpu_custom_call.1']
    #allocation7 [shape = 'u8[65536]{0}', space=vmem, size = 0x10000, scoped, tag = 'input window, operand 5, single buffered']
    #allocation8 [shape = 'u8[851968]{0}', space=vmem, size = 0xd0000, scoped, tag = 'input window, operand 7, single buffered']
    #allocation9 [shape = 's32[1]{0}', space=sflag, size = 0x4, scoped, tag = 'scoped memory for tpu_custom_call.1']
    #allocation10 [shape = 'u8[512]{0}', space=vmem, size = 0x400, scoped, tag = 'input window, operand 8, single buffered']
    #allocation11 [shape = 'u8[8192]{0}', space=vmem, size = 0x2000, scoped, tag = 'output window, operand 0, single buffered']
    %16 = vsyncpa [#allocation3], 0
    %17 = vsyncpa [#allocation6], 0
    %18 = vsyncpa [#allocation9], 0
    %19 = vsyncpa [#allocation4], 0
    // Predicated region
    $region2: #{tpu_custom_call.1} parent=1 // pred_check
      _
    $region3: #{tpu_custom_call.1} parent=1 // pred_check_branch
      %21 = sbr.rel (0) target = $region5
    $region4: #{tpu_custom_call.1} parent=1 // pred_region
      %s23 = ssub.s32 256, 256
      %24 = vsyncadd [#allocation3], %s23
      %s25 = sshll.u32 [#allocation2], 4
      %s26 = int_to_ptr.vmem [resolvable:$true] %s25
      %31 = dma.hbm_to_vmem [thread:$0]  %s0, 256, %s26, [#allocation3], 128, 128, 8
    $region5: #{tpu_custom_call.1} parent=1 // pred_fallthru
      _
    // Predicated region
    $region6: #{tpu_custom_call.1} parent=1 // pred_check
      _
    $region7: #{tpu_custom_call.1} parent=1 // pred_check_branch
      %33 = sbr.rel (0) target = $region9
    $region8: #{tpu_custom_call.1} parent=1 // pred_region
      _
    $region9: #{tpu_custom_call.1} parent=1 // pred_fallthru
      _
    // Predicated region
    $region10: #{tpu_custom_call.1} parent=1 // pred_check
      _
    $region11: #{tpu_custom_call.1} parent=1 // pred_check_branch
      %35 = sbr.rel (0) target = $region13
    $region12: #{tpu_custom_call.1} parent=1 // pred_region
      _
    $region13: #{tpu_custom_call.1} parent=1 // pred_fallthru
      _
    // Predicated region
    $region14: #{tpu_custom_call.1} parent=1 // pred_check
      _
    $region15: #{tpu_custom_call.1} parent=1 // pred_check_branch
      %37 = sbr.rel (0) target = $region17
    $region16: #{tpu_custom_call.1} parent=1 // pred_region
      %s39 = ssub.s32 26624, 26624
      %40 = vsyncadd [#allocation6], %s39
      %s41 = sshll.u32 [#allocation5], 4
      %s42 = int_to_ptr.vmem [resolvable:$true] %s41
      %47 = dma.hbm_to_vmem [thread:$0]  %s3, 26624, %s42, [#allocation6], 64, 64, 4
    $region17: #{tpu_custom_call.1} parent=1 // pred_fallthru
      _
    // Predicated region
    $region18: #{tpu_custom_call.1} parent=1 // pred_check
      _
    $region19: #{tpu_custom_call.1} parent=1 // pred_check_branch
      %49 = sbr.rel (0) target = $region21
    $region20: #{tpu_custom_call.1} parent=1 // pred_region
      _
    $region21: #{tpu_custom_call.1} parent=1 // pred_fallthru
      _
    // Predicated region
    $region22: #{tpu_custom_call.1} parent=1 // pred_check
      _
    $region23: #{tpu_custom_call.1} parent=1 // pred_check_branch
      %51 = sbr.rel (0) target = $region25
    $region24: #{tpu_custom_call.1} parent=1 // pred_region
      %s53 = ssub.s32 2048, 2048
      %54 = vsyncadd [#allocation6], %s53
      %s55 = sshll.u32 [#allocation7], 4
      %s56 = int_to_ptr.vmem [resolvable:$true] %s55
      %61 = dma.hbm_to_vmem [thread:$0]  %s5, 2048, %s56, [#allocation6], 64, 64, 4
    $region25: #{tpu_custom_call.1} parent=1 // pred_fallthru
      _
    // Predicated region
    $region26: #{tpu_custom_call.1} parent=1 // pred_check
      _
    $region27: #{tpu_custom_call.1} parent=1 // pred_check_branch
      %63 = sbr.rel (0) target = $region29
    $region28: #{tpu_custom_call.1} parent=1 // pred_region
      _
    $region29: #{tpu_custom_call.1} parent=1 // pred_fallthru
      _
    // Predicated region
    $region30: #{tpu_custom_call.1} parent=1 // pred_check
      _
    $region31: #{tpu_custom_call.1} parent=1 // pred_check_branch
      %65 = sbr.rel (0) target = $region33
    $region32: #{tpu_custom_call.1} parent=1 // pred_region
      %s67 = ssub.s32 26624, 26624
      %68 = vsyncadd [#allocation9], %s67
      %s69 = sshll.u32 [#allocation8], 4
      %s70 = int_to_ptr.vmem [resolvable:$true] %s69
      %75 = dma.hbm_to_vmem [thread:$0]  %s7, 26624, %s70, [#allocation9], 64, 64, 4
    $region33: #{tpu_custom_call.1} parent=1 // pred_fallthru
      _
    // Predicated region
    $region34: #{tpu_custom_call.1} parent=1 // pred_check
      _
    $region35: #{tpu_custom_call.1} parent=1 // pred_check_branch
      %77 = sbr.rel (0) target = $region37
    $region36: #{tpu_custom_call.1} parent=1 // pred_region
      %s79 = ssub.s32 16, 16
      %80 = vsyncadd [#allocation9], %s79
      %s82 = sshll.u32 [#allocation10], 4
      %s83 = int_to_ptr.vmem [resolvable:$true] %s82
      %85 = dma.hbm_to_vmem [thread:$0]  %s8, 16, %s83, [#allocation9]
    $region37: #{tpu_custom_call.1} parent=1 // pred_fallthru
      _
    // Predicated region
    $region38: #{tpu_custom_call.1} parent=1 // pred_check
      _
    $region39: #{tpu_custom_call.1} parent=1 // pred_check_branch
      %87 = sbr.rel (0) target = $region41
    $region40: #{tpu_custom_call.1} parent=1 // pred_region
      _
    $region41: #{tpu_custom_call.1} parent=1 // pred_fallthru
      _
    // Predicated region
    $region42: #{tpu_custom_call.1} parent=1 // pred_check
      _
    $region43: #{tpu_custom_call.1} parent=1 // pred_check_branch
      %89 = sbr.rel (0) target = $region45
    $region44: #{tpu_custom_call.1} parent=1 // pred_region
      _
    $region45: #{tpu_custom_call.1} parent=1 // pred_fallthru
      _
    // Predicated region
    $region46: #{tpu_custom_call.1} parent=1 // pred_check
      _
    $region47: #{tpu_custom_call.1} parent=1 // pred_check_branch
      %91 = sbr.rel (0) target = $region49
    $region48: #{tpu_custom_call.1} parent=1 // pred_region
      %92 = dma.done [#allocation3], 256
    $region49: #{tpu_custom_call.1} parent=1 // pred_fallthru
      _
    // Predicated region
    $region50: #{tpu_custom_call.1} parent=1 // pred_check
      _
    $region51: #{tpu_custom_call.1} parent=1 // pred_check_branch
      %94 = sbr.rel (0) target = $region53
    $region52: #{tpu_custom_call.1} parent=1 // pred_region
      %95 = dma.done [#allocation6], 26624
    $region53: #{tpu_custom_call.1} parent=1 // pred_fallthru
      _
    // Predicated region
    $region54: #{tpu_custom_call.1} parent=1 // pred_check
      _
    $region55: #{tpu_custom_call.1} parent=1 // pred_check_branch
      %97 = sbr.rel (0) target = $region57
    $region56: #{tpu_custom_call.1} parent=1 // pred_region
      %98 = dma.done [#allocation6], 2048
    $region57: #{tpu_custom_call.1} parent=1 // pred_fallthru
      _
    // Predicated region
    $region58: #{tpu_custom_call.1} parent=1 // pred_check
      _
    $region59: #{tpu_custom_call.1} parent=1 // pred_check_branch
      %100 = sbr.rel (0) target = $region61
    $region60: #{tpu_custom_call.1} parent=1 // pred_region
      %101 = dma.done [#allocation9], 26624
    $region61: #{tpu_custom_call.1} parent=1 // pred_fallthru
      _
    // Predicated region
    $region62: #{tpu_custom_call.1} parent=1 // pred_check
      _
    $region63: #{tpu_custom_call.1} parent=1 // pred_check_branch
      %103 = sbr.rel (0) target = $region65
    $region64: #{tpu_custom_call.1} parent=1 // pred_region
      %104 = dma.done [#allocation9], 16
    $region65: #{tpu_custom_call.1} parent=1 // pred_fallthru
      _
    %v106 = vld [vmem:[#allocation2] sm:$0xff]
    %v107 = vld [vmem:[#allocation2 + $0x8] sm:$0xff]
    %v108 = vpack.c.bf16 %v107, %v106
    %v109 = vld [vmem:[%s2] sm:$0xf]
    %v110 = vld [vmem:[%s2 + $0x4] sm:$0xf]
    %v111 = vld [vmem:[%s2 + $0x8] sm:$0xf]
    %v112 = vld [vmem:[%s2 + $0xc] sm:$0xf]
    %v113 = vld [vmem:[%s2 + $0x10] sm:$0xf]
    %v114 = vld [vmem:[%s2 + $0x14] sm:$0xf]
    %v115 = vld [vmem:[%s2 + $0x18] sm:$0xf]
    %v116 = vld [vmem:[%s2 + $0x1c] sm:$0xf]
    %v117 = vld [vmem:[%s2 + $0x20] sm:$0xf]
    %v118 = vld [vmem:[%s2 + $0x24] sm:$0xf]
    %v119 = vld [vmem:[%s2 + $0x28] sm:$0xf]
    %v120 = vld [vmem:[%s2 + $0x2c] sm:$0xf]
    %v121 = vld [vmem:[%s2 + $0x30] sm:$0xf]
    %v122 = vld [vmem:[%s2 + $0x34] sm:$0xf]
    %v123 = vld [vmem:[%s2 + $0x38] sm:$0xf]
    %v124 = vld [vmem:[%s2 + $0x3c] sm:$0xf]
    %v125 = vld [vmem:[%s2 + $0x40] sm:$0xf]
    %v126 = vld [vmem:[%s2 + $0x44] sm:$0xf]
    %v127 = vld [vmem:[%s2 + $0x48] sm:$0xf]
    %v128 = vld [vmem:[%s2 + $0x4c] sm:$0xf]
    %v129 = vld [vmem:[%s2 + $0x50] sm:$0xf]
    %v130 = vld [vmem:[%s2 + $0x54] sm:$0xf]
    %v131 = vld [vmem:[%s2 + $0x58] sm:$0xf]
    %v132 = vld [vmem:[%s2 + $0x5c] sm:$0xf]
    %v133 = vld [vmem:[%s2 + $0x60] sm:$0xf]
    %v134 = vld [vmem:[%s2 + $0x64] sm:$0xf]
    %v135 = vld [vmem:[%s2 + $0x68] sm:$0xf]
    %v136 = vld [vmem:[%s2 + $0x6c] sm:$0xf]
    %v137 = vld [vmem:[%s2 + $0x70] sm:$0xf]
    %v138 = vld [vmem:[%s2 + $0x74] sm:$0xf]
    %v139 = vld [vmem:[%s2 + $0x78] sm:$0xf]
    %v140 = vld [vmem:[%s2 + $0x7c] sm:$0xf]
    %v141 = vld [vmem:[%s2 + $0x80] sm:$0xf]
    %v142 = vld [vmem:[%s2 + $0x84] sm:$0xf]
    %v143 = vld [vmem:[%s2 + $0x88] sm:$0xf]
    %v144 = vld [vmem:[%s2 + $0x8c] sm:$0xf]
    %v145 = vld [vmem:[%s2 + $0x90] sm:$0xf]
    %v146 = vld [vmem:[%s2 + $0x94] sm:$0xf]
    %v147 = vld [vmem:[%s2 + $0x98] sm:$0xf]
    %v148 = vld [vmem:[%s2 + $0x9c] sm:$0xf]
    %v149 = vld [vmem:[%s2 + $0xa0] sm:$0xf]
    %v150 = vld [vmem:[%s2 + $0xa4] sm:$0xf]
    %v151 = vld [vmem:[%s2 + $0xa8] sm:$0xf]
    %v152 = vld [vmem:[%s2 + $0xac] sm:$0xf]
    %v153 = vld [vmem:[%s2 + $0xb0] sm:$0xf]
    %v154 = vld [vmem:[%s2 + $0xb4] sm:$0xf]
    %v155 = vld [vmem:[%s2 + $0xb8] sm:$0xf]
    %v156 = vld [vmem:[%s2 + $0xbc] sm:$0xf]
    %v157 = vld [vmem:[%s2 + $0xc0] sm:$0xf]
    %v158 = vld [vmem:[%s2 + $0xc4] sm:$0xf]
    %v209 = vunpack.c.l.b16 %v109
    %v210 = vunpack.c.l.b16 %v110
    %v211 = vunpack.c.l.b16 %v111
    %v212 = vunpack.c.l.b16 %v112
    %v213 = vunpack.c.l.b16 %v113
    %v214 = vunpack.c.l.b16 %v114
    %v215 = vunpack.c.l.b16 %v115
    %v216 = vunpack.c.l.b16 %v116
    %v217 = vunpack.c.l.b16 %v117
    %v218 = vunpack.c.l.b16 %v118
    %v219 = vunpack.c.l.b16 %v119
    %v220 = vunpack.c.l.b16 %v120
    %v221 = vunpack.c.l.b16 %v121
    %v222 = vunpack.c.l.b16 %v122
    %v223 = vunpack.c.l.b16 %v123
    %v224 = vunpack.c.l.b16 %v124
    %v225 = vunpack.c.l.b16 %v125
    %v226 = vunpack.c.l.b16 %v126
    %v227 = vunpack.c.l.b16 %v127
    %v228 = vunpack.c.l.b16 %v128
    %v229 = vunpack.c.l.b16 %v129
    %v230 = vunpack.c.l.b16 %v130
    %v231 = vunpack.c.l.b16 %v131
    %v232 = vunpack.c.l.b16 %v132
    %v233 = vunpack.c.l.b16 %v133
    %v234 = vunpack.c.l.b16 %v134
    %v235 = vunpack.c.l.b16 %v135
    %v236 = vunpack.c.l.b16 %v136
    %v237 = vunpack.c.l.b16 %v137
    %v238 = vunpack.c.l.b16 %v138
    %v239 = vunpack.c.l.b16 %v139
    %v240 = vunpack.c.l.b16 %v140
    %v241 = vunpack.c.l.b16 %v141
    %v242 = vunpack.c.l.b16 %v142
    %v243 = vunpack.c.l.b16 %v143
    %v244 = vunpack.c.l.b16 %v144
    %v245 = vunpack.c.l.b16 %v145
    %v246 = vunpack.c.l.b16 %v146
    %v247 = vunpack.c.l.b16 %v147
    %v248 = vunpack.c.l.b16 %v148
    %v249 = vunpack.c.l.b16 %v149
    %v250 = vunpack.c.l.b16 %v150
    %v251 = vunpack.c.l.b16 %v151
    %v252 = vunpack.c.l.b16 %v152
    %v253 = vunpack.c.l.b16 %v153
    %v254 = vunpack.c.l.b16 %v154
    %v255 = vunpack.c.l.b16 %v155
    %v256 = vunpack.c.l.b16 %v156
    %v257 = vunpack.c.l.b16 %v157
    %v258 = vunpack.c.l.b16 %v158
    %v259 = vpack.c.b16 %v210, %v209
    %v260 = vpack.c.b16 %v212, %v211
    %v261 = vpack.c.b16 %v214, %v213
    %v262 = vpack.c.b16 %v216, %v215
    %v263 = vpack.c.b16 %v218, %v217
    %v264 = vpack.c.b16 %v220, %v219
    %v265 = vpack.c.b16 %v222, %v221
    %v266 = vpack.c.b16 %v224, %v223
    %v267 = vpack.c.b16 %v226, %v225
    %v268 = vpack.c.b16 %v228, %v227
    %v269 = vpack.c.b16 %v230, %v229
    %v270 = vpack.c.b16 %v232, %v231
    %v271 = vpack.c.b16 %v234, %v233
    %v272 = vpack.c.b16 %v236, %v235
    %v273 = vpack.c.b16 %v238, %v237
    %v274 = vpack.c.b16 %v240, %v239
    %v275 = vpack.c.b16 %v242, %v241
    %v276 = vpack.c.b16 %v244, %v243
    %v277 = vpack.c.b16 %v246, %v245
    %v278 = vpack.c.b16 %v248, %v247
    %v279 = vpack.c.b16 %v250, %v249
    %v280 = vpack.c.b16 %v252, %v251
    %v281 = vpack.c.b16 %v254, %v253
    %v282 = vpack.c.b16 %v256, %v255
    %v283 = vpack.c.b16 %v258, %v257
    %vm284 = vcmask 130048
    %v286 = vsel %vm284, %v259, 0
    %v289 = vsel %vm284, %v260, 0
    %v292 = vsel %vm284, %v261, 0
    %v295 = vsel %vm284, %v262, 0
    %v298 = vsel %vm284, %v263, 0
    %v301 = vsel %vm284, %v264, 0
    %v304 = vsel %vm284, %v265, 0
    %v307 = vsel %vm284, %v266, 0
    %v310 = vsel %vm284, %v267, 0
    %v313 = vsel %vm284, %v268, 0
    %v316 = vsel %vm284, %v269, 0
    %v319 = vsel %vm284, %v270, 0
    %v322 = vsel %vm284, %v271, 0
    %v325 = vsel %vm284, %v272, 0
    %v328 = vsel %vm284, %v273, 0
    %v331 = vsel %vm284, %v274, 0
    %v334 = vsel %vm284, %v275, 0
    %v337 = vsel %vm284, %v276, 0
    %v340 = vsel %vm284, %v277, 0
    %v343 = vsel %vm284, %v278, 0
    %v346 = vsel %vm284, %v279, 0
    %v349 = vsel %vm284, %v280, 0
    %v352 = vsel %vm284, %v281, 0
    %v355 = vsel %vm284, %v282, 0
    %v358 = vsel %vm284, %v283, 0
    %360 = vmatprep.subr.bf16.mxu0 0
    %361 = vmatpush1.bf16.msra.mxu0 %v108
    %362 = vmatprep.subr.bf16.mxu0 0
    %363 = vmatpush1.bf16.msra.mxu0 0
    %364 = vmatprep.subr.bf16.mxu0 0
    %365 = vmatpush1.bf16.msra.mxu0 0
    %366 = vmatprep.subr.bf16.mxu0 0
    %367 = vmatpush1.bf16.msra.mxu0 0
    %368 = vmatprep.subr.bf16.mxu0 0
    %369 = vmatpush1.bf16.msra.mxu0 0
    %370 = vmatprep.subr.bf16.mxu0 0
    %371 = vmatpush1.bf16.msra.mxu0 0
    %372 = vmatprep.subr.bf16.mxu0 0
    %373 = vmatpush1.bf16.msra.mxu0 0
    %374 = vmatprep.subr.bf16.mxu0 0
    %375 = vmatpush1.bf16.msra.mxu0 0
    %376 = vmatprep.subr.bf16.mxu0 0
    %377 = vmatpush1.bf16.msra.mxu0 0
    %378 = vmatprep.subr.bf16.mxu0 0
    %379 = vmatpush1.bf16.msra.mxu0 0
    %380 = vmatprep.subr.bf16.mxu0 0
    %381 = vmatpush1.bf16.msra.mxu0 0
    %382 = vmatprep.subr.bf16.mxu0 0
    %383 = vmatpush1.bf16.msra.mxu0 0
    %384 = vmatprep.subr.bf16.mxu0 0
    %385 = vmatpush1.bf16.msra.mxu0 0
    %386 = vmatprep.subr.bf16.mxu0 0
    %387 = vmatpush1.bf16.msra.mxu0 0
    %388 = vmatprep.subr.bf16.mxu0 0
    %389 = vmatpush1.bf16.msra.mxu0 0
    %390 = vmatprep.subr.bf16.mxu0 0
    %391 = vmatpush1.bf16.msra.mxu0 0
    %392 = vmatprep.mubr.bf16.mxu0 0
    %393 = vmatmul.mubr.bf16.gmra.mrb[0].mxu0 %v286
    %v394 = vpop.f32.mrb[0].mxu0
    %v395 = vadd.f32 0.0, %v394
    %v396 = vpop.f32.mrb[0].mxu0
    %v397 = vpop.f32.mrb[0].mxu0
    %v398 = vadd.f32 0.0, %v397
    %v399 = vpop.f32.mrb[0].mxu0
    %400 = vmatprep.mubr.bf16.mxu0 0
    %401 = vmatmul.mubr.bf16.gmra.mrb[0].mxu0 %v289
    %v402 = vpop.f32.mrb[0].mxu0
    %v403 = vadd.f32 0.0, %v402
    %v404 = vpop.f32.mrb[0].mxu0
    %v405 = vpop.f32.mrb[0].mxu0
    %v406 = vadd.f32 0.0, %v405
    %v407 = vpop.f32.mrb[0].mxu0
    %408 = vmatprep.mubr.bf16.mxu0 0
    %409 = vmatmul.mubr.bf16.gmra.mrb[0].mxu0 %v292
    %v410 = vpop.f32.mrb[0].mxu0
    %v411 = vadd.f32 0.0, %v410
    %v412 = vpop.f32.mrb[0].mxu0
    %v413 = vpop.f32.mrb[0].mxu0
    %v414 = vadd.f32 0.0, %v413
    %v415 = vpop.f32.mrb[0].mxu0
    %416 = vmatprep.mubr.bf16.mxu0 0
    %417 = vmatmul.mubr.bf16.gmra.mrb[0].mxu0 %v295
    %v418 = vpop.f32.mrb[0].mxu0
    %v419 = vadd.f32 0.0, %v418
    %v420 = vpop.f32.mrb[0].mxu0
    %v421 = vpop.f32.mrb[0].mxu0
    %v422 = vadd.f32 0.0, %v421
    %v423 = vpop.f32.mrb[0].mxu0
    %424 = vmatprep.mubr.bf16.mxu0 0
    %425 = vmatmul.mubr.bf16.gmra.mrb[0].mxu0 %v298
    %v426 = vpop.f32.mrb[0].mxu0
    %v427 = vadd.f32 0.0, %v426
    %v428 = vpop.f32.mrb[0].mxu0
    %v429 = vpop.f32.mrb[0].mxu0
    %v430 = vadd.f32 0.0, %v429
    %v431 = vpop.f32.mrb[0].mxu0
    %432 = vmatprep.mubr.bf16.mxu0 0
    %433 = vmatmul.mubr.bf16.gmra.mrb[0].mxu0 %v301
    %v434 = vpop.f32.mrb[0].mxu0
    %v435 = vadd.f32 0.0, %v434
    %v436 = vpop.f32.mrb[0].mxu0
    %v437 = vpop.f32.mrb[0].mxu0
    %v438 = vadd.f32 0.0, %v437
    %v439 = vpop.f32.mrb[0].mxu0
    %440 = vmatprep.mubr.bf16.mxu0 0
    %441 = vmatmul.mubr.bf16.gmra.mrb[0].mxu0 %v304
    %v442 = vpop.f32.mrb[0].mxu0
    %v443 = vadd.f32 0.0, %v442
    %v444 = vpop.f32.mrb[0].mxu0
    %v445 = vpop.f32.mrb[0].mxu0
    %v446 = vadd.f32 0.0, %v445
    %v447 = vpop.f32.mrb[0].mxu0
    %448 = vmatprep.mubr.bf16.mxu0 0
    %449 = vmatmul.mubr.bf16.gmra.mrb[0].mxu0 %v307
    %v450 = vpop.f32.mrb[0].mxu0
    %v451 = vadd.f32 0.0, %v450
    %v452 = vpop.f32.mrb[0].mxu0
    %v453 = vpop.f32.mrb[0].mxu0
    %v454 = vadd.f32 0.0, %v453
    %v455 = vpop.f32.mrb[0].mxu0
    %456 = vmatprep.mubr.bf16.mxu0 0
    %457 = vmatmul.mubr.bf16.gmra.mrb[0].mxu0 %v310
    %v458 = vpop.f32.mrb[0].mxu0
    %v459 = vadd.f32 0.0, %v458
    %v460 = vpop.f32.mrb[0].mxu0
    %v461 = vpop.f32.mrb[0].mxu0
    %v462 = vadd.f32 0.0, %v461
    %v463 = vpop.f32.mrb[0].mxu0
    %464 = vmatprep.mubr.bf16.mxu0 0
    %465 = vmatmul.mubr.bf16.gmra.mrb[0].mxu0 %v313
    %v466 = vpop.f32.mrb[0].mxu0
    %v467 = vadd.f32 0.0, %v466
    %v468 = vpop.f32.mrb[0].mxu0
    %v469 = vpop.f32.mrb[0].mxu0
    %v470 = vadd.f32 0.0, %v469
    %v471 = vpop.f32.mrb[0].mxu0
    %472 = vmatprep.mubr.bf16.mxu0 0
    %473 = vmatmul.mubr.bf16.gmra.mrb[0].mxu0 %v316
    %v474 = vpop.f32.mrb[0].mxu0
    %v475 = vadd.f32 0.0, %v474
    %v476 = vpop.f32.mrb[0].mxu0
    %v477 = vpop.f32.mrb[0].mxu0
    %v478 = vadd.f32 0.0, %v477
    %v479 = vpop.f32.mrb[0].mxu0
    %480 = vmatprep.mubr.bf16.mxu0 0
    %481 = vmatmul.mubr.bf16.gmra.mrb[0].mxu0 %v319
    %v482 = vpop.f32.mrb[0].mxu0
    %v483 = vadd.f32 0.0, %v482
    %v484 = vpop.f32.mrb[0].mxu0
    %v485 = vpop.f32.mrb[0].mxu0
    %v486 = vadd.f32 0.0, %v485
    %v487 = vpop.f32.mrb[0].mxu0
    %488 = vmatprep.mubr.bf16.mxu0 0
    %489 = vmatmul.mubr.bf16.gmra.mrb[0].mxu0 %v322
    %v490 = vpop.f32.mrb[0].mxu0
    %v491 = vadd.f32 0.0, %v490
    %v492 = vpop.f32.mrb[0].mxu0
    %v493 = vpop.f32.mrb[0].mxu0
    %v494 = vadd.f32 0.0, %v493
    %v495 = vpop.f32.mrb[0].mxu0
    %496 = vmatprep.mubr.bf16.mxu0 0
    %497 = vmatmul.mubr.bf16.gmra.mrb[0].mxu0 %v325
    %v498 = vpop.f32.mrb[0].mxu0
    %v499 = vadd.f32 0.0, %v498
    %v500 = vpop.f32.mrb[0].mxu0
    %v501 = vpop.f32.mrb[0].mxu0
    %v502 = vadd.f32 0.0, %v501
    %v503 = vpop.f32.mrb[0].mxu0
    %504 = vmatprep.mubr.bf16.mxu0 0
    %505 = vmatmul.mubr.bf16.gmra.mrb[0].mxu0 %v328
    %v506 = vpop.f32.mrb[0].mxu0
    %v507 = vadd.f32 0.0, %v506
    %v508 = vpop.f32.mrb[0].mxu0
    %v509 = vpop.f32.mrb[0].mxu0
    %v510 = vadd.f32 0.0, %v509
    %v511 = vpop.f32.mrb[0].mxu0
    %512 = vmatprep.mubr.bf16.mxu0 0
    %513 = vmatmul.mubr.bf16.gmra.mrb[0].mxu0 %v331
    %v514 = vpop.f32.mrb[0].mxu0
    %v515 = vadd.f32 0.0, %v514
    %v516 = vpop.f32.mrb[0].mxu0
    %v517 = vpop.f32.mrb[0].mxu0
    %v518 = vadd.f32 0.0, %v517
    %v519 = vpop.f32.mrb[0].mxu0
    %520 = vmatprep.mubr.bf16.mxu0 0
    %521 = vmatmul.mubr.bf16.gmra.mrb[0].mxu0 %v334
    %v522 = vpop.f32.mrb[0].mxu0
    %v523 = vadd.f32 0.0, %v522
    %v524 = vpop.f32.mrb[0].mxu0
    %v525 = vpop.f32.mrb[0].mxu0
    %v526 = vadd.f32 0.0, %v525
    %v527 = vpop.f32.mrb[0].mxu0
    %528 = vmatprep.mubr.bf16.mxu0 0
    %529 = vmatmul.mubr.bf16.gmra.mrb[0].mxu0 %v337
    %v530 = vpop.f32.mrb[0].mxu0
    %v531 = vadd.f32 0.0, %v530
    %v532 = vpop.f32.mrb[0].mxu0
    %v533 = vpop.f32.mrb[0].mxu0
    %v534 = vadd.f32 0.0, %v533
    %v535 = vpop.f32.mrb[0].mxu0
    %536 = vmatprep.mubr.bf16.mxu0 0
    %537 = vmatmul.mubr.bf16.gmra.mrb[0].mxu0 %v340
    %v538 = vpop.f32.mrb[0].mxu0
    %v539 = vadd.f32 0.0, %v538
    %v540 = vpop.f32.mrb[0].mxu0
    %v541 = vpop.f32.mrb[0].mxu0
    %v542 = vadd.f32 0.0, %v541
    %v543 = vpop.f32.mrb[0].mxu0
    %544 = vmatprep.mubr.bf16.mxu0 0
    %545 = vmatmul.mubr.bf16.gmra.mrb[0].mxu0 %v343
    %v546 = vpop.f32.mrb[0].mxu0
    %v547 = vadd.f32 0.0, %v546
    %v548 = vpop.f32.mrb[0].mxu0
    %v549 = vpop.f32.mrb[0].mxu0
    %v550 = vadd.f32 0.0, %v549
    %v551 = vpop.f32.mrb[0].mxu0
    %552 = vmatprep.mubr.bf16.mxu0 0
    %553 = vmatmul.mubr.bf16.gmra.mrb[0].mxu0 %v346
    %v554 = vpop.f32.mrb[0].mxu0
    %v555 = vadd.f32 0.0, %v554
    %v556 = vpop.f32.mrb[0].mxu0
    %v557 = vpop.f32.mrb[0].mxu0
    %v558 = vadd.f32 0.0, %v557
    %v559 = vpop.f32.mrb[0].mxu0
    %560 = vmatprep.mubr.bf16.mxu0 0
    %561 = vmatmul.mubr.bf16.gmra.mrb[0].mxu0 %v349
    %v562 = vpop.f32.mrb[0].mxu0
    %v563 = vadd.f32 0.0, %v562
    %v564 = vpop.f32.mrb[0].mxu0
    %v565 = vpop.f32.mrb[0].mxu0
    %v566 = vadd.f32 0.0, %v565
    %v567 = vpop.f32.mrb[0].mxu0
    %568 = vmatprep.mubr.bf16.mxu0 0
    %569 = vmatmul.mubr.bf16.gmra.mrb[0].mxu0 %v352
    %v570 = vpop.f32.mrb[0].mxu0
    %v571 = vadd.f32 0.0, %v570
    %v572 = vpop.f32.mrb[0].mxu0
    %v573 = vpop.f32.mrb[0].mxu0
    %v574 = vadd.f32 0.0, %v573
    %v575 = vpop.f32.mrb[0].mxu0
    %576 = vmatprep.mubr.bf16.mxu0 0
    %577 = vmatmul.mubr.bf16.gmra.mrb[0].mxu0 %v355
    %v578 = vpop.f32.mrb[0].mxu0
    %v579 = vadd.f32 0.0, %v578
    %v580 = vpop.f32.mrb[0].mxu0
    %v581 = vpop.f32.mrb[0].mxu0
    %v582 = vadd.f32 0.0, %v581
    %v583 = vpop.f32.mrb[0].mxu0
    %584 = vmatprep.mubr.bf16.mxu0 0
    %585 = vmatmul.mubr.bf16.gmra.mrb[0].mxu0 %v358
    %v586 = vpop.f32.mrb[0].mxu0
    %v587 = vadd.f32 0.0, %v586
    %v588 = vpop.f32.mrb[0].mxu0
    %v589 = vpop.f32.mrb[0].mxu0
    %v590 = vadd.f32 0.0, %v589
    %v591 = vpop.f32.mrb[0].mxu0
    %592 = vdwg.mxu0
    %v593 = vpack.c.bf16 %v398, %v395
    %v594 = vpack.c.bf16 %v406, %v403
    %v595 = vpack.c.bf16 %v414, %v411
    %v596 = vpack.c.bf16 %v422, %v419
    %v597 = vpack.c.bf16 %v430, %v427
    %v598 = vpack.c.bf16 %v438, %v435
    %v599 = vpack.c.bf16 %v446, %v443
    %v600 = vpack.c.bf16 %v454, %v451
    %v601 = vpack.c.bf16 %v462, %v459
    %v602 = vpack.c.bf16 %v470, %v467
    %v603 = vpack.c.bf16 %v478, %v475
    %v604 = vpack.c.bf16 %v486, %v483
    %v605 = vpack.c.bf16 %v494, %v491
    %v606 = vpack.c.bf16 %v502, %v499
    %v607 = vpack.c.bf16 %v510, %v507
    %v608 = vpack.c.bf16 %v518, %v515
    %v609 = vpack.c.bf16 %v526, %v523
    %v610 = vpack.c.bf16 %v534, %v531
    %v611 = vpack.c.bf16 %v542, %v539
    %v612 = vpack.c.bf16 %v550, %v547
    %v613 = vpack.c.bf16 %v558, %v555
    %v614 = vpack.c.bf16 %v566, %v563
    %v615 = vpack.c.bf16 %v574, %v571
    %v616 = vpack.c.bf16 %v582, %v579
    %v617 = vpack.c.bf16 %v590, %v587
    %v618 = vld [vmem:[#allocation5] sm:$0xf]
    %v619 = vld [vmem:[#allocation5 + $0x4] sm:$0xf]
    %v620 = vld [vmem:[#allocation5 + $0x8] sm:$0xf]
    %v621 = vld [vmem:[#allocation5 + $0xc] sm:$0xf]
    %v622 = vld [vmem:[#allocation5 + $0x10] sm:$0xf]
    %v623 = vld [vmem:[#allocation5 + $0x14] sm:$0xf]
    %v624 = vld [vmem:[#allocation5 + $0x18] sm:$0xf]
    %v625 = vld [vmem:[#allocation5 + $0x1c] sm:$0xf]
    %v626 = vld [vmem:[#allocation5 + $0x20] sm:$0xf]
    %v627 = vld [vmem:[#allocation5 + $0x24] sm:$0xf]
    %v628 = vld [vmem:[#allocation5 + $0x28] sm:$0xf]
    %v629 = vld [vmem:[#allocation5 + $0x2c] sm:$0xf]
    %v630 = vld [vmem:[#allocation5 + $0x30] sm:$0xf]
    %v631 = vld [vmem:[#allocation5 + $0x34] sm:$0xf]
    %v632 = vld [vmem:[#allocation5 + $0x38] sm:$0xf]
    %v633 = vld [vmem:[#allocation5 + $0x3c] sm:$0xf]
    %v634 = vld [vmem:[#allocation5 + $0x40] sm:$0xf]
    %v635 = vld [vmem:[#allocation5 + $0x44] sm:$0xf]
    %v636 = vld [vmem:[#allocation5 + $0x48] sm:$0xf]
    %v637 = vld [vmem:[#allocation5 + $0x4c] sm:$0xf]
    %v638 = vld [vmem:[#allocation5 + $0x50] sm:$0xf]
    %v639 = vld [vmem:[#allocation5 + $0x54] sm:$0xf]
    %v640 = vld [vmem:[#allocation5 + $0x58] sm:$0xf]
    %v641 = vld [vmem:[#allocation5 + $0x5c] sm:$0xf]
    %v642 = vld [vmem:[#allocation5 + $0x60] sm:$0xf]
    %v643 = vld [vmem:[#allocation5 + $0x64] sm:$0xf]
    %v644 = vld [vmem:[#allocation5 + $0x68] sm:$0xf]
    %v645 = vld [vmem:[#allocation5 + $0x6c] sm:$0xf]
    %v646 = vld [vmem:[#allocation5 + $0x70] sm:$0xf]
    %v647 = vld [vmem:[#allocation5 + $0x74] sm:$0xf]
    %v648 = vld [vmem:[#allocation5 + $0x78] sm:$0xf]
    %v649 = vld [vmem:[#allocation5 + $0x7c] sm:$0xf]
    %v650 = vld [vmem:[#allocation5 + $0x80] sm:$0xf]
    %v651 = vld [vmem:[#allocation5 + $0x84] sm:$0xf]
    %v652 = vld [vmem:[#allocation5 + $0x88] sm:$0xf]
    %v653 = vld [vmem:[#allocation5 + $0x8c] sm:$0xf]
    %v654 = vld [vmem:[#allocation5 + $0x90] sm:$0xf]
    %v655 = vld [vmem:[#allocation5 + $0x94] sm:$0xf]
    %v656 = vld [vmem:[#allocation5 + $0x98] sm:$0xf]
    %v657 = vld [vmem:[#allocation5 + $0x9c] sm:$0xf]
    %v658 = vld [vmem:[#allocation5 + $0xa0] sm:$0xf]
    %v659 = vld [vmem:[#allocation5 + $0xa4] sm:$0xf]
    %v660 = vld [vmem:[#allocation5 + $0xa8] sm:$0xf]
    %v661 = vld [vmem:[#allocation5 + $0xac] sm:$0xf]
    %v662 = vld [vmem:[#allocation5 + $0xb0] sm:$0xf]
    %v663 = vld [vmem:[#allocation5 + $0xb4] sm:$0xf]
    %v664 = vld [vmem:[#allocation5 + $0xb8] sm:$0xf]
    %v665 = vld [vmem:[#allocation5 + $0xbc] sm:$0xf]
    %v666 = vld [vmem:[#allocation5 + $0xc0] sm:$0xf]
    %v667 = vld [vmem:[#allocation5 + $0xc4] sm:$0xf]
    %v668 = vld [vmem:[#allocation5 + $0xc8] sm:$0xf]
    %v669 = vld [vmem:[#allocation5 + $0xcc] sm:$0xf]
    %v670 = vld [vmem:[#allocation5 + $0xd0] sm:$0xf]
    %v671 = vld [vmem:[#allocation5 + $0xd4] sm:$0xf]
    %v672 = vld [vmem:[#allocation5 + $0xd8] sm:$0xf]
    %v673 = vld [vmem:[#allocation5 + $0xdc] sm:$0xf]
    %v674 = vld [vmem:[#allocation5 + $0xe0] sm:$0xf]
    %v675 = vld [vmem:[#allocation5 + $0xe4] sm:$0xf]
    %v676 = vld [vmem:[#allocation5 + $0xe8] sm:$0xf]
    %v677 = vld [vmem:[#allocation5 + $0xec] sm:$0xf]
    %v678 = vld [vmem:[#allocation5 + $0xf0] sm:$0xf]
    %v679 = vld [vmem:[#allocation5 + $0xf4] sm:$0xf]
    %v680 = vld [vmem:[#allocation5 + $0xf8] sm:$0xf]
    %v681 = vld [vmem:[#allocation5 + $0xfc] sm:$0xf]
    %v682 = vld [vmem:[#allocation5 + $0x100] sm:$0xf]
    %v683 = vld [vmem:[#allocation5 + $0x104] sm:$0xf]
    %v684 = vld [vmem:[#allocation5 + $0x108] sm:$0xf]
    %v685 = vld [vmem:[#allocation5 + $0x10c] sm:$0xf]
    %v686 = vld [vmem:[#allocation5 + $0x110] sm:$0xf]
    %v687 = vld [vmem:[#allocation5 + $0x114] sm:$0xf]
    %v688 = vld [vmem:[#allocation5 + $0x118] sm:$0xf]
    %v689 = vld [vmem:[#allocation5 + $0x11c] sm:$0xf]
    %v690 = vld [vmem:[#allocation5 + $0x120] sm:$0xf]
    %v691 = vld [vmem:[#allocation5 + $0x124] sm:$0xf]
    %v692 = vld [vmem:[#allocation5 + $0x128] sm:$0xf]
    %v693 = vld [vmem:[#allocation5 + $0x12c] sm:$0xf]
    %v694 = vld [vmem:[#allocation5 + $0x130] sm:$0xf]
    %v695 = vld [vmem:[#allocation5 + $0x134] sm:$0xf]
    %v696 = vld [vmem:[#allocation5 + $0x138] sm:$0xf]
    %v697 = vld [vmem:[#allocation5 + $0x13c] sm:$0xf]
    %v698 = vld [vmem:[#allocation5 + $0x140] sm:$0xf]
    %v699 = vld [vmem:[#allocation5 + $0x144] sm:$0xf]
    %v700 = vld [vmem:[#allocation5 + $0x148] sm:$0xf]
    %v701 = vld [vmem:[#allocation5 + $0x14c] sm:$0xf]
    %v702 = vld [vmem:[#allocation5 + $0x150] sm:$0xf]
    %v703 = vld [vmem:[#allocation5 + $0x154] sm:$0xf]
    %v704 = vld [vmem:[#allocation5 + $0x158] sm:$0xf]
    %v705 = vld [vmem:[#allocation5 + $0x15c] sm:$0xf]
    %v706 = vld [vmem:[#allocation5 + $0x160] sm:$0xf]
    %v707 = vld [vmem:[#allocation5 + $0x164] sm:$0xf]
    %v708 = vld [vmem:[#allocation5 + $0x168] sm:$0xf]
    %v709 = vld [vmem:[#allocation5 + $0x16c] sm:$0xf]
    %v710 = vld [vmem:[#allocation5 + $0x170] sm:$0xf]
    %v711 = vld [vmem:[#allocation5 + $0x174] sm:$0xf]
    %v712 = vld [vmem:[#allocation5 + $0x178] sm:$0xf]
    %v713 = vld [vmem:[#allocation5 + $0x17c] sm:$0xf]
    %v714 = vld [vmem:[#allocation5 + $0x180] sm:$0xf]
    %v715 = vld [vmem:[#allocation5 + $0x184] sm:$0xf]
    %v716 = vld [vmem:[#allocation5 + $0x188] sm:$0xf]
    %v717 = vld [vmem:[#allocation5 + $0x18c] sm:$0xf]
    %v718 = vld [vmem:[#allocation5 + $0x190] sm:$0xf]
    %v719 = vld [vmem:[#allocation5 + $0x194] sm:$0xf]
    %v720 = vld [vmem:[#allocation5 + $0x198] sm:$0xf]
    %v721 = vld [vmem:[#allocation5 + $0x19c] sm:$0xf]
    %v722 = vld [vmem:[#allocation5 + $0x1a0] sm:$0xf]
    %v723 = vld [vmem:[#allocation5 + $0x1a4] sm:$0xf]
    %v724 = vld [vmem:[#allocation5 + $0x1a8] sm:$0xf]
    %v725 = vld [vmem:[#allocation5 + $0x1ac] sm:$0xf]
    %v726 = vld [vmem:[#allocation5 + $0x1b0] sm:$0xf]
    %v727 = vld [vmem:[#allocation5 + $0x1b4] sm:$0xf]
    %v728 = vld [vmem:[#allocation5 + $0x1b8] sm:$0xf]
    %v729 = vld [vmem:[#allocation5 + $0x1bc] sm:$0xf]
    %v730 = vld [vmem:[#allocation5 + $0x1c0] sm:$0xf]
    %v731 = vld [vmem:[#allocation5 + $0x1c4] sm:$0xf]
    %v732 = vld [vmem:[#allocation5 + $0x1c8] sm:$0xf]
    %v733 = vld [vmem:[#allocation5 + $0x1cc] sm:$0xf]
    %v734 = vld [vmem:[#allocation5 + $0x1d0] sm:$0xf]
    %v735 = vld [vmem:[#allocation5 + $0x1d4] sm:$0xf]
    %v736 = vld [vmem:[#allocation5 + $0x1d8] sm:$0xf]
    %v737 = vld [vmem:[#allocation5 + $0x1dc] sm:$0xf]
    %v738 = vld [vmem:[#allocation5 + $0x1e0] sm:$0xf]
    %v739 = vld [vmem:[#allocation5 + $0x1e4] sm:$0xf]
    %v740 = vld [vmem:[#allocation5 + $0x1e8] sm:$0xf]
    %v741 = vld [vmem:[#allocation5 + $0x1ec] sm:$0xf]
    %v742 = vld [vmem:[#allocation5 + $0x1f0] sm:$0xf]
    %v743 = vld [vmem:[#allocation5 + $0x1f4] sm:$0xf]
    %v744 = vld [vmem:[#allocation5 + $0x1f8] sm:$0xf]
    %v745 = vld [vmem:[#allocation5 + $0x1fc] sm:$0xf]
    %v746 = vld [vmem:[#allocation5 + $0x200] sm:$0xf]
    %v747 = vld [vmem:[#allocation5 + $0x204] sm:$0xf]
    %v748 = vld [vmem:[#allocation5 + $0x208] sm:$0xf]
    %v749 = vld [vmem:[#allocation5 + $0x20c] sm:$0xf]
    %v750 = vld [vmem:[#allocation5 + $0x210] sm:$0xf]
    %v751 = vld [vmem:[#allocation5 + $0x214] sm:$0xf]
    %v752 = vld [vmem:[#allocation5 + $0x218] sm:$0xf]
    %v753 = vld [vmem:[#allocation5 + $0x21c] sm:$0xf]
    %v754 = vld [vmem:[#allocation5 + $0x220] sm:$0xf]
    %v755 = vld [vmem:[#allocation5 + $0x224] sm:$0xf]
    %v756 = vld [vmem:[#allocation5 + $0x228] sm:$0xf]
    %v757 = vld [vmem:[#allocation5 + $0x22c] sm:$0xf]
    %v758 = vld [vmem:[#allocation5 + $0x230] sm:$0xf]
    %v759 = vld [vmem:[#allocation5 + $0x234] sm:$0xf]
    %v760 = vld [vmem:[#allocation5 + $0x238] sm:$0xf]
    %v761 = vld [vmem:[#allocation5 + $0x23c] sm:$0xf]
    %v762 = vld [vmem:[#allocation5 + $0x240] sm:$0xf]
    %v763 = vld [vmem:[#allocation5 + $0x244] sm:$0xf]
    %v764 = vld [vmem:[#allocation5 + $0x248] sm:$0xf]
    %v765 = vld [vmem:[#allocation5 + $0x24c] sm:$0xf]
    %v766 = vld [vmem:[#allocation5 + $0x250] sm:$0xf]
    %v767 = vld [vmem:[#allocation5 + $0x254] sm:$0xf]
    %v768 = vld [vmem:[#allocation5 + $0x258] sm:$0xf]
    %v769 = vld [vmem:[#allocation5 + $0x25c] sm:$0xf]
    %v770 = vld [vmem:[#allocation5 + $0x260] sm:$0xf]
    %v771 = vld [vmem:[#allocation5 + $0x264] sm:$0xf]
    %v772 = vld [vmem:[#allocation5 + $0x268] sm:$0xf]
    %v773 = vld [vmem:[#allocation5 + $0x26c] sm:$0xf]
    %v774 = vld [vmem:[#allocation5 + $0x270] sm:$0xf]
    %v775 = vld [vmem:[#allocation5 + $0x274] sm:$0xf]
    %v776 = vld [vmem:[#allocation5 + $0x278] sm:$0xf]
    %v777 = vld [vmem:[#allocation5 + $0x27c] sm:$0xf]
    %v778 = vld [vmem:[#allocation5 + $0x280] sm:$0xf]
    %v779 = vld [vmem:[#allocation5 + $0x284] sm:$0xf]
    %v780 = vld [vmem:[#allocation5 + $0x288] sm:$0xf]
    %v781 = vld [vmem:[#allocation5 + $0x28c] sm:$0xf]
    %v782 = vld [vmem:[#allocation5 + $0x290] sm:$0xf]
    %v783 = vld [vmem:[#allocation5 + $0x294] sm:$0xf]
    %v784 = vld [vmem:[#allocation5 + $0x298] sm:$0xf]
    %v785 = vld [vmem:[#allocation5 + $0x29c] sm:$0xf]
    %v786 = vld [vmem:[#allocation5 + $0x2a0] sm:$0xf]
    %v787 = vld [vmem:[#allocation5 + $0x2a4] sm:$0xf]
    %v788 = vld [vmem:[#allocation5 + $0x2a8] sm:$0xf]
    %v789 = vld [vmem:[#allocation5 + $0x2ac] sm:$0xf]
    %v790 = vld [vmem:[#allocation5 + $0x2b0] sm:$0xf]
    %v791 = vld [vmem:[#allocation5 + $0x2b4] sm:$0xf]
    %v792 = vld [vmem:[#allocation5 + $0x2b8] sm:$0xf]
    %v793 = vld [vmem:[#allocation5 + $0x2bc] sm:$0xf]
    %v794 = vld [vmem:[#allocation5 + $0x2c0] sm:$0xf]
    %v795 = vld [vmem:[#allocation5 + $0x2c4] sm:$0xf]
    %v796 = vld [vmem:[#allocation5 + $0x2c8] sm:$0xf]
    %v797 = vld [vmem:[#allocation5 + $0x2cc] sm:$0xf]
    %v798 = vld [vmem:[#allocation5 + $0x2d0] sm:$0xf]
    %v799 = vld [vmem:[#allocation5 + $0x2d4] sm:$0xf]
    %v800 = vld [vmem:[#allocation5 + $0x2d8] sm:$0xf]
    %v801 = vld [vmem:[#allocation5 + $0x2dc] sm:$0xf]
    %v802 = vld [vmem:[#allocation5 + $0x2e0] sm:$0xf]
    %v803 = vld [vmem:[#allocation5 + $0x2e4] sm:$0xf]
    %v804 = vld [vmem:[#allocation5 + $0x2e8] sm:$0xf]
    %v805 = vld [vmem:[#allocation5 + $0x2ec] sm:$0xf]
    %v806 = vld [vmem:[#allocation5 + $0x2f0] sm:$0xf]
    %v807 = vld [vmem:[#allocation5 + $0x2f4] sm:$0xf]
    %v808 = vld [vmem:[#allocation5 + $0x2f8] sm:$0xf]
    %v809 = vld [vmem:[#allocation5 + $0x2fc] sm:$0xf]
    %v810 = vld [vmem:[#allocation5 + $0x300] sm:$0xf]
    %v811 = vld [vmem:[#allocation5 + $0x304] sm:$0xf]
    %v812 = vld [vmem:[#allocation5 + $0x308] sm:$0xf]
    %v813 = vld [vmem:[#allocation5 + $0x30c] sm:$0xf]
    %v814 = vld [vmem:[#allocation5 + $0x310] sm:$0xf]
    %v815 = vld [vmem:[#allocation5 + $0x314] sm:$0xf]
    %v816 = vld [vmem:[#allocation5 + $0x318] sm:$0xf]
    %v817 = vld [vmem:[#allocation5 + $0x31c] sm:$0xf]
    %v818 = vld [vmem:[#allocation5 + $0x320] sm:$0xf]
    %v819 = vld [vmem:[#allocation5 + $0x324] sm:$0xf]
    %v820 = vld [vmem:[#allocation5 + $0x328] sm:$0xf]
    %v821 = vld [vmem:[#allocation5 + $0x32c] sm:$0xf]
    %v822 = vld [vmem:[#allocation5 + $0x330] sm:$0xf]
    %v823 = vld [vmem:[#allocation5 + $0x334] sm:$0xf]
    %v824 = vld [vmem:[#allocation5 + $0x338] sm:$0xf]
    %v825 = vld [vmem:[#allocation5 + $0x33c] sm:$0xf]
    %v826 = vld [vmem:[#allocation5 + $0x340] sm:$0xf]
    %v827 = vld [vmem:[#allocation5 + $0x344] sm:$0xf]
    %v828 = vld [vmem:[#allocation5 + $0x348] sm:$0xf]
    %v829 = vld [vmem:[#allocation5 + $0x34c] sm:$0xf]
    %v830 = vld [vmem:[#allocation5 + $0x350] sm:$0xf]
    %v831 = vld [vmem:[#allocation5 + $0x354] sm:$0xf]
    %v832 = vld [vmem:[#allocation5 + $0x358] sm:$0xf]
    %v833 = vld [vmem:[#allocation5 + $0x35c] sm:$0xf]
    %v834 = vld [vmem:[#allocation5 + $0x360] sm:$0xf]
    %v835 = vld [vmem:[#allocation5 + $0x364] sm:$0xf]
    %v836 = vld [vmem:[#allocation5 + $0x368] sm:$0xf]
    %v837 = vld [vmem:[#allocation5 + $0x36c] sm:$0xf]
    %v838 = vld [vmem:[#allocation5 + $0x370] sm:$0xf]
    %v839 = vld [vmem:[#allocation5 + $0x374] sm:$0xf]
    %v840 = vld [vmem:[#allocation5 + $0x378] sm:$0xf]
    %v841 = vld [vmem:[#allocation5 + $0x37c] sm:$0xf]
    %v842 = vld [vmem:[#allocation5 + $0x380] sm:$0xf]
    %v843 = vld [vmem:[#allocation5 + $0x384] sm:$0xf]
    %v844 = vld [vmem:[#allocation5 + $0x388] sm:$0xf]
    %v845 = vld [vmem:[#allocation5 + $0x38c] sm:$0xf]
    %v846 = vld [vmem:[#allocation5 + $0x390] sm:$0xf]
    %v847 = vld [vmem:[#allocation5 + $0x394] sm:$0xf]
    %v848 = vld [vmem:[#allocation5 + $0x398] sm:$0xf]
    %v849 = vld [vmem:[#allocation5 + $0x39c] sm:$0xf]
    %v850 = vld [vmem:[#allocation5 + $0x3a0] sm:$0xf]
    %v851 = vld [vmem:[#allocation5 + $0x3a4] sm:$0xf]
    %v852 = vld [vmem:[#allocation5 + $0x3a8] sm:$0xf]
    %v853 = vld [vmem:[#allocation5 + $0x3ac] sm:$0xf]
    %v854 = vld [vmem:[#allocation5 + $0x3b0] sm:$0xf]
    %v855 = vld [vmem:[#allocation5 + $0x3b4] sm:$0xf]
    %v856 = vld [vmem:[#allocation5 + $0x3b8] sm:$0xf]
    %v857 = vld [vmem:[#allocation5 + $0x3bc] sm:$0xf]
    %v858 = vld [vmem:[#allocation5 + $0x3c0] sm:$0xf]
    %v859 = vld [vmem:[#allocation5 + $0x3c4] sm:$0xf]
    %v860 = vld [vmem:[#allocation5 + $0x3c8] sm:$0xf]
    %v861 = vld [vmem:[#allocation5 + $0x3cc] sm:$0xf]
    %v862 = vld [vmem:[#allocation5 + $0x3d0] sm:$0xf]
    %v863 = vld [vmem:[#allocation5 + $0x3d4] sm:$0xf]
    %v864 = vld [vmem:[#allocation5 + $0x3d8] sm:$0xf]
    %v865 = vld [vmem:[#allocation5 + $0x3dc] sm:$0xf]
    %v866 = vld [vmem:[#allocation5 + $0x3e0] sm:$0xf]
    %v867 = vld [vmem:[#allocation5 + $0x3e4] sm:$0xf]
    %v868 = vld [vmem:[#allocation5 + $0x3e8] sm:$0xf]
    %v869 = vld [vmem:[#allocation5 + $0x3ec] sm:$0xf]
    %v870 = vld [vmem:[#allocation5 + $0x3f0] sm:$0xf]
    %v871 = vld [vmem:[#allocation5 + $0x3f4] sm:$0xf]
    %v872 = vld [vmem:[#allocation5 + $0x3f8] sm:$0xf]
    %v873 = vld [vmem:[#allocation5 + $0x3fc] sm:$0xf]
    %v874 = vld [vmem:[#allocation5 + $0x400] sm:$0xf]
    %v875 = vld [vmem:[#allocation5 + $0x404] sm:$0xf]
    %v876 = vld [vmem:[#allocation5 + $0x408] sm:$0xf]
    %v877 = vld [vmem:[#allocation5 + $0x40c] sm:$0xf]
    %v878 = vld [vmem:[#allocation5 + $0x410] sm:$0xf]
    %v879 = vld [vmem:[#allocation5 + $0x414] sm:$0xf]
    %v880 = vld [vmem:[#allocation5 + $0x418] sm:$0xf]
    %v881 = vld [vmem:[#allocation5 + $0x41c] sm:$0xf]
    %v882 = vld [vmem:[#allocation5 + $0x420] sm:$0xf]
    %v883 = vld [vmem:[#allocation5 + $0x424] sm:$0xf]
    %v884 = vld [vmem:[#allocation5 + $0x428] sm:$0xf]
    %v885 = vld [vmem:[#allocation5 + $0x42c] sm:$0xf]
    %v886 = vld [vmem:[#allocation5 + $0x430] sm:$0xf]
    %v887 = vld [vmem:[#allocation5 + $0x434] sm:$0xf]
    %v888 = vld [vmem:[#allocation5 + $0x438] sm:$0xf]
    %v889 = vld [vmem:[#allocation5 + $0x43c] sm:$0xf]
    %v890 = vld [vmem:[#allocation5 + $0x440] sm:$0xf]
    %v891 = vld [vmem:[#allocation5 + $0x444] sm:$0xf]
    %v892 = vld [vmem:[#allocation5 + $0x448] sm:$0xf]
    %v893 = vld [vmem:[#allocation5 + $0x44c] sm:$0xf]
    %v894 = vld [vmem:[#allocation5 + $0x450] sm:$0xf]
    %v895 = vld [vmem:[#allocation5 + $0x454] sm:$0xf]
    %v896 = vld [vmem:[#allocation5 + $0x458] sm:$0xf]
    %v897 = vld [vmem:[#allocation5 + $0x45c] sm:$0xf]
    %v898 = vld [vmem:[#allocation5 + $0x460] sm:$0xf]
    %v899 = vld [vmem:[#allocation5 + $0x464] sm:$0xf]
    %v900 = vld [vmem:[#allocation5 + $0x468] sm:$0xf]
    %v901 = vld [vmem:[#allocation5 + $0x46c] sm:$0xf]
    %v902 = vld [vmem:[#allocation5 + $0x470] sm:$0xf]
    %v903 = vld [vmem:[#allocation5 + $0x474] sm:$0xf]
    %v904 = vld [vmem:[#allocation5 + $0x478] sm:$0xf]
    %v905 = vld [vmem:[#allocation5 + $0x47c] sm:$0xf]
    %v906 = vld [vmem:[#allocation5 + $0x480] sm:$0xf]
    %v907 = vld [vmem:[#allocation5 + $0x484] sm:$0xf]
    %v908 = vld [vmem:[#allocation5 + $0x488] sm:$0xf]
    %v909 = vld [vmem:[#allocation5 + $0x48c] sm:$0xf]
    %v910 = vld [vmem:[#allocation5 + $0x490] sm:$0xf]
    %v911 = vld [vmem:[#allocation5 + $0x494] sm:$0xf]
    %v912 = vld [vmem:[#allocation5 + $0x498] sm:$0xf]
    %v913 = vld [vmem:[#allocation5 + $0x49c] sm:$0xf]
    %v914 = vld [vmem:[#allocation5 + $0x4a0] sm:$0xf]
    %v915 = vld [vmem:[#allocation5 + $0x4a4] sm:$0xf]
    %v916 = vld [vmem:[#allocation5 + $0x4a8] sm:$0xf]
    %v917 = vld [vmem:[#allocation5 + $0x4ac] sm:$0xf]
    %v918 = vld [vmem:[#allocation5 + $0x4b0] sm:$0xf]
    %v919 = vld [vmem:[#allocation5 + $0x4b4] sm:$0xf]
    %v920 = vld [vmem:[#allocation5 + $0x4b8] sm:$0xf]
    %v921 = vld [vmem:[#allocation5 + $0x4bc] sm:$0xf]
    %v922 = vld [vmem:[#allocation5 + $0x4c0] sm:$0xf]
    %v923 = vld [vmem:[#allocation5 + $0x4c4] sm:$0xf]
    %v924 = vld [vmem:[#allocation5 + $0x4c8] sm:$0xf]
    %v925 = vld [vmem:[#allocation5 + $0x4cc] sm:$0xf]
    %v926 = vld [vmem:[#allocation5 + $0x4d0] sm:$0xf]
    %v927 = vld [vmem:[#allocation5 + $0x4d4] sm:$0xf]
    %v928 = vld [vmem:[#allocation5 + $0x4d8] sm:$0xf]
    %v929 = vld [vmem:[#allocation5 + $0x4dc] sm:$0xf]
    %v930 = vld [vmem:[#allocation5 + $0x4e0] sm:$0xf]
    %v931 = vld [vmem:[#allocation5 + $0x4e4] sm:$0xf]
    %v932 = vld [vmem:[#allocation5 + $0x4e8] sm:$0xf]
    %v933 = vld [vmem:[#allocation5 + $0x4ec] sm:$0xf]
    %v934 = vld [vmem:[#allocation5 + $0x4f0] sm:$0xf]
    %v935 = vld [vmem:[#allocation5 + $0x4f4] sm:$0xf]
    %v936 = vld [vmem:[#allocation5 + $0x4f8] sm:$0xf]
    %v937 = vld [vmem:[#allocation5 + $0x4fc] sm:$0xf]
    %v938 = vld [vmem:[#allocation5 + $0x500] sm:$0xf]
    %v939 = vld [vmem:[#allocation5 + $0x504] sm:$0xf]
    %v940 = vld [vmem:[#allocation5 + $0x508] sm:$0xf]
    %v941 = vld [vmem:[#allocation5 + $0x50c] sm:$0xf]
    %v942 = vld [vmem:[#allocation5 + $0x510] sm:$0xf]
    %v943 = vld [vmem:[#allocation5 + $0x514] sm:$0xf]
    %v944 = vld [vmem:[#allocation5 + $0x518] sm:$0xf]
    %v945 = vld [vmem:[#allocation5 + $0x51c] sm:$0xf]
    %v946 = vld [vmem:[#allocation5 + $0x520] sm:$0xf]
    %v947 = vld [vmem:[#allocation5 + $0x524] sm:$0xf]
    %v948 = vld [vmem:[#allocation5 + $0x528] sm:$0xf]
    %v949 = vld [vmem:[#allocation5 + $0x52c] sm:$0xf]
    %v950 = vld [vmem:[#allocation5 + $0x530] sm:$0xf]
    %v951 = vld [vmem:[#allocation5 + $0x534] sm:$0xf]
    %v952 = vld [vmem:[#allocation5 + $0x538] sm:$0xf]
    %v953 = vld [vmem:[#allocation5 + $0x53c] sm:$0xf]
    %v954 = vld [vmem:[#allocation5 + $0x540] sm:$0xf]
    %v955 = vld [vmem:[#allocation5 + $0x544] sm:$0xf]
    %v956 = vld [vmem:[#allocation5 + $0x548] sm:$0xf]
    %v957 = vld [vmem:[#allocation5 + $0x54c] sm:$0xf]
    %v958 = vld [vmem:[#allocation5 + $0x550] sm:$0xf]
    %v959 = vld [vmem:[#allocation5 + $0x554] sm:$0xf]
    %v960 = vld [vmem:[#allocation5 + $0x558] sm:$0xf]
    %v961 = vld [vmem:[#allocation5 + $0x55c] sm:$0xf]
    %v962 = vld [vmem:[#allocation5 + $0x560] sm:$0xf]
    %v963 = vld [vmem:[#allocation5 + $0x564] sm:$0xf]
    %v964 = vld [vmem:[#allocation5 + $0x568] sm:$0xf]
    %v965 = vld [vmem:[#allocation5 + $0x56c] sm:$0xf]
    %v966 = vld [vmem:[#allocation5 + $0x570] sm:$0xf]
    %v967 = vld [vmem:[#allocation5 + $0x574] sm:$0xf]
    %v968 = vld [vmem:[#allocation5 + $0x578] sm:$0xf]
    %v969 = vld [vmem:[#allocation5 + $0x57c] sm:$0xf]
    %v970 = vld [vmem:[#allocation5 + $0x580] sm:$0xf]
    %v971 = vld [vmem:[#allocation5 + $0x584] sm:$0xf]
    %v972 = vld [vmem:[#allocation5 + $0x588] sm:$0xf]
    %v973 = vld [vmem:[#allocation5 + $0x58c] sm:$0xf]
    %v974 = vld [vmem:[#allocation5 + $0x590] sm:$0xf]
    %v975 = vld [vmem:[#allocation5 + $0x594] sm:$0xf]
    %v976 = vld [vmem:[#allocation5 + $0x598] sm:$0xf]
    %v977 = vld [vmem:[#allocation5 + $0x59c] sm:$0xf]
    %v978 = vld [vmem:[#allocation5 + $0x5a0] sm:$0xf]
    %v979 = vld [vmem:[#allocation5 + $0x5a4] sm:$0xf]
    %v980 = vld [vmem:[#allocation5 + $0x5a8] sm:$0xf]
    %v981 = vld [vmem:[#allocation5 + $0x5ac] sm:$0xf]
    %v982 = vld [vmem:[#allocation5 + $0x5b0] sm:$0xf]
    %v983 = vld [vmem:[#allocation5 + $0x5b4] sm:$0xf]
    %v984 = vld [vmem:[#allocation5 + $0x5b8] sm:$0xf]
    %v985 = vld [vmem:[#allocation5 + $0x5bc] sm:$0xf]
    %v986 = vld [vmem:[#allocation5 + $0x5c0] sm:$0xf]
    %v987 = vld [vmem:[#allocation5 + $0x5c4] sm:$0xf]
    %v988 = vld [vmem:[#allocation5 + $0x5c8] sm:$0xf]
    %v989 = vld [vmem:[#allocation5 + $0x5cc] sm:$0xf]
    %v990 = vld [vmem:[#allocation5 + $0x5d0] sm:$0xf]
    %v991 = vld [vmem:[#allocation5 + $0x5d4] sm:$0xf]
    %v992 = vld [vmem:[#allocation5 + $0x5d8] sm:$0xf]
    %v993 = vld [vmem:[#allocation5 + $0x5dc] sm:$0xf]
    %v994 = vld [vmem:[#allocation5 + $0x5e0] sm:$0xf]
    %v995 = vld [vmem:[#allocation5 + $0x5e4] sm:$0xf]
    %v996 = vld [vmem:[#allocation5 + $0x5e8] sm:$0xf]
    %v997 = vld [vmem:[#allocation5 + $0x5ec] sm:$0xf]
    %v998 = vld [vmem:[#allocation5 + $0x5f0] sm:$0xf]
    %v999 = vld [vmem:[#allocation5 + $0x5f4] sm:$0xf]
    %v1000 = vld [vmem:[#allocation5 + $0x5f8] sm:$0xf]
    %v1001 = vld [vmem:[#allocation5 + $0x5fc] sm:$0xf]
    %v1002 = vld [vmem:[#allocation5 + $0x600] sm:$0xf]
    %v1003 = vld [vmem:[#allocation5 + $0x604] sm:$0xf]
    %v1004 = vld [vmem:[#allocation5 + $0x608] sm:$0xf]
    %v1005 = vld [vmem:[#allocation5 + $0x60c] sm:$0xf]
    %v1006 = vld [vmem:[#allocation5 + $0x610] sm:$0xf]
    %v1007 = vld [vmem:[#allocation5 + $0x614] sm:$0xf]
    %v1008 = vld [vmem:[#allocation5 + $0x618] sm:$0xf]
    %v1009 = vld [vmem:[#allocation5 + $0x61c] sm:$0xf]
    %v1010 = vld [vmem:[#allocation5 + $0x620] sm:$0xf]
    %v1011 = vld [vmem:[#allocation5 + $0x624] sm:$0xf]
    %v1012 = vld [vmem:[#allocation5 + $0x628] sm:$0xf]
    %v1013 = vld [vmem:[#allocation5 + $0x62c] sm:$0xf]
    %v1014 = vld [vmem:[#allocation5 + $0x630] sm:$0xf]
    %v1015 = vld [vmem:[#allocation5 + $0x634] sm:$0xf]
    %v1016 = vld [vmem:[#allocation5 + $0x638] sm:$0xf]
    %v1017 = vld [vmem:[#allocation5 + $0x63c] sm:$0xf]
    %v1018 = vld [vmem:[#allocation5 + $0x640] sm:$0xf]
    %v1019 = vld [vmem:[#allocation5 + $0x644] sm:$0xf]
    %v1020 = vld [vmem:[#allocation5 + $0x648] sm:$0xf]
    %v1021 = vld [vmem:[#allocation5 + $0x64c] sm:$0xf]
    %v1022 = vld [vmem:[#allocation5 + $0x650] sm:$0xf]
    %v1023 = vld [vmem:[#allocation5 + $0x654] sm:$0xf]
    %v1024 = vld [vmem:[#allocation5 + $0x658] sm:$0xf]
    %v1025 = vld [vmem:[#allocation5 + $0x65c] sm:$0xf]
    %v1026 = vld [vmem:[#allocation5 + $0x660] sm:$0xf]
    %v1027 = vld [vmem:[#allocation5 + $0x664] sm:$0xf]
    %v1028 = vld [vmem:[#allocation5 + $0x668] sm:$0xf]
    %v1029 = vld [vmem:[#allocation5 + $0x66c] sm:$0xf]
    %v1030 = vld [vmem:[#allocation5 + $0x670] sm:$0xf]
    %v1031 = vld [vmem:[#allocation5 + $0x674] sm:$0xf]
    %v1032 = vld [vmem:[#allocation5 + $0x678] sm:$0xf]
    %v1033 = vld [vmem:[#allocation5 + $0x67c] sm:$0xf]
    %v1034 = vld [vmem:[%s4] sm:$0x1]
    %v1036 = vlaneseq
    %v1037 = vshrl.u32 %v1036, 7
    %v1038 = vsub.s32 0, %v1037
    %v1039 = vrot.slane %v1034, %v1038
    %v1457 = vunpack.c.l.b16 %v618
    %v1458 = vunpack.c.l.b16 %v619
    %v1459 = vunpack.c.l.b16 %v620
    %v1460 = vunpack.c.l.b16 %v621
    %v1461 = vunpack.c.l.b16 %v622
    %v1462 = vunpack.c.l.b16 %v623
    %v1463 = vunpack.c.l.b16 %v624
    %v1464 = vunpack.c.l.b16 %v625
    %v1465 = vunpack.c.l.b16 %v626
    %v1466 = vunpack.c.l.b16 %v627
    %v1467 = vunpack.c.l.b16 %v628
    %v1468 = vunpack.c.l.b16 %v629
    %v1469 = vunpack.c.l.b16 %v630
    %v1470 = vunpack.c.l.b16 %v631
    %v1471 = vunpack.c.l.b16 %v632
    %v1472 = vunpack.c.l.b16 %v633
    %v1473 = vunpack.c.l.b16 %v634
    %v1474 = vunpack.c.l.b16 %v635
    %v1475 = vunpack.c.l.b16 %v636
    %v1476 = vunpack.c.l.b16 %v637
    %v1477 = vunpack.c.l.b16 %v638
    %v1478 = vunpack.c.l.b16 %v639
    %v1479 = vunpack.c.l.b16 %v640
    %v1480 = vunpack.c.l.b16 %v641
    %v1481 = vunpack.c.l.b16 %v642
    %v1482 = vunpack.c.l.b16 %v643
    %v1483 = vunpack.c.l.b16 %v644
    %v1484 = vunpack.c.l.b16 %v645
    %v1485 = vunpack.c.l.b16 %v646
    %v1486 = vunpack.c.l.b16 %v647
    %v1487 = vunpack.c.l.b16 %v648
    %v1488 = vunpack.c.l.b16 %v649
    %v1489 = vunpack.c.l.b16 %v650
    %v1490 = vunpack.c.l.b16 %v651
    %v1491 = vunpack.c.l.b16 %v652
    %v1492 = vunpack.c.l.b16 %v653
    %v1493 = vunpack.c.l.b16 %v654
    %v1494 = vunpack.c.l.b16 %v655
    %v1495 = vunpack.c.l.b16 %v656
    %v1496 = vunpack.c.l.b16 %v657
    %v1497 = vunpack.c.l.b16 %v658
    %v1498 = vunpack.c.l.b16 %v659
    %v1499 = vunpack.c.l.b16 %v660
    %v1500 = vunpack.c.l.b16 %v661
    %v1501 = vunpack.c.l.b16 %v662
    %v1502 = vunpack.c.l.b16 %v663
    %v1503 = vunpack.c.l.b16 %v664
    %v1504 = vunpack.c.l.b16 %v665
    %v1505 = vunpack.c.l.b16 %v666
    %v1506 = vunpack.c.l.b16 %v667
    %v1507 = vunpack.c.l.b16 %v668
    %v1508 = vunpack.c.l.b16 %v669
    %v1509 = vunpack.c.l.b16 %v670
    %v1510 = vunpack.c.l.b16 %v671
    %v1511 = vunpack.c.l.b16 %v672
    %v1512 = vunpack.c.l.b16 %v673
    %v1513 = vunpack.c.l.b16 %v674
    %v1514 = vunpack.c.l.b16 %v675
    %v1515 = vunpack.c.l.b16 %v676
    %v1516 = vunpack.c.l.b16 %v677
    %v1517 = vunpack.c.l.b16 %v678
    %v1518 = vunpack.c.l.b16 %v679
    %v1519 = vunpack.c.l.b16 %v680
    %v1520 = vunpack.c.l.b16 %v681
    %v1521 = vunpack.c.l.b16 %v682
    %v1522 = vunpack.c.l.b16 %v683
    %v1523 = vunpack.c.l.b16 %v684
    %v1524 = vunpack.c.l.b16 %v685
    %v1525 = vunpack.c.l.b16 %v686
    %v1526 = vunpack.c.l.b16 %v687
    %v1527 = vunpack.c.l.b16 %v688
    %v1528 = vunpack.c.l.b16 %v689
    %v1529 = vunpack.c.l.b16 %v690
    %v1530 = vunpack.c.l.b16 %v691
    %v1531 = vunpack.c.l.b16 %v692
    %v1532 = vunpack.c.l.b16 %v693
    %v1533 = vunpack.c.l.b16 %v694
    %v1534 = vunpack.c.l.b16 %v695
    %v1535 = vunpack.c.l.b16 %v696
    %v1536 = vunpack.c.l.b16 %v697
    %v1537 = vunpack.c.l.b16 %v698
    %v1538 = vunpack.c.l.b16 %v699
    %v1539 = vunpack.c.l.b16 %v700
    %v1540 = vunpack.c.l.b16 %v701
    %v1541 = vunpack.c.l.b16 %v702
    %v1542 = vunpack.c.l.b16 %v703
    %v1543 = vunpack.c.l.b16 %v704
    %v1544 = vunpack.c.l.b16 %v705
    %v1545 = vunpack.c.l.b16 %v706
    %v1546 = vunpack.c.l.b16 %v707
    %v1547 = vunpack.c.l.b16 %v708
    %v1548 = vunpack.c.l.b16 %v709
    %v1549 = vunpack.c.l.b16 %v710
    %v1550 = vunpack.c.l.b16 %v711
    %v1551 = vunpack.c.l.b16 %v712
    %v1552 = vunpack.c.l.b16 %v713
    %v1553 = vunpack.c.l.b16 %v714
    %v1554 = vunpack.c.l.b16 %v715
    %v1555 = vunpack.c.l.b16 %v716
    %v1556 = vunpack.c.l.b16 %v717
    %v1557 = vunpack.c.l.b16 %v718
    %v1558 = vunpack.c.l.b16 %v719
    %v1559 = vunpack.c.l.b16 %v720
    %v1560 = vunpack.c.l.b16 %v721
    %v1561 = vunpack.c.l.b16 %v722
    %v1562 = vunpack.c.l.b16 %v723
    %v1563 = vunpack.c.l.b16 %v724
    %v1564 = vunpack.c.l.b16 %v725
    %v1565 = vunpack.c.l.b16 %v726
    %v1566 = vunpack.c.l.b16 %v727
    %v1567 = vunpack.c.l.b16 %v728
    %v1568 = vunpack.c.l.b16 %v729
    %v1569 = vunpack.c.l.b16 %v730
    %v1570 = vunpack.c.l.b16 %v731
    %v1571 = vunpack.c.l.b16 %v732
    %v1572 = vunpack.c.l.b16 %v733
    %v1573 = vunpack.c.l.b16 %v734
    %v1574 = vunpack.c.l.b16 %v735
    %v1575 = vunpack.c.l.b16 %v736
    %v1576 = vunpack.c.l.b16 %v737
    %v1577 = vunpack.c.l.b16 %v738
    %v1578 = vunpack.c.l.b16 %v739
    %v1579 = vunpack.c.l.b16 %v740
    %v1580 = vunpack.c.l.b16 %v741
    %v1581 = vunpack.c.l.b16 %v742
    %v1582 = vunpack.c.l.b16 %v743
    %v1583 = vunpack.c.l.b16 %v744
    %v1584 = vunpack.c.l.b16 %v745
    %v1585 = vunpack.c.l.b16 %v746
    %v1586 = vunpack.c.l.b16 %v747
    %v1587 = vunpack.c.l.b16 %v748
    %v1588 = vunpack.c.l.b16 %v749
    %v1589 = vunpack.c.l.b16 %v750
    %v1590 = vunpack.c.l.b16 %v751
    %v1591 = vunpack.c.l.b16 %v752
    %v1592 = vunpack.c.l.b16 %v753
    %v1593 = vunpack.c.l.b16 %v754
    %v1594 = vunpack.c.l.b16 %v755
    %v1595 = vunpack.c.l.b16 %v756
    %v1596 = vunpack.c.l.b16 %v757
    %v1597 = vunpack.c.l.b16 %v758
    %v1598 = vunpack.c.l.b16 %v759
    %v1599 = vunpack.c.l.b16 %v760
    %v1600 = vunpack.c.l.b16 %v761
    %v1601 = vunpack.c.l.b16 %v762
    %v1602 = vunpack.c.l.b16 %v763
    %v1603 = vunpack.c.l.b16 %v764
    %v1604 = vunpack.c.l.b16 %v765
    %v1605 = vunpack.c.l.b16 %v766
    %v1606 = vunpack.c.l.b16 %v767
    %v1607 = vunpack.c.l.b16 %v768
    %v1608 = vunpack.c.l.b16 %v769
    %v1609 = vunpack.c.l.b16 %v770
    %v1610 = vunpack.c.l.b16 %v771
    %v1611 = vunpack.c.l.b16 %v772
    %v1612 = vunpack.c.l.b16 %v773
    %v1613 = vunpack.c.l.b16 %v774
    %v1614 = vunpack.c.l.b16 %v775
    %v1615 = vunpack.c.l.b16 %v776
    %v1616 = vunpack.c.l.b16 %v777
    %v1617 = vunpack.c.l.b16 %v778
    %v1618 = vunpack.c.l.b16 %v779
    %v1619 = vunpack.c.l.b16 %v780
    %v1620 = vunpack.c.l.b16 %v781
    %v1621 = vunpack.c.l.b16 %v782
    %v1622 = vunpack.c.l.b16 %v783
    %v1623 = vunpack.c.l.b16 %v784
    %v1624 = vunpack.c.l.b16 %v785
    %v1625 = vunpack.c.l.b16 %v786
    %v1626 = vunpack.c.l.b16 %v787
    %v1627 = vunpack.c.l.b16 %v788
    %v1628 = vunpack.c.l.b16 %v789
    %v1629 = vunpack.c.l.b16 %v790
    %v1630 = vunpack.c.l.b16 %v791
    %v1631 = vunpack.c.l.b16 %v792
    %v1632 = vunpack.c.l.b16 %v793
    %v1633 = vunpack.c.l.b16 %v794
    %v1634 = vunpack.c.l.b16 %v795
    %v1635 = vunpack.c.l.b16 %v796
    %v1636 = vunpack.c.l.b16 %v797
    %v1637 = vunpack.c.l.b16 %v798
    %v1638 = vunpack.c.l.b16 %v799
    %v1639 = vunpack.c.l.b16 %v800
    %v1640 = vunpack.c.l.b16 %v801
    %v1641 = vunpack.c.l.b16 %v802
    %v1642 = vunpack.c.l.b16 %v803
    %v1643 = vunpack.c.l.b16 %v804
    %v1644 = vunpack.c.l.b16 %v805
    %v1645 = vunpack.c.l.b16 %v806
    %v1646 = vunpack.c.l.b16 %v807
    %v1647 = vunpack.c.l.b16 %v808
    %v1648 = vunpack.c.l.b16 %v809
    %v1649 = vunpack.c.l.b16 %v810
    %v1650 = vunpack.c.l.b16 %v811
    %v1651 = vunpack.c.l.b16 %v812
    %v1652 = vunpack.c.l.b16 %v813
    %v1653 = vunpack.c.l.b16 %v814
    %v1654 = vunpack.c.l.b16 %v815
    %v1655 = vunpack.c.l.b16 %v816
    %v1656 = vunpack.c.l.b16 %v817
    %v1657 = vunpack.c.l.b16 %v818
    %v1658 = vunpack.c.l.b16 %v819
    %v1659 = vunpack.c.l.b16 %v820
    %v1660 = vunpack.c.l.b16 %v821
    %v1661 = vunpack.c.l.b16 %v822
    %v1662 = vunpack.c.l.b16 %v823
    %v1663 = vunpack.c.l.b16 %v824
    %v1664 = vunpack.c.l.b16 %v825
    %v1665 = vunpack.c.l.b16 %v826
    %v1666 = vunpack.c.l.b16 %v827
    %v1667 = vunpack.c.l.b16 %v828
    %v1668 = vunpack.c.l.b16 %v829
    %v1669 = vunpack.c.l.b16 %v830
    %v1670 = vunpack.c.l.b16 %v831
    %v1671 = vunpack.c.l.b16 %v832
    %v1672 = vunpack.c.l.b16 %v833
    %v1673 = vunpack.c.l.b16 %v834
    %v1674 = vunpack.c.l.b16 %v835
    %v1675 = vunpack.c.l.b16 %v836
    %v1676 = vunpack.c.l.b16 %v837
    %v1677 = vunpack.c.l.b16 %v838
    %v1678 = vunpack.c.l.b16 %v839
    %v1679 = vunpack.c.l.b16 %v840
    %v1680 = vunpack.c.l.b16 %v841
    %v1681 = vunpack.c.l.b16 %v842
    %v1682 = vunpack.c.l.b16 %v843
    %v1683 = vunpack.c.l.b16 %v844
    %v1684 = vunpack.c.l.b16 %v845
    %v1685 = vunpack.c.l.b16 %v846
    %v1686 = vunpack.c.l.b16 %v847
    %v1687 = vunpack.c.l.b16 %v848
    %v1688 = vunpack.c.l.b16 %v849
    %v1689 = vunpack.c.l.b16 %v850
    %v1690 = vunpack.c.l.b16 %v851
    %v1691 = vunpack.c.l.b16 %v852
    %v1692 = vunpack.c.l.b16 %v853
    %v1693 = vunpack.c.l.b16 %v854
    %v1694 = vunpack.c.l.b16 %v855
    %v1695 = vunpack.c.l.b16 %v856
    %v1696 = vunpack.c.l.b16 %v857
    %v1697 = vunpack.c.l.b16 %v858
    %v1698 = vunpack.c.l.b16 %v859
    %v1699 = vunpack.c.l.b16 %v860
    %v1700 = vunpack.c.l.b16 %v861
    %v1701 = vunpack.c.l.b16 %v862
    %v1702 = vunpack.c.l.b16 %v863
    %v1703 = vunpack.c.l.b16 %v864
    %v1704 = vunpack.c.l.b16 %v865
    %v1705 = vunpack.c.l.b16 %v866
    %v1706 = vunpack.c.l.b16 %v867
    %v1707 = vunpack.c.l.b16 %v868
    %v1708 = vunpack.c.l.b16 %v869
    %v1709 = vunpack.c.l.b16 %v870
    %v1710 = vunpack.c.l.b16 %v871
    %v1711 = vunpack.c.l.b16 %v872
    %v1712 = vunpack.c.l.b16 %v873
    %v1713 = vunpack.c.l.b16 %v874
    %v1714 = vunpack.c.l.b16 %v875
    %v1715 = vunpack.c.l.b16 %v876
    %v1716 = vunpack.c.l.b16 %v877
    %v1717 = vunpack.c.l.b16 %v878
    %v1718 = vunpack.c.l.b16 %v879
    %v1719 = vunpack.c.l.b16 %v880
    %v1720 = vunpack.c.l.b16 %v881
    %v1721 = vunpack.c.l.b16 %v882
    %v1722 = vunpack.c.l.b16 %v883
    %v1723 = vunpack.c.l.b16 %v884
    %v1724 = vunpack.c.l.b16 %v885
    %v1725 = vunpack.c.l.b16 %v886
    %v1726 = vunpack.c.l.b16 %v887
    %v1727 = vunpack.c.l.b16 %v888
    %v1728 = vunpack.c.l.b16 %v889
    %v1729 = vunpack.c.l.b16 %v890
    %v1730 = vunpack.c.l.b16 %v891
    %v1731 = vunpack.c.l.b16 %v892
    %v1732 = vunpack.c.l.b16 %v893
    %v1733 = vunpack.c.l.b16 %v894
    %v1734 = vunpack.c.l.b16 %v895
    %v1735 = vunpack.c.l.b16 %v896
    %v1736 = vunpack.c.l.b16 %v897
    %v1737 = vunpack.c.l.b16 %v898
    %v1738 = vunpack.c.l.b16 %v899
    %v1739 = vunpack.c.l.b16 %v900
    %v1740 = vunpack.c.l.b16 %v901
    %v1741 = vunpack.c.l.b16 %v902
    %v1742 = vunpack.c.l.b16 %v903
    %v1743 = vunpack.c.l.b16 %v904
    %v1744 = vunpack.c.l.b16 %v905
    %v1745 = vunpack.c.l.b16 %v906
    %v1746 = vunpack.c.l.b16 %v907
    %v1747 = vunpack.c.l.b16 %v908
    %v1748 = vunpack.c.l.b16 %v909
    %v1749 = vunpack.c.l.b16 %v910
    %v1750 = vunpack.c.l.b16 %v911
    %v1751 = vunpack.c.l.b16 %v912
    %v1752 = vunpack.c.l.b16 %v913
    %v1753 = vunpack.c.l.b16 %v914
    %v1754 = vunpack.c.l.b16 %v915
    %v1755 = vunpack.c.l.b16 %v916
    %v1756 = vunpack.c.l.b16 %v917
    %v1757 = vunpack.c.l.b16 %v918
    %v1758 = vunpack.c.l.b16 %v919
    %v1759 = vunpack.c.l.b16 %v920
    %v1760 = vunpack.c.l.b16 %v921
    %v1761 = vunpack.c.l.b16 %v922
    %v1762 = vunpack.c.l.b16 %v923
    %v1763 = vunpack.c.l.b16 %v924
    %v1764 = vunpack.c.l.b16 %v925
    %v1765 = vunpack.c.l.b16 %v926
    %v1766 = vunpack.c.l.b16 %v927
    %v1767 = vunpack.c.l.b16 %v928
    %v1768 = vunpack.c.l.b16 %v929
    %v1769 = vunpack.c.l.b16 %v930
    %v1770 = vunpack.c.l.b16 %v931
    %v1771 = vunpack.c.l.b16 %v932
    %v1772 = vunpack.c.l.b16 %v933
    %v1773 = vunpack.c.l.b16 %v934
    %v1774 = vunpack.c.l.b16 %v935
    %v1775 = vunpack.c.l.b16 %v936
    %v1776 = vunpack.c.l.b16 %v937
    %v1777 = vunpack.c.l.b16 %v938
    %v1778 = vunpack.c.l.b16 %v939
    %v1779 = vunpack.c.l.b16 %v940
    %v1780 = vunpack.c.l.b16 %v941
    %v1781 = vunpack.c.l.b16 %v942
    %v1782 = vunpack.c.l.b16 %v943
    %v1783 = vunpack.c.l.b16 %v944
    %v1784 = vunpack.c.l.b16 %v945
    %v1785 = vunpack.c.l.b16 %v946
    %v1786 = vunpack.c.l.b16 %v947
    %v1787 = vunpack.c.l.b16 %v948
    %v1788 = vunpack.c.l.b16 %v949
    %v1789 = vunpack.c.l.b16 %v950
    %v1790 = vunpack.c.l.b16 %v951
    %v1791 = vunpack.c.l.b16 %v952
    %v1792 = vunpack.c.l.b16 %v953
    %v1793 = vunpack.c.l.b16 %v954
    %v1794 = vunpack.c.l.b16 %v955
    %v1795 = vunpack.c.l.b16 %v956
    %v1796 = vunpack.c.l.b16 %v957
    %v1797 = vunpack.c.l.b16 %v958
    %v1798 = vunpack.c.l.b16 %v959
    %v1799 = vunpack.c.l.b16 %v960
    %v1800 = vunpack.c.l.b16 %v961
    %v1801 = vunpack.c.l.b16 %v962
    %v1802 = vunpack.c.l.b16 %v963
    %v1803 = vunpack.c.l.b16 %v964
    %v1804 = vunpack.c.l.b16 %v965
    %v1805 = vunpack.c.l.b16 %v966
    %v1806 = vunpack.c.l.b16 %v967
    %v1807 = vunpack.c.l.b16 %v968
    %v1808 = vunpack.c.l.b16 %v969
    %v1809 = vunpack.c.l.b16 %v970
    %v1810 = vunpack.c.l.b16 %v971
    %v1811 = vunpack.c.l.b16 %v972
    %v1812 = vunpack.c.l.b16 %v973
    %v1813 = vunpack.c.l.b16 %v974
    %v1814 = vunpack.c.l.b16 %v975
    %v1815 = vunpack.c.l.b16 %v976
    %v1816 = vunpack.c.l.b16 %v977
    %v1817 = vunpack.c.l.b16 %v978
    %v1818 = vunpack.c.l.b16 %v979
    %v1819 = vunpack.c.l.b16 %v980
    %v1820 = vunpack.c.l.b16 %v981
    %v1821 = vunpack.c.l.b16 %v982
    %v1822 = vunpack.c.l.b16 %v983
    %v1823 = vunpack.c.l.b16 %v984
    %v1824 = vunpack.c.l.b16 %v985
    %v1825 = vunpack.c.l.b16 %v986
    %v1826 = vunpack.c.l.b16 %v987
    %v1827 = vunpack.c.l.b16 %v988
    %v1828 = vunpack.c.l.b16 %v989
    %v1829 = vunpack.c.l.b16 %v990
    %v1830 = vunpack.c.l.b16 %v991
    %v1831 = vunpack.c.l.b16 %v992
    %v1832 = vunpack.c.l.b16 %v993
    %v1833 = vunpack.c.l.b16 %v994
    %v1834 = vunpack.c.l.b16 %v995
    %v1835 = vunpack.c.l.b16 %v996
    %v1836 = vunpack.c.l.b16 %v997
    %v1837 = vunpack.c.l.b16 %v998
    %v1838 = vunpack.c.l.b16 %v999
    %v1839 = vunpack.c.l.b16 %v1000
    %v1840 = vunpack.c.l.b16 %v1001
    %v1841 = vunpack.c.l.b16 %v1002
    %v1842 = vunpack.c.l.b16 %v1003
    %v1843 = vunpack.c.l.b16 %v1004
    %v1844 = vunpack.c.l.b16 %v1005
    %v1845 = vunpack.c.l.b16 %v1006
    %v1846 = vunpack.c.l.b16 %v1007
    %v1847 = vunpack.c.l.b16 %v1008
    %v1848 = vunpack.c.l.b16 %v1009
    %v1849 = vunpack.c.l.b16 %v1010
    %v1850 = vunpack.c.l.b16 %v1011
    %v1851 = vunpack.c.l.b16 %v1012
    %v1852 = vunpack.c.l.b16 %v1013
    %v1853 = vunpack.c.l.b16 %v1014
    %v1854 = vunpack.c.l.b16 %v1015
    %v1855 = vunpack.c.l.b16 %v1016
    %v1856 = vunpack.c.l.b16 %v1017
    %v1857 = vunpack.c.l.b16 %v1018
    %v1858 = vunpack.c.l.b16 %v1019
    %v1859 = vunpack.c.l.b16 %v1020
    %v1860 = vunpack.c.l.b16 %v1021
    %v1861 = vunpack.c.l.b16 %v1022
    %v1862 = vunpack.c.l.b16 %v1023
    %v1863 = vunpack.c.l.b16 %v1024
    %v1864 = vunpack.c.l.b16 %v1025
    %v1865 = vunpack.c.l.b16 %v1026
    %v1866 = vunpack.c.l.b16 %v1027
    %v1867 = vunpack.c.l.b16 %v1028
    %v1868 = vunpack.c.l.b16 %v1029
    %v1869 = vunpack.c.l.b16 %v1030
    %v1870 = vunpack.c.l.b16 %v1031
    %v1871 = vunpack.c.l.b16 %v1032
    %v1872 = vunpack.c.l.b16 %v1033
    %v1873 = vpack.c.b16 %v1458, %v1457
    %v1874 = vpack.c.b16 %v1460, %v1459
    %v1875 = vpack.c.b16 %v1462, %v1461
    %v1876 = vpack.c.b16 %v1464, %v1463
    %v1877 = vpack.c.b16 %v1466, %v1465
    %v1878 = vpack.c.b16 %v1468, %v1467
    %v1879 = vpack.c.b16 %v1470, %v1469
    %v1880 = vpack.c.b16 %v1472, %v1471
    %v1881 = vpack.c.b16 %v1474, %v1473
    %v1882 = vpack.c.b16 %v1476, %v1475
    %v1883 = vpack.c.b16 %v1478, %v1477
    %v1884 = vpack.c.b16 %v1480, %v1479
    %v1885 = vpack.c.b16 %v1482, %v1481
    %v1886 = vpack.c.b16 %v1484, %v1483
    %v1887 = vpack.c.b16 %v1486, %v1485
    %v1888 = vpack.c.b16 %v1488, %v1487
    %v1889 = vpack.c.b16 %v1490, %v1489
    %v1890 = vpack.c.b16 %v1492, %v1491
    %v1891 = vpack.c.b16 %v1494, %v1493
    %v1892 = vpack.c.b16 %v1496, %v1495
    %v1893 = vpack.c.b16 %v1498, %v1497
    %v1894 = vpack.c.b16 %v1500, %v1499
    %v1895 = vpack.c.b16 %v1502, %v1501
    %v1896 = vpack.c.b16 %v1504, %v1503
    %v1897 = vpack.c.b16 %v1506, %v1505
    %v1898 = vpack.c.b16 %v1508, %v1507
    %v1899 = vpack.c.b16 %v1510, %v1509
    %v1900 = vpack.c.b16 %v1512, %v1511
    %v1901 = vpack.c.b16 %v1514, %v1513
    %v1902 = vpack.c.b16 %v1516, %v1515
    %v1903 = vpack.c.b16 %v1518, %v1517
    %v1904 = vpack.c.b16 %v1520, %v1519
    %v1905 = vpack.c.b16 %v1522, %v1521
    %v1906 = vpack.c.b16 %v1524, %v1523
    %v1907 = vpack.c.b16 %v1526, %v1525
    %v1908 = vpack.c.b16 %v1528, %v1527
    %v1909 = vpack.c.b16 %v1530, %v1529
    %v1910 = vpack.c.b16 %v1532, %v1531
    %v1911 = vpack.c.b16 %v1534, %v1533
    %v1912 = vpack.c.b16 %v1536, %v1535
    %v1913 = vpack.c.b16 %v1538, %v1537
    %v1914 = vpack.c.b16 %v1540, %v1539
    %v1915 = vpack.c.b16 %v1542, %v1541
    %v1916 = vpack.c.b16 %v1544, %v1543
    %v1917 = vpack.c.b16 %v1546, %v1545
    %v1918 = vpack.c.b16 %v1548, %v1547
    %v1919 = vpack.c.b16 %v1550, %v1549
    %v1920 = vpack.c.b16 %v1552, %v1551
    %v1921 = vpack.c.b16 %v1554, %v1553
    %v1922 = vpack.c.b16 %v1556, %v1555
    %v1923 = vpack.c.b16 %v1558, %v1557
    %v1924 = vpack.c.b16 %v1560, %v1559
    %v1925 = vpack.c.b16 %v1562, %v1561
    %v1926 = vpack.c.b16 %v1564, %v1563
    %v1927 = vpack.c.b16 %v1566, %v1565
    %v1928 = vpack.c.b16 %v1568, %v1567
    %v1929 = vpack.c.b16 %v1570, %v1569
    %v1930 = vpack.c.b16 %v1572, %v1571
    %v1931 = vpack.c.b16 %v1574, %v1573
    %v1932 = vpack.c.b16 %v1576, %v1575
    %v1933 = vpack.c.b16 %v1578, %v1577
    %v1934 = vpack.c.b16 %v1580, %v1579
    %v1935 = vpack.c.b16 %v1582, %v1581
    %v1936 = vpack.c.b16 %v1584, %v1583
    %v1937 = vpack.c.b16 %v1586, %v1585
    %v1938 = vpack.c.b16 %v1588, %v1587
    %v1939 = vpack.c.b16 %v1590, %v1589
    %v1940 = vpack.c.b16 %v1592, %v1591
    %v1941 = vpack.c.b16 %v1594, %v1593
    %v1942 = vpack.c.b16 %v1596, %v1595
    %v1943 = vpack.c.b16 %v1598, %v1597
    %v1944 = vpack.c.b16 %v1600, %v1599
    %v1945 = vpack.c.b16 %v1602, %v1601
    %v1946 = vpack.c.b16 %v1604, %v1603
    %v1947 = vpack.c.b16 %v1606, %v1605
    %v1948 = vpack.c.b16 %v1608, %v1607
    %v1949 = vpack.c.b16 %v1610, %v1609
    %v1950 = vpack.c.b16 %v1612, %v1611
    %v1951 = vpack.c.b16 %v1614, %v1613
    %v1952 = vpack.c.b16 %v1616, %v1615
    %v1953 = vpack.c.b16 %v1618, %v1617
    %v1954 = vpack.c.b16 %v1620, %v1619
    %v1955 = vpack.c.b16 %v1622, %v1621
    %v1956 = vpack.c.b16 %v1624, %v1623
    %v1957 = vpack.c.b16 %v1626, %v1625
    %v1958 = vpack.c.b16 %v1628, %v1627
    %v1959 = vpack.c.b16 %v1630, %v1629
    %v1960 = vpack.c.b16 %v1632, %v1631
    %v1961 = vpack.c.b16 %v1634, %v1633
    %v1962 = vpack.c.b16 %v1636, %v1635
    %v1963 = vpack.c.b16 %v1638, %v1637
    %v1964 = vpack.c.b16 %v1640, %v1639
    %v1965 = vpack.c.b16 %v1642, %v1641
    %v1966 = vpack.c.b16 %v1644, %v1643
    %v1967 = vpack.c.b16 %v1646, %v1645
    %v1968 = vpack.c.b16 %v1648, %v1647
    %v1969 = vpack.c.b16 %v1650, %v1649
    %v1970 = vpack.c.b16 %v1652, %v1651
    %v1971 = vpack.c.b16 %v1654, %v1653
    %v1972 = vpack.c.b16 %v1656, %v1655
    %v1973 = vpack.c.b16 %v1658, %v1657
    %v1974 = vpack.c.b16 %v1660, %v1659
    %v1975 = vpack.c.b16 %v1662, %v1661
    %v1976 = vpack.c.b16 %v1664, %v1663
    %v1977 = vpack.c.b16 %v1666, %v1665
    %v1978 = vpack.c.b16 %v1668, %v1667
    %v1979 = vpack.c.b16 %v1670, %v1669
    %v1980 = vpack.c.b16 %v1672, %v1671
    %v1981 = vpack.c.b16 %v1674, %v1673
    %v1982 = vpack.c.b16 %v1676, %v1675
    %v1983 = vpack.c.b16 %v1678, %v1677
    %v1984 = vpack.c.b16 %v1680, %v1679
    %v1985 = vpack.c.b16 %v1682, %v1681
    %v1986 = vpack.c.b16 %v1684, %v1683
    %v1987 = vpack.c.b16 %v1686, %v1685
    %v1988 = vpack.c.b16 %v1688, %v1687
    %v1989 = vpack.c.b16 %v1690, %v1689
    %v1990 = vpack.c.b16 %v1692, %v1691
    %v1991 = vpack.c.b16 %v1694, %v1693
    %v1992 = vpack.c.b16 %v1696, %v1695
    %v1993 = vpack.c.b16 %v1698, %v1697
    %v1994 = vpack.c.b16 %v1700, %v1699
    %v1995 = vpack.c.b16 %v1702, %v1701
    %v1996 = vpack.c.b16 %v1704, %v1703
    %v1997 = vpack.c.b16 %v1706, %v1705
    %v1998 = vpack.c.b16 %v1708, %v1707
    %v1999 = vpack.c.b16 %v1710, %v1709
    %v2000 = vpack.c.b16 %v1712, %v1711
    %v2001 = vpack.c.b16 %v1714, %v1713
    %v2002 = vpack.c.b16 %v1716, %v1715
    %v2003 = vpack.c.b16 %v1718, %v1717
    %v2004 = vpack.c.b16 %v1720, %v1719
    %v2005 = vpack.c.b16 %v1722, %v1721
    %v2006 = vpack.c.b16 %v1724, %v1723
    %v2007 = vpack.c.b16 %v1726, %v1725
    %v2008 = vpack.c.b16 %v1728, %v1727
    %v2009 = vpack.c.b16 %v1730, %v1729
    %v2010 = vpack.c.b16 %v1732, %v1731
    %v2011 = vpack.c.b16 %v1734, %v1733
    %v2012 = vpack.c.b16 %v1736, %v1735
    %v2013 = vpack.c.b16 %v1738, %v1737
    %v2014 = vpack.c.b16 %v1740, %v1739
    %v2015 = vpack.c.b16 %v1742, %v1741
    %v2016 = vpack.c.b16 %v1744, %v1743
    %v2017 = vpack.c.b16 %v1746, %v1745
    %v2018 = vpack.c.b16 %v1748, %v1747
    %v2019 = vpack.c.b16 %v1750, %v1749
    %v2020 = vpack.c.b16 %v1752, %v1751
    %v2021 = vpack.c.b16 %v1754, %v1753
    %v2022 = vpack.c.b16 %v1756, %v1755
    %v2023 = vpack.c.b16 %v1758, %v1757
    %v2024 = vpack.c.b16 %v1760, %v1759
    %v2025 = vpack.c.b16 %v1762, %v1761
    %v2026 = vpack.c.b16 %v1764, %v1763
    %v2027 = vpack.c.b16 %v1766, %v1765
    %v2028 = vpack.c.b16 %v1768, %v1767
    %v2029 = vpack.c.b16 %v1770, %v1769
    %v2030 = vpack.c.b16 %v1772, %v1771
    %v2031 = vpack.c.b16 %v1774, %v1773
    %v2032 = vpack.c.b16 %v1776, %v1775
    %v2033 = vpack.c.b16 %v1778, %v1777
    %v2034 = vpack.c.b16 %v1780, %v1779
    %v2035 = vpack.c.b16 %v1782, %v1781
    %v2036 = vpack.c.b16 %v1784, %v1783
    %v2037 = vpack.c.b16 %v1786, %v1785
    %v2038 = vpack.c.b16 %v1788, %v1787
    %v2039 = vpack.c.b16 %v1790, %v1789
    %v2040 = vpack.c.b16 %v1792, %v1791
    %v2041 = vpack.c.b16 %v1794, %v1793
    %v2042 = vpack.c.b16 %v1796, %v1795
    %v2043 = vpack.c.b16 %v1798, %v1797
    %v2044 = vpack.c.b16 %v1800, %v1799
    %v2045 = vpack.c.b16 %v1802, %v1801
    %v2046 = vpack.c.b16 %v1804, %v1803
    %v2047 = vpack.c.b16 %v1806, %v1805
    %v2048 = vpack.c.b16 %v1808, %v1807
    %v2049 = vpack.c.b16 %v1810, %v1809
    %v2050 = vpack.c.b16 %v1812, %v1811
    %v2051 = vpack.c.b16 %v1814, %v1813
    %v2052 = vpack.c.b16 %v1816, %v1815
    %v2053 = vpack.c.b16 %v1818, %v1817
    %v2054 = vpack.c.b16 %v1820, %v1819
    %v2055 = vpack.c.b16 %v1822, %v1821
    %v2056 = vpack.c.b16 %v1824, %v1823
    %v2057 = vpack.c.b16 %v1826, %v1825
    %v2058 = vpack.c.b16 %v1828, %v1827
    %v2059 = vpack.c.b16 %v1830, %v1829
    %v2060 = vpack.c.b16 %v1832, %v1831
    %v2061 = vpack.c.b16 %v1834, %v1833
    %v2062 = vpack.c.b16 %v1836, %v1835
    %v2063 = vpack.c.b16 %v1838, %v1837
    %v2064 = vpack.c.b16 %v1840, %v1839
    %v2065 = vpack.c.b16 %v1842, %v1841
    %v2066 = vpack.c.b16 %v1844, %v1843
    %v2067 = vpack.c.b16 %v1846, %v1845
    %v2068 = vpack.c.b16 %v1848, %v1847
    %v2069 = vpack.c.b16 %v1850, %v1849
    %v2070 = vpack.c.b16 %v1852, %v1851
    %v2071 = vpack.c.b16 %v1854, %v1853
    %v2072 = vpack.c.b16 %v1856, %v1855
    %v2073 = vpack.c.b16 %v1858, %v1857
    %v2074 = vpack.c.b16 %v1860, %v1859
    %v2075 = vpack.c.b16 %v1862, %v1861
    %v2076 = vpack.c.b16 %v1864, %v1863
    %v2077 = vpack.c.b16 %v1866, %v1865
    %v2078 = vpack.c.b16 %v1868, %v1867
    %v2079 = vpack.c.b16 %v1870, %v1869
    %v2080 = vpack.c.b16 %v1872, %v1871
    %2289 = vmatprep.subr.bf16.mxu0 0
    %2290 = vmatpush1.bf16.msra.mxu0 %v1873
    %2291 = vmatprep.subr.bf16.mxu0 0
    %2292 = vmatpush1.bf16.msra.mxu0 %v1874
    %2293 = vmatprep.subr.bf16.mxu0 0
    %2294 = vmatpush1.bf16.msra.mxu0 %v1875
    %2295 = vmatprep.subr.bf16.mxu0 0
    %2296 = vmatpush1.bf16.msra.mxu0 %v1876
    %2297 = vmatprep.subr.bf16.mxu0 0
    %2298 = vmatpush1.bf16.msra.mxu0 %v1877
    %2299 = vmatprep.subr.bf16.mxu0 0
    %2300 = vmatpush1.bf16.msra.mxu0 %v1878
    %2301 = vmatprep.subr.bf16.mxu0 0
    %2302 = vmatpush1.bf16.msra.mxu0 %v1879
    %2303 = vmatprep.subr.bf16.mxu0 0
    %2304 = vmatpush1.bf16.msra.mxu0 %v1880
    %2305 = vmatprep.subr.bf16.mxu0 0
    %2306 = vmatpush1.bf16.msra.mxu0 %v1881
    %2307 = vmatprep.subr.bf16.mxu0 0
    %2308 = vmatpush1.bf16.msra.mxu0 %v1882
    %2309 = vmatprep.subr.bf16.mxu0 0
    %2310 = vmatpush1.bf16.msra.mxu0 %v1883
    %2311 = vmatprep.subr.bf16.mxu0 0
    %2312 = vmatpush1.bf16.msra.mxu0 %v1884
    %2313 = vmatprep.subr.bf16.mxu0 0
    %2314 = vmatpush1.bf16.msra.mxu0 %v1885
    %2315 = vmatprep.subr.bf16.mxu0 0
    %2316 = vmatpush1.bf16.msra.mxu0 %v1886
    %2317 = vmatprep.subr.bf16.mxu0 0
    %2318 = vmatpush1.bf16.msra.mxu0 %v1887
    %2319 = vmatprep.subr.bf16.mxu0 0
    %2320 = vmatpush1.bf16.msra.mxu0 %v1888
    %2321 = vmatprep.mubr.bf16.mxu0 %v593
    %2322 = vmatmul.mubr.bf16.gmra.mrb[0].mxu0 %v108
    %v2323 = vpop.f32.mrb[0].mxu0
    %v2324 = vadd.f32 %v1039, %v2323
    %v2325 = vpop.f32.mrb[0].mxu0
    %v2326 = vpop.f32.mrb[0].mxu0
    %v2327 = vadd.f32 %v1039, %v2326
    %v2328 = vpop.f32.mrb[0].mxu0
    %2329 = vdwg.mxu0
    %2330 = vmatprep.subr.bf16.mxu0 0
    %2331 = vmatpush1.bf16.msra.mxu0 %v1889
    %2332 = vmatprep.subr.bf16.mxu0 0
    %2333 = vmatpush1.bf16.msra.mxu0 %v1890
    %2334 = vmatprep.subr.bf16.mxu0 0
    %2335 = vmatpush1.bf16.msra.mxu0 %v1891
    %2336 = vmatprep.subr.bf16.mxu0 0
    %2337 = vmatpush1.bf16.msra.mxu0 %v1892
    %2338 = vmatprep.subr.bf16.mxu0 0
    %2339 = vmatpush1.bf16.msra.mxu0 %v1893
    %2340 = vmatprep.subr.bf16.mxu0 0
    %2341 = vmatpush1.bf16.msra.mxu0 %v1894
    %2342 = vmatprep.subr.bf16.mxu0 0
    %2343 = vmatpush1.bf16.msra.mxu0 %v1895
    %2344 = vmatprep.subr.bf16.mxu0 0
    %2345 = vmatpush1.bf16.msra.mxu0 %v1896
    %2346 = vmatprep.subr.bf16.mxu0 0
    %2347 = vmatpush1.bf16.msra.mxu0 %v1897
    %2348 = vmatprep.subr.bf16.mxu0 0
    %2349 = vmatpush1.bf16.msra.mxu0 %v1898
    %2350 = vmatprep.subr.bf16.mxu0 0
    %2351 = vmatpush1.bf16.msra.mxu0 %v1899
    %2352 = vmatprep.subr.bf16.mxu0 0
    %2353 = vmatpush1.bf16.msra.mxu0 %v1900
    %2354 = vmatprep.subr.bf16.mxu0 0
    %2355 = vmatpush1.bf16.msra.mxu0 %v1901
    %2356 = vmatprep.subr.bf16.mxu0 0
    %2357 = vmatpush1.bf16.msra.mxu0 %v1902
    %2358 = vmatprep.subr.bf16.mxu0 0
    %2359 = vmatpush1.bf16.msra.mxu0 %v1903
    %2360 = vmatprep.subr.bf16.mxu0 0
    %2361 = vmatpush1.bf16.msra.mxu0 %v1904
    %2362 = vmatprep.mubr.bf16.mxu0 %v595
    %2363 = vmatmul.mubr.bf16.gmra.mrb[0].mxu0 %v594
    %v2364 = vpop.f32.mrb[0].mxu0
    %v2365 = vadd.f32 %v2324, %v2364
    %v2366 = vpop.f32.mrb[0].mxu0
    %v2367 = vpop.f32.mrb[0].mxu0
    %v2368 = vadd.f32 %v2327, %v2367
    %v2369 = vpop.f32.mrb[0].mxu0
    %2370 = vdwg.mxu0
    %2371 = vmatprep.subr.bf16.mxu0 0
    %2372 = vmatpush1.bf16.msra.mxu0 %v1905
    %2373 = vmatprep.subr.bf16.mxu0 0
    %2374 = vmatpush1.bf16.msra.mxu0 %v1906
    %2375 = vmatprep.subr.bf16.mxu0 0
    %2376 = vmatpush1.bf16.msra.mxu0 %v1907
    %2377 = vmatprep.subr.bf16.mxu0 0
    %2378 = vmatpush1.bf16.msra.mxu0 %v1908
    %2379 = vmatprep.subr.bf16.mxu0 0
    %2380 = vmatpush1.bf16.msra.mxu0 %v1909
    %2381 = vmatprep.subr.bf16.mxu0 0
    %2382 = vmatpush1.bf16.msra.mxu0 %v1910
    %2383 = vmatprep.subr.bf16.mxu0 0
    %2384 = vmatpush1.bf16.msra.mxu0 %v1911
    %2385 = vmatprep.subr.bf16.mxu0 0
    %2386 = vmatpush1.bf16.msra.mxu0 %v1912
    %2387 = vmatprep.subr.bf16.mxu0 0
    %2388 = vmatpush1.bf16.msra.mxu0 %v1913
    %2389 = vmatprep.subr.bf16.mxu0 0
    %2390 = vmatpush1.bf16.msra.mxu0 %v1914
    %2391 = vmatprep.subr.bf16.mxu0 0
    %2392 = vmatpush1.bf16.msra.mxu0 %v1915
    %2393 = vmatprep.subr.bf16.mxu0 0
    %2394 = vmatpush1.bf16.msra.mxu0 %v1916
    %2395 = vmatprep.subr.bf16.mxu0 0
    %2396 = vmatpush1.bf16.msra.mxu0 %v1917
    %2397 = vmatprep.subr.bf16.mxu0 0
    %2398 = vmatpush1.bf16.msra.mxu0 %v1918
    %2399 = vmatprep.subr.bf16.mxu0 0
    %2400 = vmatpush1.bf16.msra.mxu0 %v1919
    %2401 = vmatprep.subr.bf16.mxu0 0
    %2402 = vmatpush1.bf16.msra.mxu0 %v1920
    %2403 = vmatprep.mubr.bf16.mxu0 %v597
    %2404 = vmatmul.mubr.bf16.gmra.mrb[0].mxu0 %v596
    %v2405 = vpop.f32.mrb[0].mxu0
    %v2406 = vadd.f32 %v2365, %v2405
    %v2407 = vpop.f32.mrb[0].mxu0
    %v2408 = vpop.f32.mrb[0].mxu0
    %v2409 = vadd.f32 %v2368, %v2408
    %v2410 = vpop.f32.mrb[0].mxu0
    %2411 = vdwg.mxu0
    %2412 = vmatprep.subr.bf16.mxu0 0
    %2413 = vmatpush1.bf16.msra.mxu0 %v1921
    %2414 = vmatprep.subr.bf16.mxu0 0
    %2415 = vmatpush1.bf16.msra.mxu0 %v1922
    %2416 = vmatprep.subr.bf16.mxu0 0
    %2417 = vmatpush1.bf16.msra.mxu0 %v1923
    %2418 = vmatprep.subr.bf16.mxu0 0
    %2419 = vmatpush1.bf16.msra.mxu0 %v1924
    %2420 = vmatprep.subr.bf16.mxu0 0
    %2421 = vmatpush1.bf16.msra.mxu0 %v1925
    %2422 = vmatprep.subr.bf16.mxu0 0
    %2423 = vmatpush1.bf16.msra.mxu0 %v1926
    %2424 = vmatprep.subr.bf16.mxu0 0
    %2425 = vmatpush1.bf16.msra.mxu0 %v1927
    %2426 = vmatprep.subr.bf16.mxu0 0
    %2427 = vmatpush1.bf16.msra.mxu0 %v1928
    %2428 = vmatprep.subr.bf16.mxu0 0
    %2429 = vmatpush1.bf16.msra.mxu0 %v1929
    %2430 = vmatprep.subr.bf16.mxu0 0
    %2431 = vmatpush1.bf16.msra.mxu0 %v1930
    %2432 = vmatprep.subr.bf16.mxu0 0
    %2433 = vmatpush1.bf16.msra.mxu0 %v1931
    %2434 = vmatprep.subr.bf16.mxu0 0
    %2435 = vmatpush1.bf16.msra.mxu0 %v1932
    %2436 = vmatprep.subr.bf16.mxu0 0
    %2437 = vmatpush1.bf16.msra.mxu0 %v1933
    %2438 = vmatprep.subr.bf16.mxu0 0
    %2439 = vmatpush1.bf16.msra.mxu0 %v1934
    %2440 = vmatprep.subr.bf16.mxu0 0
    %2441 = vmatpush1.bf16.msra.mxu0 %v1935
    %2442 = vmatprep.subr.bf16.mxu0 0
    %2443 = vmatpush1.bf16.msra.mxu0 %v1936
    %2444 = vmatprep.mubr.bf16.mxu0 %v599
    %2445 = vmatmul.mubr.bf16.gmra.mrb[0].mxu0 %v598
    %v2446 = vpop.f32.mrb[0].mxu0
    %v2447 = vadd.f32 %v2406, %v2446
    %v2448 = vpop.f32.mrb[0].mxu0
    %v2449 = vpop.f32.mrb[0].mxu0
    %v2450 = vadd.f32 %v2409, %v2449
    %v2451 = vpop.f32.mrb[0].mxu0
    %2452 = vdwg.mxu0
    %2453 = vmatprep.subr.bf16.mxu0 0
    %2454 = vmatpush1.bf16.msra.mxu0 %v1937
    %2455 = vmatprep.subr.bf16.mxu0 0
    %2456 = vmatpush1.bf16.msra.mxu0 %v1938
    %2457 = vmatprep.subr.bf16.mxu0 0
    %2458 = vmatpush1.bf16.msra.mxu0 %v1939
    %2459 = vmatprep.subr.bf16.mxu0 0
    %2460 = vmatpush1.bf16.msra.mxu0 %v1940
    %2461 = vmatprep.subr.bf16.mxu0 0
    %2462 = vmatpush1.bf16.msra.mxu0 %v1941
    %2463 = vmatprep.subr.bf16.mxu0 0
    %2464 = vmatpush1.bf16.msra.mxu0 %v1942
    %2465 = vmatprep.subr.bf16.mxu0 0
    %2466 = vmatpush1.bf16.msra.mxu0 %v1943
    %2467 = vmatprep.subr.bf16.mxu0 0
    %2468 = vmatpush1.bf16.msra.mxu0 %v1944
    %2469 = vmatprep.subr.bf16.mxu0 0
    %2470 = vmatpush1.bf16.msra.mxu0 %v1945
    %2471 = vmatprep.subr.bf16.mxu0 0
    %2472 = vmatpush1.bf16.msra.mxu0 %v1946
    %2473 = vmatprep.subr.bf16.mxu0 0
    %2474 = vmatpush1.bf16.msra.mxu0 %v1947
    %2475 = vmatprep.subr.bf16.mxu0 0
    %2476 = vmatpush1.bf16.msra.mxu0 %v1948
    %2477 = vmatprep.subr.bf16.mxu0 0
    %2478 = vmatpush1.bf16.msra.mxu0 %v1949
    %2479 = vmatprep.subr.bf16.mxu0 0
    %2480 = vmatpush1.bf16.msra.mxu0 %v1950
    %2481 = vmatprep.subr.bf16.mxu0 0
    %2482 = vmatpush1.bf16.msra.mxu0 %v1951
    %2483 = vmatprep.subr.bf16.mxu0 0
    %2484 = vmatpush1.bf16.msra.mxu0 %v1952
    %2485 = vmatprep.mubr.bf16.mxu0 %v601
    %2486 = vmatmul.mubr.bf16.gmra.mrb[0].mxu0 %v600
    %v2487 = vpop.f32.mrb[0].mxu0
    %v2488 = vadd.f32 %v2447, %v2487
    %v2489 = vpop.f32.mrb[0].mxu0
    %v2490 = vpop.f32.mrb[0].mxu0
    %v2491 = vadd.f32 %v2450, %v2490
    %v2492 = vpop.f32.mrb[0].mxu0
    %2493 = vdwg.mxu0
    %2494 = vmatprep.subr.bf16.mxu0 0
    %2495 = vmatpush1.bf16.msra.mxu0 %v1953
    %2496 = vmatprep.subr.bf16.mxu0 0
    %2497 = vmatpush1.bf16.msra.mxu0 %v1954
    %2498 = vmatprep.subr.bf16.mxu0 0
    %2499 = vmatpush1.bf16.msra.mxu0 %v1955
    %2500 = vmatprep.subr.bf16.mxu0 0
    %2501 = vmatpush1.bf16.msra.mxu0 %v1956
    %2502 = vmatprep.subr.bf16.mxu0 0
    %2503 = vmatpush1.bf16.msra.mxu0 %v1957
    %2504 = vmatprep.subr.bf16.mxu0 0
    %2505 = vmatpush1.bf16.msra.mxu0 %v1958
    %2506 = vmatprep.subr.bf16.mxu0 0
    %2507 = vmatpush1.bf16.msra.mxu0 %v1959
    %2508 = vmatprep.subr.bf16.mxu0 0
    %2509 = vmatpush1.bf16.msra.mxu0 %v1960
    %2510 = vmatprep.subr.bf16.mxu0 0
    %2511 = vmatpush1.bf16.msra.mxu0 %v1961
    %2512 = vmatprep.subr.bf16.mxu0 0
    %2513 = vmatpush1.bf16.msra.mxu0 %v1962
    %2514 = vmatprep.subr.bf16.mxu0 0
    %2515 = vmatpush1.bf16.msra.mxu0 %v1963
    %2516 = vmatprep.subr.bf16.mxu0 0
    %2517 = vmatpush1.bf16.msra.mxu0 %v1964
    %2518 = vmatprep.subr.bf16.mxu0 0
    %2519 = vmatpush1.bf16.msra.mxu0 %v1965
    %2520 = vmatprep.subr.bf16.mxu0 0
    %2521 = vmatpush1.bf16.msra.mxu0 %v1966
    %2522 = vmatprep.subr.bf16.mxu0 0
    %2523 = vmatpush1.bf16.msra.mxu0 %v1967
    %2524 = vmatprep.subr.bf16.mxu0 0
    %2525 = vmatpush1.bf16.msra.mxu0 %v1968
    %2526 = vmatprep.mubr.bf16.mxu0 %v603
    %2527 = vmatmul.mubr.bf16.gmra.mrb[0].mxu0 %v602
    %v2528 = vpop.f32.mrb[0].mxu0
    %v2529 = vadd.f32 %v2488, %v2528
    %v2530 = vpop.f32.mrb[0].mxu0
    %v2531 = vpop.f32.mrb[0].mxu0
    %v2532 = vadd.f32 %v2491, %v2531
    %v2533 = vpop.f32.mrb[0].mxu0
    %2534 = vdwg.mxu0
    %2535 = vmatprep.subr.bf16.mxu0 0
    %2536 = vmatpush1.bf16.msra.mxu0 %v1969
    %2537 = vmatprep.subr.bf16.mxu0 0
    %2538 = vmatpush1.bf16.msra.mxu0 %v1970
    %2539 = vmatprep.subr.bf16.mxu0 0
    %2540 = vmatpush1.bf16.msra.mxu0 %v1971
    %2541 = vmatprep.subr.bf16.mxu0 0
    %2542 = vmatpush1.bf16.msra.mxu0 %v1972
    %2543 = vmatprep.subr.bf16.mxu0 0
    %2544 = vmatpush1.bf16.msra.mxu0 %v1973
    %2545 = vmatprep.subr.bf16.mxu0 0
    %2546 = vmatpush1.bf16.msra.mxu0 %v1974
    %2547 = vmatprep.subr.bf16.mxu0 0
    %2548 = vmatpush1.bf16.msra.mxu0 %v1975
    %2549 = vmatprep.subr.bf16.mxu0 0
    %2550 = vmatpush1.bf16.msra.mxu0 %v1976
    %2551 = vmatprep.subr.bf16.mxu0 0
    %2552 = vmatpush1.bf16.msra.mxu0 %v1977
    %2553 = vmatprep.subr.bf16.mxu0 0
    %2554 = vmatpush1.bf16.msra.mxu0 %v1978
    %2555 = vmatprep.subr.bf16.mxu0 0
    %2556 = vmatpush1.bf16.msra.mxu0 %v1979
    %2557 = vmatprep.subr.bf16.mxu0 0
    %2558 = vmatpush1.bf16.msra.mxu0 %v1980
    %2559 = vmatprep.subr.bf16.mxu0 0
    %2560 = vmatpush1.bf16.msra.mxu0 %v1981
    %2561 = vmatprep.subr.bf16.mxu0 0
    %2562 = vmatpush1.bf16.msra.mxu0 %v1982
    %2563 = vmatprep.subr.bf16.mxu0 0
    %2564 = vmatpush1.bf16.msra.mxu0 %v1983
    %2565 = vmatprep.subr.bf16.mxu0 0
    %2566 = vmatpush1.bf16.msra.mxu0 %v1984
    %2567 = vmatprep.mubr.bf16.mxu0 %v605
    %2568 = vmatmul.mubr.bf16.gmra.mrb[0].mxu0 %v604
    %v2569 = vpop.f32.mrb[0].mxu0
    %v2570 = vadd.f32 %v2529, %v2569
    %v2571 = vpop.f32.mrb[0].mxu0
    %v2572 = vpop.f32.mrb[0].mxu0
    %v2573 = vadd.f32 %v2532, %v2572
    %v2574 = vpop.f32.mrb[0].mxu0
    %2575 = vdwg.mxu0
    %2576 = vmatprep.subr.bf16.mxu0 0
    %2577 = vmatpush1.bf16.msra.mxu0 %v1985
    %2578 = vmatprep.subr.bf16.mxu0 0
    %2579 = vmatpush1.bf16.msra.mxu0 %v1986
    %2580 = vmatprep.subr.bf16.mxu0 0
    %2581 = vmatpush1.bf16.msra.mxu0 %v1987
    %2582 = vmatprep.subr.bf16.mxu0 0
    %2583 = vmatpush1.bf16.msra.mxu0 %v1988
    %2584 = vmatprep.subr.bf16.mxu0 0
    %2585 = vmatpush1.bf16.msra.mxu0 %v1989
    %2586 = vmatprep.subr.bf16.mxu0 0
    %2587 = vmatpush1.bf16.msra.mxu0 %v1990
    %2588 = vmatprep.subr.bf16.mxu0 0
    %2589 = vmatpush1.bf16.msra.mxu0 %v1991
    %2590 = vmatprep.subr.bf16.mxu0 0
    %2591 = vmatpush1.bf16.msra.mxu0 %v1992
    %2592 = vmatprep.subr.bf16.mxu0 0
    %2593 = vmatpush1.bf16.msra.mxu0 %v1993
    %2594 = vmatprep.subr.bf16.mxu0 0
    %2595 = vmatpush1.bf16.msra.mxu0 %v1994
    %2596 = vmatprep.subr.bf16.mxu0 0
    %2597 = vmatpush1.bf16.msra.mxu0 %v1995
    %2598 = vmatprep.subr.bf16.mxu0 0
    %2599 = vmatpush1.bf16.msra.mxu0 %v1996
    %2600 = vmatprep.subr.bf16.mxu0 0
    %2601 = vmatpush1.bf16.msra.mxu0 %v1997
    %2602 = vmatprep.subr.bf16.mxu0 0
    %2603 = vmatpush1.bf16.msra.mxu0 %v1998
    %2604 = vmatprep.subr.bf16.mxu0 0
    %2605 = vmatpush1.bf16.msra.mxu0 %v1999
    %2606 = vmatprep.subr.bf16.mxu0 0
    %2607 = vmatpush1.bf16.msra.mxu0 %v2000
    %2608 = vmatprep.mubr.bf16.mxu0 %v607
    %2609 = vmatmul.mubr.bf16.gmra.mrb[0].mxu0 %v606
    %v2610 = vpop.f32.mrb[0].mxu0
    %v2611 = vadd.f32 %v2570, %v2610
    %v2612 = vpop.f32.mrb[0].mxu0
    %v2613 = vpop.f32.mrb[0].mxu0
    %v2614 = vadd.f32 %v2573, %v2613
    %v2615 = vpop.f32.mrb[0].mxu0
    %2616 = vdwg.mxu0
    %2617 = vmatprep.subr.bf16.mxu0 0
    %2618 = vmatpush1.bf16.msra.mxu0 %v2001
    %2619 = vmatprep.subr.bf16.mxu0 0
    %2620 = vmatpush1.bf16.msra.mxu0 %v2002
    %2621 = vmatprep.subr.bf16.mxu0 0
    %2622 = vmatpush1.bf16.msra.mxu0 %v2003
    %2623 = vmatprep.subr.bf16.mxu0 0
    %2624 = vmatpush1.bf16.msra.mxu0 %v2004
    %2625 = vmatprep.subr.bf16.mxu0 0
    %2626 = vmatpush1.bf16.msra.mxu0 %v2005
    %2627 = vmatprep.subr.bf16.mxu0 0
    %2628 = vmatpush1.bf16.msra.mxu0 %v2006
    %2629 = vmatprep.subr.bf16.mxu0 0
    %2630 = vmatpush1.bf16.msra.mxu0 %v2007
    %2631 = vmatprep.subr.bf16.mxu0 0
    %2632 = vmatpush1.bf16.msra.mxu0 %v2008
    %2633 = vmatprep.subr.bf16.mxu0 0
    %2634 = vmatpush1.bf16.msra.mxu0 %v2009
    %2635 = vmatprep.subr.bf16.mxu0 0
    %2636 = vmatpush1.bf16.msra.mxu0 %v2010
    %2637 = vmatprep.subr.bf16.mxu0 0
    %2638 = vmatpush1.bf16.msra.mxu0 %v2011
    %2639 = vmatprep.subr.bf16.mxu0 0
    %2640 = vmatpush1.bf16.msra.mxu0 %v2012
    %2641 = vmatprep.subr.bf16.mxu0 0
    %2642 = vmatpush1.bf16.msra.mxu0 %v2013
    %2643 = vmatprep.subr.bf16.mxu0 0
    %2644 = vmatpush1.bf16.msra.mxu0 %v2014
    %2645 = vmatprep.subr.bf16.mxu0 0
    %2646 = vmatpush1.bf16.msra.mxu0 %v2015
    %2647 = vmatprep.subr.bf16.mxu0 0
    %2648 = vmatpush1.bf16.msra.mxu0 %v2016
    %2649 = vmatprep.mubr.bf16.mxu0 %v609
    %2650 = vmatmul.mubr.bf16.gmra.mrb[0].mxu0 %v608
    %v2651 = vpop.f32.mrb[0].mxu0
    %v2652 = vadd.f32 %v2611, %v2651
    %v2653 = vpop.f32.mrb[0].mxu0
    %v2654 = vpop.f32.mrb[0].mxu0
    %v2655 = vadd.f32 %v2614, %v2654
    %v2656 = vpop.f32.mrb[0].mxu0
    %2657 = vdwg.mxu0
    %2658 = vmatprep.subr.bf16.mxu0 0
    %2659 = vmatpush1.bf16.msra.mxu0 %v2017
    %2660 = vmatprep.subr.bf16.mxu0 0
    %2661 = vmatpush1.bf16.msra.mxu0 %v2018
    %2662 = vmatprep.subr.bf16.mxu0 0
    %2663 = vmatpush1.bf16.msra.mxu0 %v2019
    %2664 = vmatprep.subr.bf16.mxu0 0
    %2665 = vmatpush1.bf16.msra.mxu0 %v2020
    %2666 = vmatprep.subr.bf16.mxu0 0
    %2667 = vmatpush1.bf16.msra.mxu0 %v2021
    %2668 = vmatprep.subr.bf16.mxu0 0
    %2669 = vmatpush1.bf16.msra.mxu0 %v2022
    %2670 = vmatprep.subr.bf16.mxu0 0
    %2671 = vmatpush1.bf16.msra.mxu0 %v2023
    %2672 = vmatprep.subr.bf16.mxu0 0
    %2673 = vmatpush1.bf16.msra.mxu0 %v2024
    %2674 = vmatprep.subr.bf16.mxu0 0
    %2675 = vmatpush1.bf16.msra.mxu0 %v2025
    %2676 = vmatprep.subr.bf16.mxu0 0
    %2677 = vmatpush1.bf16.msra.mxu0 %v2026
    %2678 = vmatprep.subr.bf16.mxu0 0
    %2679 = vmatpush1.bf16.msra.mxu0 %v2027
    %2680 = vmatprep.subr.bf16.mxu0 0
    %2681 = vmatpush1.bf16.msra.mxu0 %v2028
    %2682 = vmatprep.subr.bf16.mxu0 0
    %2683 = vmatpush1.bf16.msra.mxu0 %v2029
    %2684 = vmatprep.subr.bf16.mxu0 0
    %2685 = vmatpush1.bf16.msra.mxu0 %v2030
    %2686 = vmatprep.subr.bf16.mxu0 0
    %2687 = vmatpush1.bf16.msra.mxu0 %v2031
    %2688 = vmatprep.subr.bf16.mxu0 0
    %2689 = vmatpush1.bf16.msra.mxu0 %v2032
    %2690 = vmatprep.mubr.bf16.mxu0 %v611
    %2691 = vmatmul.mubr.bf16.gmra.mrb[0].mxu0 %v610
    %v2692 = vpop.f32.mrb[0].mxu0
    %v2693 = vadd.f32 %v2652, %v2692
    %v2694 = vpop.f32.mrb[0].mxu0
    %v2695 = vpop.f32.mrb[0].mxu0
    %v2696 = vadd.f32 %v2655, %v2695
    %v2697 = vpop.f32.mrb[0].mxu0
    %2698 = vdwg.mxu0
    %2699 = vmatprep.subr.bf16.mxu0 0
    %2700 = vmatpush1.bf16.msra.mxu0 %v2033
    %2701 = vmatprep.subr.bf16.mxu0 0
    %2702 = vmatpush1.bf16.msra.mxu0 %v2034
    %2703 = vmatprep.subr.bf16.mxu0 0
    %2704 = vmatpush1.bf16.msra.mxu0 %v2035
    %2705 = vmatprep.subr.bf16.mxu0 0
    %2706 = vmatpush1.bf16.msra.mxu0 %v2036
    %2707 = vmatprep.subr.bf16.mxu0 0
    %2708 = vmatpush1.bf16.msra.mxu0 %v2037
    %2709 = vmatprep.subr.bf16.mxu0 0
    %2710 = vmatpush1.bf16.msra.mxu0 %v2038
    %2711 = vmatprep.subr.bf16.mxu0 0
    %2712 = vmatpush1.bf16.msra.mxu0 %v2039
    %2713 = vmatprep.subr.bf16.mxu0 0
    %2714 = vmatpush1.bf16.msra.mxu0 %v2040
    %2715 = vmatprep.subr.bf16.mxu0 0
    %2716 = vmatpush1.bf16.msra.mxu0 %v2041
    %2717 = vmatprep.subr.bf16.mxu0 0
    %2718 = vmatpush1.bf16.msra.mxu0 %v2042
    %2719 = vmatprep.subr.bf16.mxu0 0
    %2720 = vmatpush1.bf16.msra.mxu0 %v2043
    %2721 = vmatprep.subr.bf16.mxu0 0
    %2722 = vmatpush1.bf16.msra.mxu0 %v2044
    %2723 = vmatprep.subr.bf16.mxu0 0
    %2724 = vmatpush1.bf16.msra.mxu0 %v2045
    %2725 = vmatprep.subr.bf16.mxu0 0
    %2726 = vmatpush1.bf16.msra.mxu0 %v2046
    %2727 = vmatprep.subr.bf16.mxu0 0
    %2728 = vmatpush1.bf16.msra.mxu0 %v2047
    %2729 = vmatprep.subr.bf16.mxu0 0
    %2730 = vmatpush1.bf16.msra.mxu0 %v2048
    %2731 = vmatprep.mubr.bf16.mxu0 %v613
    %2732 = vmatmul.mubr.bf16.gmra.mrb[0].mxu0 %v612
    %v2733 = vpop.f32.mrb[0].mxu0
    %v2734 = vadd.f32 %v2693, %v2733
    %v2735 = vpop.f32.mrb[0].mxu0
    %v2736 = vpop.f32.mrb[0].mxu0
    %v2737 = vadd.f32 %v2696, %v2736
    %v2738 = vpop.f32.mrb[0].mxu0
    %2739 = vdwg.mxu0
    %2740 = vmatprep.subr.bf16.mxu0 0
    %2741 = vmatpush1.bf16.msra.mxu0 %v2049
    %2742 = vmatprep.subr.bf16.mxu0 0
    %2743 = vmatpush1.bf16.msra.mxu0 %v2050
    %2744 = vmatprep.subr.bf16.mxu0 0
    %2745 = vmatpush1.bf16.msra.mxu0 %v2051
    %2746 = vmatprep.subr.bf16.mxu0 0
    %2747 = vmatpush1.bf16.msra.mxu0 %v2052
    %2748 = vmatprep.subr.bf16.mxu0 0
    %2749 = vmatpush1.bf16.msra.mxu0 %v2053
    %2750 = vmatprep.subr.bf16.mxu0 0
    %2751 = vmatpush1.bf16.msra.mxu0 %v2054
    %2752 = vmatprep.subr.bf16.mxu0 0
    %2753 = vmatpush1.bf16.msra.mxu0 %v2055
    %2754 = vmatprep.subr.bf16.mxu0 0
    %2755 = vmatpush1.bf16.msra.mxu0 %v2056
    %2756 = vmatprep.subr.bf16.mxu0 0
    %2757 = vmatpush1.bf16.msra.mxu0 %v2057
    %2758 = vmatprep.subr.bf16.mxu0 0
    %2759 = vmatpush1.bf16.msra.mxu0 %v2058
    %2760 = vmatprep.subr.bf16.mxu0 0
    %2761 = vmatpush1.bf16.msra.mxu0 %v2059
    %2762 = vmatprep.subr.bf16.mxu0 0
    %2763 = vmatpush1.bf16.msra.mxu0 %v2060
    %2764 = vmatprep.subr.bf16.mxu0 0
    %2765 = vmatpush1.bf16.msra.mxu0 %v2061
    %2766 = vmatprep.subr.bf16.mxu0 0
    %2767 = vmatpush1.bf16.msra.mxu0 %v2062
    %2768 = vmatprep.subr.bf16.mxu0 0
    %2769 = vmatpush1.bf16.msra.mxu0 %v2063
    %2770 = vmatprep.subr.bf16.mxu0 0
    %2771 = vmatpush1.bf16.msra.mxu0 %v2064
    %2772 = vmatprep.mubr.bf16.mxu0 %v615
    %2773 = vmatmul.mubr.bf16.gmra.mrb[0].mxu0 %v614
    %v2774 = vpop.f32.mrb[0].mxu0
    %v2775 = vadd.f32 %v2734, %v2774
    %v2776 = vpop.f32.mrb[0].mxu0
    %v2777 = vpop.f32.mrb[0].mxu0
    %v2778 = vadd.f32 %v2737, %v2777
    %v2779 = vpop.f32.mrb[0].mxu0
    %2780 = vdwg.mxu0
    %2781 = vmatprep.subr.bf16.mxu0 0
    %2782 = vmatpush1.bf16.msra.mxu0 %v2065
    %2783 = vmatprep.subr.bf16.mxu0 0
    %2784 = vmatpush1.bf16.msra.mxu0 %v2066
    %2785 = vmatprep.subr.bf16.mxu0 0
    %2786 = vmatpush1.bf16.msra.mxu0 %v2067
    %2787 = vmatprep.subr.bf16.mxu0 0
    %2788 = vmatpush1.bf16.msra.mxu0 %v2068
    %2789 = vmatprep.subr.bf16.mxu0 0
    %2790 = vmatpush1.bf16.msra.mxu0 %v2069
    %2791 = vmatprep.subr.bf16.mxu0 0
    %2792 = vmatpush1.bf16.msra.mxu0 %v2070
    %2793 = vmatprep.subr.bf16.mxu0 0
    %2794 = vmatpush1.bf16.msra.mxu0 %v2071
    %2795 = vmatprep.subr.bf16.mxu0 0
    %2796 = vmatpush1.bf16.msra.mxu0 %v2072
    %2797 = vmatprep.subr.bf16.mxu0 0
    %2798 = vmatpush1.bf16.msra.mxu0 %v2073
    %2799 = vmatprep.subr.bf16.mxu0 0
    %2800 = vmatpush1.bf16.msra.mxu0 %v2074
    %2801 = vmatprep.subr.bf16.mxu0 0
    %2802 = vmatpush1.bf16.msra.mxu0 %v2075
    %2803 = vmatprep.subr.bf16.mxu0 0
    %2804 = vmatpush1.bf16.msra.mxu0 %v2076
    %2805 = vmatprep.subr.bf16.mxu0 0
    %2806 = vmatpush1.bf16.msra.mxu0 %v2077
    %2807 = vmatprep.subr.bf16.mxu0 0
    %2808 = vmatpush1.bf16.msra.mxu0 %v2078
    %2809 = vmatprep.subr.bf16.mxu0 0
    %2810 = vmatpush1.bf16.msra.mxu0 %v2079
    %2811 = vmatprep.subr.bf16.mxu0 0
    %2812 = vmatpush1.bf16.msra.mxu0 %v2080
    %2813 = vmatprep.mubr.bf16.mxu0 %v617
    %2814 = vmatmul.mubr.bf16.gmra.mrb[0].mxu0 %v616
    %v2815 = vpop.f32.mrb[0].mxu0
    %v2816 = vadd.f32 %v2775, %v2815
    %v2817 = vpop.f32.mrb[0].mxu0
    %v2818 = vpop.f32.mrb[0].mxu0
    %v2819 = vadd.f32 %v2778, %v2818
    %v2820 = vpop.f32.mrb[0].mxu0
    %2821 = vdwg.mxu0
    %vm2822 = vcmp.gt.f32.partialorder %v2816, 0.0
    %vm2823 = vcmp.gt.f32.partialorder %v2819, 0.0
    %v2824 = vmin.f32 %v2816, 0.0
    %v2825 = vmin.f32 %v2819, 0.0
    %v2826 = vmul.f32 %v2824, 1.442695
    %v2827 = vpow.pop %v2826
    %v2828 = vmul.f32 %v2825, 1.442695
    %v2829 = vpow.pop %v2828
    %v2830 = vsub.f32 %v2827, 1.0
    %v2831 = vsub.f32 %v2829, 1.0
    %v2832 = vsel %vm2822, %v2816, %v2830
    %v2833 = vsel %vm2823, %v2819, %v2831
    %v2834 = vpack.c.bf16 %v2833, %v2832
    %v2835 = vld [vmem:[%s1] sm:$0xf]
    %v2836 = vld [vmem:[%s1 + $0x4] sm:$0xf]
    %v2839 = vunpack.c.l.b16 %v2835
    %v2840 = vunpack.c.l.b16 %v2836
    %v2841 = vpack.c.b16 %v2840, %v2839
    %v2843 = vsel %vm284, %v2841, 0
    %2845 = vmatprep.subr.bf16.mxu0 0
    %2846 = vmatpush1.bf16.msra.mxu0 %v2834
    %2847 = vmatprep.subr.bf16.mxu0 0
    %2848 = vmatpush1.bf16.msra.mxu0 0
    %2849 = vmatprep.subr.bf16.mxu0 0
    %2850 = vmatpush1.bf16.msra.mxu0 0
    %2851 = vmatprep.subr.bf16.mxu0 0
    %2852 = vmatpush1.bf16.msra.mxu0 0
    %2853 = vmatprep.subr.bf16.mxu0 0
    %2854 = vmatpush1.bf16.msra.mxu0 0
    %2855 = vmatprep.subr.bf16.mxu0 0
    %2856 = vmatpush1.bf16.msra.mxu0 0
    %2857 = vmatprep.subr.bf16.mxu0 0
    %2858 = vmatpush1.bf16.msra.mxu0 0
    %2859 = vmatprep.subr.bf16.mxu0 0
    %2860 = vmatpush1.bf16.msra.mxu0 0
    %2861 = vmatprep.subr.bf16.mxu0 0
    %2862 = vmatpush1.bf16.msra.mxu0 0
    %2863 = vmatprep.subr.bf16.mxu0 0
    %2864 = vmatpush1.bf16.msra.mxu0 0
    %2865 = vmatprep.subr.bf16.mxu0 0
    %2866 = vmatpush1.bf16.msra.mxu0 0
    %2867 = vmatprep.subr.bf16.mxu0 0
    %2868 = vmatpush1.bf16.msra.mxu0 0
    %2869 = vmatprep.subr.bf16.mxu0 0
    %2870 = vmatpush1.bf16.msra.mxu0 0
    %2871 = vmatprep.subr.bf16.mxu0 0
    %2872 = vmatpush1.bf16.msra.mxu0 0
    %2873 = vmatprep.subr.bf16.mxu0 0
    %2874 = vmatpush1.bf16.msra.mxu0 0
    %2875 = vmatprep.subr.bf16.mxu0 0
    %2876 = vmatpush1.bf16.msra.mxu0 0
    %2877 = vmatprep.mubr.bf16.mxu0 0
    %2878 = vmatmul.mubr.bf16.gmra.mrb[0].mxu0 %v2843
    %v2879 = vpop.f32.mrb[0].mxu0
    %v2880 = vadd.f32 0.0, %v2879
    %v2881 = vpop.f32.mrb[0].mxu0
    %v2882 = vpop.f32.mrb[0].mxu0
    %v2883 = vadd.f32 0.0, %v2882
    %v2884 = vpop.f32.mrb[0].mxu0
    %2885 = vdwg.mxu0
    %v2886 = vpack.c.bf16 %v2883, %v2880
    %v2887 = vld [vmem:[#allocation7] sm:$0xf]
    %v2888 = vld [vmem:[#allocation7 + $0x4] sm:$0xf]
    %v2889 = vld [vmem:[#allocation7 + $0x8] sm:$0xf]
    %v2890 = vld [vmem:[#allocation7 + $0xc] sm:$0xf]
    %v2891 = vld [vmem:[#allocation7 + $0x10] sm:$0xf]
    %v2892 = vld [vmem:[#allocation7 + $0x14] sm:$0xf]
    %v2893 = vld [vmem:[#allocation7 + $0x18] sm:$0xf]
    %v2894 = vld [vmem:[#allocation7 + $0x1c] sm:$0xf]
    %v2895 = vld [vmem:[#allocation7 + $0x20] sm:$0xf]
    %v2896 = vld [vmem:[#allocation7 + $0x24] sm:$0xf]
    %v2897 = vld [vmem:[#allocation7 + $0x28] sm:$0xf]
    %v2898 = vld [vmem:[#allocation7 + $0x2c] sm:$0xf]
    %v2899 = vld [vmem:[#allocation7 + $0x30] sm:$0xf]
    %v2900 = vld [vmem:[#allocation7 + $0x34] sm:$0xf]
    %v2901 = vld [vmem:[#allocation7 + $0x38] sm:$0xf]
    %v2902 = vld [vmem:[#allocation7 + $0x3c] sm:$0xf]
    %v2903 = vld [vmem:[#allocation7 + $0x40] sm:$0xf]
    %v2904 = vld [vmem:[#allocation7 + $0x44] sm:$0xf]
    %v2905 = vld [vmem:[#allocation7 + $0x48] sm:$0xf]
    %v2906 = vld [vmem:[#allocation7 + $0x4c] sm:$0xf]
    %v2907 = vld [vmem:[#allocation7 + $0x50] sm:$0xf]
    %v2908 = vld [vmem:[#allocation7 + $0x54] sm:$0xf]
    %v2909 = vld [vmem:[#allocation7 + $0x58] sm:$0xf]
    %v2910 = vld [vmem:[#allocation7 + $0x5c] sm:$0xf]
    %v2911 = vld [vmem:[#allocation7 + $0x60] sm:$0xf]
    %v2912 = vld [vmem:[#allocation7 + $0x64] sm:$0xf]
    %v2913 = vld [vmem:[#allocation7 + $0x68] sm:$0xf]
    %v2914 = vld [vmem:[#allocation7 + $0x6c] sm:$0xf]
    %v2915 = vld [vmem:[#allocation7 + $0x70] sm:$0xf]
    %v2916 = vld [vmem:[#allocation7 + $0x74] sm:$0xf]
    %v2917 = vld [vmem:[#allocation7 + $0x78] sm:$0xf]
    %v2918 = vld [vmem:[#allocation7 + $0x7c] sm:$0xf]
    %v2919 = vld [vmem:[%s6] sm:$0x1]
    %v2921 = vlaneseq
    %v2922 = vshrl.u32 %v2921, 7
    %v2923 = vsub.s32 0, %v2922
    %v2924 = vrot.slane %v2919, %v2923
    %v2958 = vunpack.c.l.b16 %v2887
    %v2959 = vunpack.c.l.b16 %v2888
    %v2960 = vunpack.c.l.b16 %v2889
    %v2961 = vunpack.c.l.b16 %v2890
    %v2962 = vunpack.c.l.b16 %v2891
    %v2963 = vunpack.c.l.b16 %v2892
    %v2964 = vunpack.c.l.b16 %v2893
    %v2965 = vunpack.c.l.b16 %v2894
    %v2966 = vunpack.c.l.b16 %v2895
    %v2967 = vunpack.c.l.b16 %v2896
    %v2968 = vunpack.c.l.b16 %v2897
    %v2969 = vunpack.c.l.b16 %v2898
    %v2970 = vunpack.c.l.b16 %v2899
    %v2971 = vunpack.c.l.b16 %v2900
    %v2972 = vunpack.c.l.b16 %v2901
    %v2973 = vunpack.c.l.b16 %v2902
    %v2974 = vunpack.c.l.b16 %v2903
    %v2975 = vunpack.c.l.b16 %v2904
    %v2976 = vunpack.c.l.b16 %v2905
    %v2977 = vunpack.c.l.b16 %v2906
    %v2978 = vunpack.c.l.b16 %v2907
    %v2979 = vunpack.c.l.b16 %v2908
    %v2980 = vunpack.c.l.b16 %v2909
    %v2981 = vunpack.c.l.b16 %v2910
    %v2982 = vunpack.c.l.b16 %v2911
    %v2983 = vunpack.c.l.b16 %v2912
    %v2984 = vunpack.c.l.b16 %v2913
    %v2985 = vunpack.c.l.b16 %v2914
    %v2986 = vunpack.c.l.b16 %v2915
    %v2987 = vunpack.c.l.b16 %v2916
    %v2988 = vunpack.c.l.b16 %v2917
    %v2989 = vunpack.c.l.b16 %v2918
    %v2990 = vpack.c.b16 %v2959, %v2958
    %v2991 = vpack.c.b16 %v2961, %v2960
    %v2992 = vpack.c.b16 %v2963, %v2962
    %v2993 = vpack.c.b16 %v2965, %v2964
    %v2994 = vpack.c.b16 %v2967, %v2966
    %v2995 = vpack.c.b16 %v2969, %v2968
    %v2996 = vpack.c.b16 %v2971, %v2970
    %v2997 = vpack.c.b16 %v2973, %v2972
    %v2998 = vpack.c.b16 %v2975, %v2974
    %v2999 = vpack.c.b16 %v2977, %v2976
    %v3000 = vpack.c.b16 %v2979, %v2978
    %v3001 = vpack.c.b16 %v2981, %v2980
    %v3002 = vpack.c.b16 %v2983, %v2982
    %v3003 = vpack.c.b16 %v2985, %v2984
    %v3004 = vpack.c.b16 %v2987, %v2986
    %v3005 = vpack.c.b16 %v2989, %v2988
    %3022 = vmatprep.subr.bf16.mxu0 0
    %3023 = vmatpush1.bf16.msra.mxu0 %v2990
    %3024 = vmatprep.subr.bf16.mxu0 0
    %3025 = vmatpush1.bf16.msra.mxu0 %v2991
    %3026 = vmatprep.subr.bf16.mxu0 0
    %3027 = vmatpush1.bf16.msra.mxu0 %v2992
    %3028 = vmatprep.subr.bf16.mxu0 0
    %3029 = vmatpush1.bf16.msra.mxu0 %v2993
    %3030 = vmatprep.subr.bf16.mxu0 0
    %3031 = vmatpush1.bf16.msra.mxu0 %v2994
    %3032 = vmatprep.subr.bf16.mxu0 0
    %3033 = vmatpush1.bf16.msra.mxu0 %v2995
    %3034 = vmatprep.subr.bf16.mxu0 0
    %3035 = vmatpush1.bf16.msra.mxu0 %v2996
    %3036 = vmatprep.subr.bf16.mxu0 0
    %3037 = vmatpush1.bf16.msra.mxu0 %v2997
    %3038 = vmatprep.subr.bf16.mxu0 0
    %3039 = vmatpush1.bf16.msra.mxu0 %v2998
    %3040 = vmatprep.subr.bf16.mxu0 0
    %3041 = vmatpush1.bf16.msra.mxu0 %v2999
    %3042 = vmatprep.subr.bf16.mxu0 0
    %3043 = vmatpush1.bf16.msra.mxu0 %v3000
    %3044 = vmatprep.subr.bf16.mxu0 0
    %3045 = vmatpush1.bf16.msra.mxu0 %v3001
    %3046 = vmatprep.subr.bf16.mxu0 0
    %3047 = vmatpush1.bf16.msra.mxu0 %v3002
    %3048 = vmatprep.subr.bf16.mxu0 0
    %3049 = vmatpush1.bf16.msra.mxu0 %v3003
    %3050 = vmatprep.subr.bf16.mxu0 0
    %3051 = vmatpush1.bf16.msra.mxu0 %v3004
    %3052 = vmatprep.subr.bf16.mxu0 0
    %3053 = vmatpush1.bf16.msra.mxu0 %v3005
    %3054 = vmatprep.mubr.bf16.mxu0 %v2834
    %3055 = vmatmul.mubr.bf16.gmra.mrb[0].mxu0 %v2886
    %v3056 = vpop.f32.mrb[0].mxu0
    %v3057 = vadd.f32 %v2924, %v3056
    %v3058 = vpop.f32.mrb[0].mxu0
    %v3059 = vpop.f32.mrb[0].mxu0
    %v3060 = vadd.f32 %v2924, %v3059
    %v3061 = vpop.f32.mrb[0].mxu0
    %3062 = vdwg.mxu0
    %vm3063 = vcmp.gt.f32.partialorder %v3057, 0.0
    %vm3064 = vcmp.gt.f32.partialorder %v3060, 0.0
    %v3065 = vmin.f32 %v3057, 0.0
    %v3066 = vmin.f32 %v3060, 0.0
    %v3067 = vmul.f32 %v3065, 1.442695
    %v3068 = vpow.pop %v3067
    %v3069 = vmul.f32 %v3066, 1.442695
    %v3070 = vpow.pop %v3069
    %v3071 = vsub.f32 %v3068, 1.0
    %v3072 = vsub.f32 %v3070, 1.0
    %v3073 = vsel %vm3063, %v3057, %v3071
    %v3074 = vsel %vm3064, %v3060, %v3072
    %v3075 = vpack.c.bf16 %v3074, %v3073
    %3076 = vmatprep.subr.bf16.mxu0 0
    %3077 = vmatpush1.bf16.msra.mxu0 %v3075
    %3078 = vmatprep.subr.bf16.mxu0 0
    %3079 = vmatpush1.bf16.msra.mxu0 0
    %3080 = vmatprep.subr.bf16.mxu0 0
    %3081 = vmatpush1.bf16.msra.mxu0 0
    %3082 = vmatprep.subr.bf16.mxu0 0
    %3083 = vmatpush1.bf16.msra.mxu0 0
    %3084 = vmatprep.subr.bf16.mxu0 0
    %3085 = vmatpush1.bf16.msra.mxu0 0
    %3086 = vmatprep.subr.bf16.mxu0 0
    %3087 = vmatpush1.bf16.msra.mxu0 0
    %3088 = vmatprep.subr.bf16.mxu0 0
    %3089 = vmatpush1.bf16.msra.mxu0 0
    %3090 = vmatprep.subr.bf16.mxu0 0
    %3091 = vmatpush1.bf16.msra.mxu0 0
    %3092 = vmatprep.subr.bf16.mxu0 0
    %3093 = vmatpush1.bf16.msra.mxu0 0
    %3094 = vmatprep.subr.bf16.mxu0 0
    %3095 = vmatpush1.bf16.msra.mxu0 0
    %3096 = vmatprep.subr.bf16.mxu0 0
    %3097 = vmatpush1.bf16.msra.mxu0 0
    %3098 = vmatprep.subr.bf16.mxu0 0
    %3099 = vmatpush1.bf16.msra.mxu0 0
    %3100 = vmatprep.subr.bf16.mxu0 0
    %3101 = vmatpush1.bf16.msra.mxu0 0
    %3102 = vmatprep.subr.bf16.mxu0 0
    %3103 = vmatpush1.bf16.msra.mxu0 0
    %3104 = vmatprep.subr.bf16.mxu0 0
    %3105 = vmatpush1.bf16.msra.mxu0 0
    %3106 = vmatprep.subr.bf16.mxu0 0
    %3107 = vmatpush1.bf16.msra.mxu0 0
    %3108 = vmatprep.mubr.bf16.mxu0 0
    %3109 = vmatmul.mubr.bf16.gmra.mrb[0].mxu0 %v286
    %v3110 = vpop.f32.mrb[0].mxu0
    %v3111 = vadd.f32 0.0, %v3110
    %v3112 = vpop.f32.mrb[0].mxu0
    %v3113 = vpop.f32.mrb[0].mxu0
    %v3114 = vadd.f32 0.0, %v3113
    %v3115 = vpop.f32.mrb[0].mxu0
    %3116 = vmatprep.mubr.bf16.mxu0 0
    %3117 = vmatmul.mubr.bf16.gmra.mrb[0].mxu0 %v289
    %v3118 = vpop.f32.mrb[0].mxu0
    %v3119 = vadd.f32 0.0, %v3118
    %v3120 = vpop.f32.mrb[0].mxu0
    %v3121 = vpop.f32.mrb[0].mxu0
    %v3122 = vadd.f32 0.0, %v3121
    %v3123 = vpop.f32.mrb[0].mxu0
    %3124 = vmatprep.mubr.bf16.mxu0 0
    %3125 = vmatmul.mubr.bf16.gmra.mrb[0].mxu0 %v292
    %v3126 = vpop.f32.mrb[0].mxu0
    %v3127 = vadd.f32 0.0, %v3126
    %v3128 = vpop.f32.mrb[0].mxu0
    %v3129 = vpop.f32.mrb[0].mxu0
    %v3130 = vadd.f32 0.0, %v3129
    %v3131 = vpop.f32.mrb[0].mxu0
    %3132 = vmatprep.mubr.bf16.mxu0 0
    %3133 = vmatmul.mubr.bf16.gmra.mrb[0].mxu0 %v295
    %v3134 = vpop.f32.mrb[0].mxu0
    %v3135 = vadd.f32 0.0, %v3134
    %v3136 = vpop.f32.mrb[0].mxu0
    %v3137 = vpop.f32.mrb[0].mxu0
    %v3138 = vadd.f32 0.0, %v3137
    %v3139 = vpop.f32.mrb[0].mxu0
    %3140 = vmatprep.mubr.bf16.mxu0 0
    %3141 = vmatmul.mubr.bf16.gmra.mrb[0].mxu0 %v298
    %v3142 = vpop.f32.mrb[0].mxu0
    %v3143 = vadd.f32 0.0, %v3142
    %v3144 = vpop.f32.mrb[0].mxu0
    %v3145 = vpop.f32.mrb[0].mxu0
    %v3146 = vadd.f32 0.0, %v3145
    %v3147 = vpop.f32.mrb[0].mxu0
    %3148 = vmatprep.mubr.bf16.mxu0 0
    %3149 = vmatmul.mubr.bf16.gmra.mrb[0].mxu0 %v301
    %v3150 = vpop.f32.mrb[0].mxu0
    %v3151 = vadd.f32 0.0, %v3150
    %v3152 = vpop.f32.mrb[0].mxu0
    %v3153 = vpop.f32.mrb[0].mxu0
    %v3154 = vadd.f32 0.0, %v3153
    %v3155 = vpop.f32.mrb[0].mxu0
    %3156 = vmatprep.mubr.bf16.mxu0 0
    %3157 = vmatmul.mubr.bf16.gmra.mrb[0].mxu0 %v304
    %v3158 = vpop.f32.mrb[0].mxu0
    %v3159 = vadd.f32 0.0, %v3158
    %v3160 = vpop.f32.mrb[0].mxu0
    %v3161 = vpop.f32.mrb[0].mxu0
    %v3162 = vadd.f32 0.0, %v3161
    %v3163 = vpop.f32.mrb[0].mxu0
    %3164 = vmatprep.mubr.bf16.mxu0 0
    %3165 = vmatmul.mubr.bf16.gmra.mrb[0].mxu0 %v307
    %v3166 = vpop.f32.mrb[0].mxu0
    %v3167 = vadd.f32 0.0, %v3166
    %v3168 = vpop.f32.mrb[0].mxu0
    %v3169 = vpop.f32.mrb[0].mxu0
    %v3170 = vadd.f32 0.0, %v3169
    %v3171 = vpop.f32.mrb[0].mxu0
    %3172 = vmatprep.mubr.bf16.mxu0 0
    %3173 = vmatmul.mubr.bf16.gmra.mrb[0].mxu0 %v310
    %v3174 = vpop.f32.mrb[0].mxu0
    %v3175 = vadd.f32 0.0, %v3174
    %v3176 = vpop.f32.mrb[0].mxu0
    %v3177 = vpop.f32.mrb[0].mxu0
    %v3178 = vadd.f32 0.0, %v3177
    %v3179 = vpop.f32.mrb[0].mxu0
    %3180 = vmatprep.mubr.bf16.mxu0 0
    %3181 = vmatmul.mubr.bf16.gmra.mrb[0].mxu0 %v313
    %v3182 = vpop.f32.mrb[0].mxu0
    %v3183 = vadd.f32 0.0, %v3182
    %v3184 = vpop.f32.mrb[0].mxu0
    %v3185 = vpop.f32.mrb[0].mxu0
    %v3186 = vadd.f32 0.0, %v3185
    %v3187 = vpop.f32.mrb[0].mxu0
    %3188 = vmatprep.mubr.bf16.mxu0 0
    %3189 = vmatmul.mubr.bf16.gmra.mrb[0].mxu0 %v316
    %v3190 = vpop.f32.mrb[0].mxu0
    %v3191 = vadd.f32 0.0, %v3190
    %v3192 = vpop.f32.mrb[0].mxu0
    %v3193 = vpop.f32.mrb[0].mxu0
    %v3194 = vadd.f32 0.0, %v3193
    %v3195 = vpop.f32.mrb[0].mxu0
    %3196 = vmatprep.mubr.bf16.mxu0 0
    %3197 = vmatmul.mubr.bf16.gmra.mrb[0].mxu0 %v319
    %v3198 = vpop.f32.mrb[0].mxu0
    %v3199 = vadd.f32 0.0, %v3198
    %v3200 = vpop.f32.mrb[0].mxu0
    %v3201 = vpop.f32.mrb[0].mxu0
    %v3202 = vadd.f32 0.0, %v3201
    %v3203 = vpop.f32.mrb[0].mxu0
    %3204 = vmatprep.mubr.bf16.mxu0 0
    %3205 = vmatmul.mubr.bf16.gmra.mrb[0].mxu0 %v322
    %v3206 = vpop.f32.mrb[0].mxu0
    %v3207 = vadd.f32 0.0, %v3206
    %v3208 = vpop.f32.mrb[0].mxu0
    %v3209 = vpop.f32.mrb[0].mxu0
    %v3210 = vadd.f32 0.0, %v3209
    %v3211 = vpop.f32.mrb[0].mxu0
    %3212 = vmatprep.mubr.bf16.mxu0 0
    %3213 = vmatmul.mubr.bf16.gmra.mrb[0].mxu0 %v325
    %v3214 = vpop.f32.mrb[0].mxu0
    %v3215 = vadd.f32 0.0, %v3214
    %v3216 = vpop.f32.mrb[0].mxu0
    %v3217 = vpop.f32.mrb[0].mxu0
    %v3218 = vadd.f32 0.0, %v3217
    %v3219 = vpop.f32.mrb[0].mxu0
    %3220 = vmatprep.mubr.bf16.mxu0 0
    %3221 = vmatmul.mubr.bf16.gmra.mrb[0].mxu0 %v328
    %v3222 = vpop.f32.mrb[0].mxu0
    %v3223 = vadd.f32 0.0, %v3222
    %v3224 = vpop.f32.mrb[0].mxu0
    %v3225 = vpop.f32.mrb[0].mxu0
    %v3226 = vadd.f32 0.0, %v3225
    %v3227 = vpop.f32.mrb[0].mxu0
    %3228 = vmatprep.mubr.bf16.mxu0 0
    %3229 = vmatmul.mubr.bf16.gmra.mrb[0].mxu0 %v331
    %v3230 = vpop.f32.mrb[0].mxu0
    %v3231 = vadd.f32 0.0, %v3230
    %v3232 = vpop.f32.mrb[0].mxu0
    %v3233 = vpop.f32.mrb[0].mxu0
    %v3234 = vadd.f32 0.0, %v3233
    %v3235 = vpop.f32.mrb[0].mxu0
    %3236 = vmatprep.mubr.bf16.mxu0 0
    %3237 = vmatmul.mubr.bf16.gmra.mrb[0].mxu0 %v334
    %v3238 = vpop.f32.mrb[0].mxu0
    %v3239 = vadd.f32 0.0, %v3238
    %v3240 = vpop.f32.mrb[0].mxu0
    %v3241 = vpop.f32.mrb[0].mxu0
    %v3242 = vadd.f32 0.0, %v3241
    %v3243 = vpop.f32.mrb[0].mxu0
    %3244 = vmatprep.mubr.bf16.mxu0 0
    %3245 = vmatmul.mubr.bf16.gmra.mrb[0].mxu0 %v337
    %v3246 = vpop.f32.mrb[0].mxu0
    %v3247 = vadd.f32 0.0, %v3246
    %v3248 = vpop.f32.mrb[0].mxu0
    %v3249 = vpop.f32.mrb[0].mxu0
    %v3250 = vadd.f32 0.0, %v3249
    %v3251 = vpop.f32.mrb[0].mxu0
    %3252 = vmatprep.mubr.bf16.mxu0 0
    %3253 = vmatmul.mubr.bf16.gmra.mrb[0].mxu0 %v340
    %v3254 = vpop.f32.mrb[0].mxu0
    %v3255 = vadd.f32 0.0, %v3254
    %v3256 = vpop.f32.mrb[0].mxu0
    %v3257 = vpop.f32.mrb[0].mxu0
    %v3258 = vadd.f32 0.0, %v3257
    %v3259 = vpop.f32.mrb[0].mxu0
    %3260 = vmatprep.mubr.bf16.mxu0 0
    %3261 = vmatmul.mubr.bf16.gmra.mrb[0].mxu0 %v343
    %v3262 = vpop.f32.mrb[0].mxu0
    %v3263 = vadd.f32 0.0, %v3262
    %v3264 = vpop.f32.mrb[0].mxu0
    %v3265 = vpop.f32.mrb[0].mxu0
    %v3266 = vadd.f32 0.0, %v3265
    %v3267 = vpop.f32.mrb[0].mxu0
    %3268 = vmatprep.mubr.bf16.mxu0 0
    %3269 = vmatmul.mubr.bf16.gmra.mrb[0].mxu0 %v346
    %v3270 = vpop.f32.mrb[0].mxu0
    %v3271 = vadd.f32 0.0, %v3270
    %v3272 = vpop.f32.mrb[0].mxu0
    %v3273 = vpop.f32.mrb[0].mxu0
    %v3274 = vadd.f32 0.0, %v3273
    %v3275 = vpop.f32.mrb[0].mxu0
    %3276 = vmatprep.mubr.bf16.mxu0 0
    %3277 = vmatmul.mubr.bf16.gmra.mrb[0].mxu0 %v349
    %v3278 = vpop.f32.mrb[0].mxu0
    %v3279 = vadd.f32 0.0, %v3278
    %v3280 = vpop.f32.mrb[0].mxu0
    %v3281 = vpop.f32.mrb[0].mxu0
    %v3282 = vadd.f32 0.0, %v3281
    %v3283 = vpop.f32.mrb[0].mxu0
    %3284 = vmatprep.mubr.bf16.mxu0 0
    %3285 = vmatmul.mubr.bf16.gmra.mrb[0].mxu0 %v352
    %v3286 = vpop.f32.mrb[0].mxu0
    %v3287 = vadd.f32 0.0, %v3286
    %v3288 = vpop.f32.mrb[0].mxu0
    %v3289 = vpop.f32.mrb[0].mxu0
    %v3290 = vadd.f32 0.0, %v3289
    %v3291 = vpop.f32.mrb[0].mxu0
    %3292 = vmatprep.mubr.bf16.mxu0 0
    %3293 = vmatmul.mubr.bf16.gmra.mrb[0].mxu0 %v355
    %v3294 = vpop.f32.mrb[0].mxu0
    %v3295 = vadd.f32 0.0, %v3294
    %v3296 = vpop.f32.mrb[0].mxu0
    %v3297 = vpop.f32.mrb[0].mxu0
    %v3298 = vadd.f32 0.0, %v3297
    %v3299 = vpop.f32.mrb[0].mxu0
    %3300 = vmatprep.mubr.bf16.mxu0 0
    %3301 = vmatmul.mubr.bf16.gmra.mrb[0].mxu0 %v358
    %v3302 = vpop.f32.mrb[0].mxu0
    %v3303 = vadd.f32 0.0, %v3302
    %v3304 = vpop.f32.mrb[0].mxu0
    %v3305 = vpop.f32.mrb[0].mxu0
    %v3306 = vadd.f32 0.0, %v3305
    %v3307 = vpop.f32.mrb[0].mxu0
    %3308 = vdwg.mxu0
    %v3309 = vpack.c.bf16 %v3114, %v3111
    %v3310 = vpack.c.bf16 %v3122, %v3119
    %v3311 = vpack.c.bf16 %v3130, %v3127
    %v3312 = vpack.c.bf16 %v3138, %v3135
    %v3313 = vpack.c.bf16 %v3146, %v3143
    %v3314 = vpack.c.bf16 %v3154, %v3151
    %v3315 = vpack.c.bf16 %v3162, %v3159
    %v3316 = vpack.c.bf16 %v3170, %v3167
    %v3317 = vpack.c.bf16 %v3178, %v3175
    %v3318 = vpack.c.bf16 %v3186, %v3183
    %v3319 = vpack.c.bf16 %v3194, %v3191
    %v3320 = vpack.c.bf16 %v3202, %v3199
    %v3321 = vpack.c.bf16 %v3210, %v3207
    %v3322 = vpack.c.bf16 %v3218, %v3215
    %v3323 = vpack.c.bf16 %v3226, %v3223
    %v3324 = vpack.c.bf16 %v3234, %v3231
    %v3325 = vpack.c.bf16 %v3242, %v3239
    %v3326 = vpack.c.bf16 %v3250, %v3247
    %v3327 = vpack.c.bf16 %v3258, %v3255
    %v3328 = vpack.c.bf16 %v3266, %v3263
    %v3329 = vpack.c.bf16 %v3274, %v3271
    %v3330 = vpack.c.bf16 %v3282, %v3279
    %v3331 = vpack.c.bf16 %v3290, %v3287
    %v3332 = vpack.c.bf16 %v3298, %v3295
    %v3333 = vpack.c.bf16 %v3306, %v3303
    %v3334 = vld [vmem:[#allocation8] sm:$0xf]
    %v3335 = vld [vmem:[#allocation8 + $0x4] sm:$0xf]
    %v3336 = vld [vmem:[#allocation8 + $0x8] sm:$0xf]
    %v3337 = vld [vmem:[#allocation8 + $0xc] sm:$0xf]
    %v3338 = vld [vmem:[#allocation8 + $0x10] sm:$0xf]
    %v3339 = vld [vmem:[#allocation8 + $0x14] sm:$0xf]
    %v3340 = vld [vmem:[#allocation8 + $0x18] sm:$0xf]
    %v3341 = vld [vmem:[#allocation8 + $0x1c] sm:$0xf]
    %v3342 = vld [vmem:[#allocation8 + $0x20] sm:$0xf]
    %v3343 = vld [vmem:[#allocation8 + $0x24] sm:$0xf]
    %v3344 = vld [vmem:[#allocation8 + $0x28] sm:$0xf]
    %v3345 = vld [vmem:[#allocation8 + $0x2c] sm:$0xf]
    %v3346 = vld [vmem:[#allocation8 + $0x30] sm:$0xf]
    %v3347 = vld [vmem:[#allocation8 + $0x34] sm:$0xf]
    %v3348 = vld [vmem:[#allocation8 + $0x38] sm:$0xf]
    %v3349 = vld [vmem:[#allocation8 + $0x3c] sm:$0xf]
    %v3350 = vld [vmem:[#allocation8 + $0x40] sm:$0xf]
    %v3351 = vld [vmem:[#allocation8 + $0x44] sm:$0xf]
    %v3352 = vld [vmem:[#allocation8 + $0x48] sm:$0xf]
    %v3353 = vld [vmem:[#allocation8 + $0x4c] sm:$0xf]
    %v3354 = vld [vmem:[#allocation8 + $0x50] sm:$0xf]
    %v3355 = vld [vmem:[#allocation8 + $0x54] sm:$0xf]
    %v3356 = vld [vmem:[#allocation8 + $0x58] sm:$0xf]
    %v3357 = vld [vmem:[#allocation8 + $0x5c] sm:$0xf]
    %v3358 = vld [vmem:[#allocation8 + $0x60] sm:$0xf]
    %v3359 = vld [vmem:[#allocation8 + $0x64] sm:$0xf]
    %v3360 = vld [vmem:[#allocation8 + $0x68] sm:$0xf]
    %v3361 = vld [vmem:[#allocation8 + $0x6c] sm:$0xf]
    %v3362 = vld [vmem:[#allocation8 + $0x70] sm:$0xf]
    %v3363 = vld [vmem:[#allocation8 + $0x74] sm:$0xf]
    %v3364 = vld [vmem:[#allocation8 + $0x78] sm:$0xf]
    %v3365 = vld [vmem:[#allocation8 + $0x7c] sm:$0xf]
    %v3366 = vld [vmem:[#allocation8 + $0x80] sm:$0xf]
    %v3367 = vld [vmem:[#allocation8 + $0x84] sm:$0xf]
    %v3368 = vld [vmem:[#allocation8 + $0x88] sm:$0xf]
    %v3369 = vld [vmem:[#allocation8 + $0x8c] sm:$0xf]
    %v3370 = vld [vmem:[#allocation8 + $0x90] sm:$0xf]
    %v3371 = vld [vmem:[#allocation8 + $0x94] sm:$0xf]
    %v3372 = vld [vmem:[#allocation8 + $0x98] sm:$0xf]
    %v3373 = vld [vmem:[#allocation8 + $0x9c] sm:$0xf]
    %v3374 = vld [vmem:[#allocation8 + $0xa0] sm:$0xf]
    %v3375 = vld [vmem:[#allocation8 + $0xa4] sm:$0xf]
    %v3376 = vld [vmem:[#allocation8 + $0xa8] sm:$0xf]
    %v3377 = vld [vmem:[#allocation8 + $0xac] sm:$0xf]
    %v3378 = vld [vmem:[#allocation8 + $0xb0] sm:$0xf]
    %v3379 = vld [vmem:[#allocation8 + $0xb4] sm:$0xf]
    %v3380 = vld [vmem:[#allocation8 + $0xb8] sm:$0xf]
    %v3381 = vld [vmem:[#allocation8 + $0xbc] sm:$0xf]
    %v3382 = vld [vmem:[#allocation8 + $0xc0] sm:$0xf]
    %v3383 = vld [vmem:[#allocation8 + $0xc4] sm:$0xf]
    %v3384 = vld [vmem:[#allocation8 + $0xc8] sm:$0xf]
    %v3385 = vld [vmem:[#allocation8 + $0xcc] sm:$0xf]
    %v3386 = vld [vmem:[#allocation8 + $0xd0] sm:$0xf]
    %v3387 = vld [vmem:[#allocation8 + $0xd4] sm:$0xf]
    %v3388 = vld [vmem:[#allocation8 + $0xd8] sm:$0xf]
    %v3389 = vld [vmem:[#allocation8 + $0xdc] sm:$0xf]
    %v3390 = vld [vmem:[#allocation8 + $0xe0] sm:$0xf]
    %v3391 = vld [vmem:[#allocation8 + $0xe4] sm:$0xf]
    %v3392 = vld [vmem:[#allocation8 + $0xe8] sm:$0xf]
    %v3393 = vld [vmem:[#allocation8 + $0xec] sm:$0xf]
    %v3394 = vld [vmem:[#allocation8 + $0xf0] sm:$0xf]
    %v3395 = vld [vmem:[#allocation8 + $0xf4] sm:$0xf]
    %v3396 = vld [vmem:[#allocation8 + $0xf8] sm:$0xf]
    %v3397 = vld [vmem:[#allocation8 + $0xfc] sm:$0xf]
    %v3398 = vld [vmem:[#allocation8 + $0x100] sm:$0xf]
    %v3399 = vld [vmem:[#allocation8 + $0x104] sm:$0xf]
    %v3400 = vld [vmem:[#allocation8 + $0x108] sm:$0xf]
    %v3401 = vld [vmem:[#allocation8 + $0x10c] sm:$0xf]
    %v3402 = vld [vmem:[#allocation8 + $0x110] sm:$0xf]
    %v3403 = vld [vmem:[#allocation8 + $0x114] sm:$0xf]
    %v3404 = vld [vmem:[#allocation8 + $0x118] sm:$0xf]
    %v3405 = vld [vmem:[#allocation8 + $0x11c] sm:$0xf]
    %v3406 = vld [vmem:[#allocation8 + $0x120] sm:$0xf]
    %v3407 = vld [vmem:[#allocation8 + $0x124] sm:$0xf]
    %v3408 = vld [vmem:[#allocation8 + $0x128] sm:$0xf]
    %v3409 = vld [vmem:[#allocation8 + $0x12c] sm:$0xf]
    %v3410 = vld [vmem:[#allocation8 + $0x130] sm:$0xf]
    %v3411 = vld [vmem:[#allocation8 + $0x134] sm:$0xf]
    %v3412 = vld [vmem:[#allocation8 + $0x138] sm:$0xf]
    %v3413 = vld [vmem:[#allocation8 + $0x13c] sm:$0xf]
    %v3414 = vld [vmem:[#allocation8 + $0x140] sm:$0xf]
    %v3415 = vld [vmem:[#allocation8 + $0x144] sm:$0xf]
    %v3416 = vld [vmem:[#allocation8 + $0x148] sm:$0xf]
    %v3417 = vld [vmem:[#allocation8 + $0x14c] sm:$0xf]
    %v3418 = vld [vmem:[#allocation8 + $0x150] sm:$0xf]
    %v3419 = vld [vmem:[#allocation8 + $0x154] sm:$0xf]
    %v3420 = vld [vmem:[#allocation8 + $0x158] sm:$0xf]
    %v3421 = vld [vmem:[#allocation8 + $0x15c] sm:$0xf]
    %v3422 = vld [vmem:[#allocation8 + $0x160] sm:$0xf]
    %v3423 = vld [vmem:[#allocation8 + $0x164] sm:$0xf]
    %v3424 = vld [vmem:[#allocation8 + $0x168] sm:$0xf]
    %v3425 = vld [vmem:[#allocation8 + $0x16c] sm:$0xf]
    %v3426 = vld [vmem:[#allocation8 + $0x170] sm:$0xf]
    %v3427 = vld [vmem:[#allocation8 + $0x174] sm:$0xf]
    %v3428 = vld [vmem:[#allocation8 + $0x178] sm:$0xf]
    %v3429 = vld [vmem:[#allocation8 + $0x17c] sm:$0xf]
    %v3430 = vld [vmem:[#allocation8 + $0x180] sm:$0xf]
    %v3431 = vld [vmem:[#allocation8 + $0x184] sm:$0xf]
    %v3432 = vld [vmem:[#allocation8 + $0x188] sm:$0xf]
    %v3433 = vld [vmem:[#allocation8 + $0x18c] sm:$0xf]
    %v3434 = vld [vmem:[#allocation8 + $0x190] sm:$0xf]
    %v3435 = vld [vmem:[#allocation8 + $0x194] sm:$0xf]
    %v3436 = vld [vmem:[#allocation8 + $0x198] sm:$0xf]
    %v3437 = vld [vmem:[#allocation8 + $0x19c] sm:$0xf]
    %v3438 = vld [vmem:[#allocation8 + $0x1a0] sm:$0xf]
    %v3439 = vld [vmem:[#allocation8 + $0x1a4] sm:$0xf]
    %v3440 = vld [vmem:[#allocation8 + $0x1a8] sm:$0xf]
    %v3441 = vld [vmem:[#allocation8 + $0x1ac] sm:$0xf]
    %v3442 = vld [vmem:[#allocation8 + $0x1b0] sm:$0xf]
    %v3443 = vld [vmem:[#allocation8 + $0x1b4] sm:$0xf]
    %v3444 = vld [vmem:[#allocation8 + $0x1b8] sm:$0xf]
    %v3445 = vld [vmem:[#allocation8 + $0x1bc] sm:$0xf]
    %v3446 = vld [vmem:[#allocation8 + $0x1c0] sm:$0xf]
    %v3447 = vld [vmem:[#allocation8 + $0x1c4] sm:$0xf]
    %v3448 = vld [vmem:[#allocation8 + $0x1c8] sm:$0xf]
    %v3449 = vld [vmem:[#allocation8 + $0x1cc] sm:$0xf]
    %v3450 = vld [vmem:[#allocation8 + $0x1d0] sm:$0xf]
    %v3451 = vld [vmem:[#allocation8 + $0x1d4] sm:$0xf]
    %v3452 = vld [vmem:[#allocation8 + $0x1d8] sm:$0xf]
    %v3453 = vld [vmem:[#allocation8 + $0x1dc] sm:$0xf]
    %v3454 = vld [vmem:[#allocation8 + $0x1e0] sm:$0xf]
    %v3455 = vld [vmem:[#allocation8 + $0x1e4] sm:$0xf]
    %v3456 = vld [vmem:[#allocation8 + $0x1e8] sm:$0xf]
    %v3457 = vld [vmem:[#allocation8 + $0x1ec] sm:$0xf]
    %v3458 = vld [vmem:[#allocation8 + $0x1f0] sm:$0xf]
    %v3459 = vld [vmem:[#allocation8 + $0x1f4] sm:$0xf]
    %v3460 = vld [vmem:[#allocation8 + $0x1f8] sm:$0xf]
    %v3461 = vld [vmem:[#allocation8 + $0x1fc] sm:$0xf]
    %v3462 = vld [vmem:[#allocation8 + $0x200] sm:$0xf]
    %v3463 = vld [vmem:[#allocation8 + $0x204] sm:$0xf]
    %v3464 = vld [vmem:[#allocation8 + $0x208] sm:$0xf]
    %v3465 = vld [vmem:[#allocation8 + $0x20c] sm:$0xf]
    %v3466 = vld [vmem:[#allocation8 + $0x210] sm:$0xf]
    %v3467 = vld [vmem:[#allocation8 + $0x214] sm:$0xf]
    %v3468 = vld [vmem:[#allocation8 + $0x218] sm:$0xf]
    %v3469 = vld [vmem:[#allocation8 + $0x21c] sm:$0xf]
    %v3470 = vld [vmem:[#allocation8 + $0x220] sm:$0xf]
    %v3471 = vld [vmem:[#allocation8 + $0x224] sm:$0xf]
    %v3472 = vld [vmem:[#allocation8 + $0x228] sm:$0xf]
    %v3473 = vld [vmem:[#allocation8 + $0x22c] sm:$0xf]
    %v3474 = vld [vmem:[#allocation8 + $0x230] sm:$0xf]
    %v3475 = vld [vmem:[#allocation8 + $0x234] sm:$0xf]
    %v3476 = vld [vmem:[#allocation8 + $0x238] sm:$0xf]
    %v3477 = vld [vmem:[#allocation8 + $0x23c] sm:$0xf]
    %v3478 = vld [vmem:[#allocation8 + $0x240] sm:$0xf]
    %v3479 = vld [vmem:[#allocation8 + $0x244] sm:$0xf]
    %v3480 = vld [vmem:[#allocation8 + $0x248] sm:$0xf]
    %v3481 = vld [vmem:[#allocation8 + $0x24c] sm:$0xf]
    %v3482 = vld [vmem:[#allocation8 + $0x250] sm:$0xf]
    %v3483 = vld [vmem:[#allocation8 + $0x254] sm:$0xf]
    %v3484 = vld [vmem:[#allocation8 + $0x258] sm:$0xf]
    %v3485 = vld [vmem:[#allocation8 + $0x25c] sm:$0xf]
    %v3486 = vld [vmem:[#allocation8 + $0x260] sm:$0xf]
    %v3487 = vld [vmem:[#allocation8 + $0x264] sm:$0xf]
    %v3488 = vld [vmem:[#allocation8 + $0x268] sm:$0xf]
    %v3489 = vld [vmem:[#allocation8 + $0x26c] sm:$0xf]
    %v3490 = vld [vmem:[#allocation8 + $0x270] sm:$0xf]
    %v3491 = vld [vmem:[#allocation8 + $0x274] sm:$0xf]
    %v3492 = vld [vmem:[#allocation8 + $0x278] sm:$0xf]
    %v3493 = vld [vmem:[#allocation8 + $0x27c] sm:$0xf]
    %v3494 = vld [vmem:[#allocation8 + $0x280] sm:$0xf]
    %v3495 = vld [vmem:[#allocation8 + $0x284] sm:$0xf]
    %v3496 = vld [vmem:[#allocation8 + $0x288] sm:$0xf]
    %v3497 = vld [vmem:[#allocation8 + $0x28c] sm:$0xf]
    %v3498 = vld [vmem:[#allocation8 + $0x290] sm:$0xf]
    %v3499 = vld [vmem:[#allocation8 + $0x294] sm:$0xf]
    %v3500 = vld [vmem:[#allocation8 + $0x298] sm:$0xf]
    %v3501 = vld [vmem:[#allocation8 + $0x29c] sm:$0xf]
    %v3502 = vld [vmem:[#allocation8 + $0x2a0] sm:$0xf]
    %v3503 = vld [vmem:[#allocation8 + $0x2a4] sm:$0xf]
    %v3504 = vld [vmem:[#allocation8 + $0x2a8] sm:$0xf]
    %v3505 = vld [vmem:[#allocation8 + $0x2ac] sm:$0xf]
    %v3506 = vld [vmem:[#allocation8 + $0x2b0] sm:$0xf]
    %v3507 = vld [vmem:[#allocation8 + $0x2b4] sm:$0xf]
    %v3508 = vld [vmem:[#allocation8 + $0x2b8] sm:$0xf]
    %v3509 = vld [vmem:[#allocation8 + $0x2bc] sm:$0xf]
    %v3510 = vld [vmem:[#allocation8 + $0x2c0] sm:$0xf]
    %v3511 = vld [vmem:[#allocation8 + $0x2c4] sm:$0xf]
    %v3512 = vld [vmem:[#allocation8 + $0x2c8] sm:$0xf]
    %v3513 = vld [vmem:[#allocation8 + $0x2cc] sm:$0xf]
    %v3514 = vld [vmem:[#allocation8 + $0x2d0] sm:$0xf]
    %v3515 = vld [vmem:[#allocation8 + $0x2d4] sm:$0xf]
    %v3516 = vld [vmem:[#allocation8 + $0x2d8] sm:$0xf]
    %v3517 = vld [vmem:[#allocation8 + $0x2dc] sm:$0xf]
    %v3518 = vld [vmem:[#allocation8 + $0x2e0] sm:$0xf]
    %v3519 = vld [vmem:[#allocation8 + $0x2e4] sm:$0xf]
    %v3520 = vld [vmem:[#allocation8 + $0x2e8] sm:$0xf]
    %v3521 = vld [vmem:[#allocation8 + $0x2ec] sm:$0xf]
    %v3522 = vld [vmem:[#allocation8 + $0x2f0] sm:$0xf]
    %v3523 = vld [vmem:[#allocation8 + $0x2f4] sm:$0xf]
    %v3524 = vld [vmem:[#allocation8 + $0x2f8] sm:$0xf]
    %v3525 = vld [vmem:[#allocation8 + $0x2fc] sm:$0xf]
    %v3526 = vld [vmem:[#allocation8 + $0x300] sm:$0xf]
    %v3527 = vld [vmem:[#allocation8 + $0x304] sm:$0xf]
    %v3528 = vld [vmem:[#allocation8 + $0x308] sm:$0xf]
    %v3529 = vld [vmem:[#allocation8 + $0x30c] sm:$0xf]
    %v3530 = vld [vmem:[#allocation8 + $0x310] sm:$0xf]
    %v3531 = vld [vmem:[#allocation8 + $0x314] sm:$0xf]
    %v3532 = vld [vmem:[#allocation8 + $0x318] sm:$0xf]
    %v3533 = vld [vmem:[#allocation8 + $0x31c] sm:$0xf]
    %v3534 = vld [vmem:[#allocation8 + $0x320] sm:$0xf]
    %v3535 = vld [vmem:[#allocation8 + $0x324] sm:$0xf]
    %v3536 = vld [vmem:[#allocation8 + $0x328] sm:$0xf]
    %v3537 = vld [vmem:[#allocation8 + $0x32c] sm:$0xf]
    %v3538 = vld [vmem:[#allocation8 + $0x330] sm:$0xf]
    %v3539 = vld [vmem:[#allocation8 + $0x334] sm:$0xf]
    %v3540 = vld [vmem:[#allocation8 + $0x338] sm:$0xf]
    %v3541 = vld [vmem:[#allocation8 + $0x33c] sm:$0xf]
    %v3542 = vld [vmem:[#allocation8 + $0x340] sm:$0xf]
    %v3543 = vld [vmem:[#allocation8 + $0x344] sm:$0xf]
    %v3544 = vld [vmem:[#allocation8 + $0x348] sm:$0xf]
    %v3545 = vld [vmem:[#allocation8 + $0x34c] sm:$0xf]
    %v3546 = vld [vmem:[#allocation8 + $0x350] sm:$0xf]
    %v3547 = vld [vmem:[#allocation8 + $0x354] sm:$0xf]
    %v3548 = vld [vmem:[#allocation8 + $0x358] sm:$0xf]
    %v3549 = vld [vmem:[#allocation8 + $0x35c] sm:$0xf]
    %v3550 = vld [vmem:[#allocation8 + $0x360] sm:$0xf]
    %v3551 = vld [vmem:[#allocation8 + $0x364] sm:$0xf]
    %v3552 = vld [vmem:[#allocation8 + $0x368] sm:$0xf]
    %v3553 = vld [vmem:[#allocation8 + $0x36c] sm:$0xf]
    %v3554 = vld [vmem:[#allocation8 + $0x370] sm:$0xf]
    %v3555 = vld [vmem:[#allocation8 + $0x374] sm:$0xf]
    %v3556 = vld [vmem:[#allocation8 + $0x378] sm:$0xf]
    %v3557 = vld [vmem:[#allocation8 + $0x37c] sm:$0xf]
    %v3558 = vld [vmem:[#allocation8 + $0x380] sm:$0xf]
    %v3559 = vld [vmem:[#allocation8 + $0x384] sm:$0xf]
    %v3560 = vld [vmem:[#allocation8 + $0x388] sm:$0xf]
    %v3561 = vld [vmem:[#allocation8 + $0x38c] sm:$0xf]
    %v3562 = vld [vmem:[#allocation8 + $0x390] sm:$0xf]
    %v3563 = vld [vmem:[#allocation8 + $0x394] sm:$0xf]
    %v3564 = vld [vmem:[#allocation8 + $0x398] sm:$0xf]
    %v3565 = vld [vmem:[#allocation8 + $0x39c] sm:$0xf]
    %v3566 = vld [vmem:[#allocation8 + $0x3a0] sm:$0xf]
    %v3567 = vld [vmem:[#allocation8 + $0x3a4] sm:$0xf]
    %v3568 = vld [vmem:[#allocation8 + $0x3a8] sm:$0xf]
    %v3569 = vld [vmem:[#allocation8 + $0x3ac] sm:$0xf]
    %v3570 = vld [vmem:[#allocation8 + $0x3b0] sm:$0xf]
    %v3571 = vld [vmem:[#allocation8 + $0x3b4] sm:$0xf]
    %v3572 = vld [vmem:[#allocation8 + $0x3b8] sm:$0xf]
    %v3573 = vld [vmem:[#allocation8 + $0x3bc] sm:$0xf]
    %v3574 = vld [vmem:[#allocation8 + $0x3c0] sm:$0xf]
    %v3575 = vld [vmem:[#allocation8 + $0x3c4] sm:$0xf]
    %v3576 = vld [vmem:[#allocation8 + $0x3c8] sm:$0xf]
    %v3577 = vld [vmem:[#allocation8 + $0x3cc] sm:$0xf]
    %v3578 = vld [vmem:[#allocation8 + $0x3d0] sm:$0xf]
    %v3579 = vld [vmem:[#allocation8 + $0x3d4] sm:$0xf]
    %v3580 = vld [vmem:[#allocation8 + $0x3d8] sm:$0xf]
    %v3581 = vld [vmem:[#allocation8 + $0x3dc] sm:$0xf]
    %v3582 = vld [vmem:[#allocation8 + $0x3e0] sm:$0xf]
    %v3583 = vld [vmem:[#allocation8 + $0x3e4] sm:$0xf]
    %v3584 = vld [vmem:[#allocation8 + $0x3e8] sm:$0xf]
    %v3585 = vld [vmem:[#allocation8 + $0x3ec] sm:$0xf]
    %v3586 = vld [vmem:[#allocation8 + $0x3f0] sm:$0xf]
    %v3587 = vld [vmem:[#allocation8 + $0x3f4] sm:$0xf]
    %v3588 = vld [vmem:[#allocation8 + $0x3f8] sm:$0xf]
    %v3589 = vld [vmem:[#allocation8 + $0x3fc] sm:$0xf]
    %v3590 = vld [vmem:[#allocation8 + $0x400] sm:$0xf]
    %v3591 = vld [vmem:[#allocation8 + $0x404] sm:$0xf]
    %v3592 = vld [vmem:[#allocation8 + $0x408] sm:$0xf]
    %v3593 = vld [vmem:[#allocation8 + $0x40c] sm:$0xf]
    %v3594 = vld [vmem:[#allocation8 + $0x410] sm:$0xf]
    %v3595 = vld [vmem:[#allocation8 + $0x414] sm:$0xf]
    %v3596 = vld [vmem:[#allocation8 + $0x418] sm:$0xf]
    %v3597 = vld [vmem:[#allocation8 + $0x41c] sm:$0xf]
    %v3598 = vld [vmem:[#allocation8 + $0x420] sm:$0xf]
    %v3599 = vld [vmem:[#allocation8 + $0x424] sm:$0xf]
    %v3600 = vld [vmem:[#allocation8 + $0x428] sm:$0xf]
    %v3601 = vld [vmem:[#allocation8 + $0x42c] sm:$0xf]
    %v3602 = vld [vmem:[#allocation8 + $0x430] sm:$0xf]
    %v3603 = vld [vmem:[#allocation8 + $0x434] sm:$0xf]
    %v3604 = vld [vmem:[#allocation8 + $0x438] sm:$0xf]
    %v3605 = vld [vmem:[#allocation8 + $0x43c] sm:$0xf]
    %v3606 = vld [vmem:[#allocation8 + $0x440] sm:$0xf]
    %v3607 = vld [vmem:[#allocation8 + $0x444] sm:$0xf]
    %v3608 = vld [vmem:[#allocation8 + $0x448] sm:$0xf]
    %v3609 = vld [vmem:[#allocation8 + $0x44c] sm:$0xf]
    %v3610 = vld [vmem:[#allocation8 + $0x450] sm:$0xf]
    %v3611 = vld [vmem:[#allocation8 + $0x454] sm:$0xf]
    %v3612 = vld [vmem:[#allocation8 + $0x458] sm:$0xf]
    %v3613 = vld [vmem:[#allocation8 + $0x45c] sm:$0xf]
    %v3614 = vld [vmem:[#allocation8 + $0x460] sm:$0xf]
    %v3615 = vld [vmem:[#allocation8 + $0x464] sm:$0xf]
    %v3616 = vld [vmem:[#allocation8 + $0x468] sm:$0xf]
    %v3617 = vld [vmem:[#allocation8 + $0x46c] sm:$0xf]
    %v3618 = vld [vmem:[#allocation8 + $0x470] sm:$0xf]
    %v3619 = vld [vmem:[#allocation8 + $0x474] sm:$0xf]
    %v3620 = vld [vmem:[#allocation8 + $0x478] sm:$0xf]
    %v3621 = vld [vmem:[#allocation8 + $0x47c] sm:$0xf]
    %v3622 = vld [vmem:[#allocation8 + $0x480] sm:$0xf]
    %v3623 = vld [vmem:[#allocation8 + $0x484] sm:$0xf]
    %v3624 = vld [vmem:[#allocation8 + $0x488] sm:$0xf]
    %v3625 = vld [vmem:[#allocation8 + $0x48c] sm:$0xf]
    %v3626 = vld [vmem:[#allocation8 + $0x490] sm:$0xf]
    %v3627 = vld [vmem:[#allocation8 + $0x494] sm:$0xf]
    %v3628 = vld [vmem:[#allocation8 + $0x498] sm:$0xf]
    %v3629 = vld [vmem:[#allocation8 + $0x49c] sm:$0xf]
    %v3630 = vld [vmem:[#allocation8 + $0x4a0] sm:$0xf]
    %v3631 = vld [vmem:[#allocation8 + $0x4a4] sm:$0xf]
    %v3632 = vld [vmem:[#allocation8 + $0x4a8] sm:$0xf]
    %v3633 = vld [vmem:[#allocation8 + $0x4ac] sm:$0xf]
    %v3634 = vld [vmem:[#allocation8 + $0x4b0] sm:$0xf]
    %v3635 = vld [vmem:[#allocation8 + $0x4b4] sm:$0xf]
    %v3636 = vld [vmem:[#allocation8 + $0x4b8] sm:$0xf]
    %v3637 = vld [vmem:[#allocation8 + $0x4bc] sm:$0xf]
    %v3638 = vld [vmem:[#allocation8 + $0x4c0] sm:$0xf]
    %v3639 = vld [vmem:[#allocation8 + $0x4c4] sm:$0xf]
    %v3640 = vld [vmem:[#allocation8 + $0x4c8] sm:$0xf]
    %v3641 = vld [vmem:[#allocation8 + $0x4cc] sm:$0xf]
    %v3642 = vld [vmem:[#allocation8 + $0x4d0] sm:$0xf]
    %v3643 = vld [vmem:[#allocation8 + $0x4d4] sm:$0xf]
    %v3644 = vld [vmem:[#allocation8 + $0x4d8] sm:$0xf]
    %v3645 = vld [vmem:[#allocation8 + $0x4dc] sm:$0xf]
    %v3646 = vld [vmem:[#allocation8 + $0x4e0] sm:$0xf]
    %v3647 = vld [vmem:[#allocation8 + $0x4e4] sm:$0xf]
    %v3648 = vld [vmem:[#allocation8 + $0x4e8] sm:$0xf]
    %v3649 = vld [vmem:[#allocation8 + $0x4ec] sm:$0xf]
    %v3650 = vld [vmem:[#allocation8 + $0x4f0] sm:$0xf]
    %v3651 = vld [vmem:[#allocation8 + $0x4f4] sm:$0xf]
    %v3652 = vld [vmem:[#allocation8 + $0x4f8] sm:$0xf]
    %v3653 = vld [vmem:[#allocation8 + $0x4fc] sm:$0xf]
    %v3654 = vld [vmem:[#allocation8 + $0x500] sm:$0xf]
    %v3655 = vld [vmem:[#allocation8 + $0x504] sm:$0xf]
    %v3656 = vld [vmem:[#allocation8 + $0x508] sm:$0xf]
    %v3657 = vld [vmem:[#allocation8 + $0x50c] sm:$0xf]
    %v3658 = vld [vmem:[#allocation8 + $0x510] sm:$0xf]
    %v3659 = vld [vmem:[#allocation8 + $0x514] sm:$0xf]
    %v3660 = vld [vmem:[#allocation8 + $0x518] sm:$0xf]
    %v3661 = vld [vmem:[#allocation8 + $0x51c] sm:$0xf]
    %v3662 = vld [vmem:[#allocation8 + $0x520] sm:$0xf]
    %v3663 = vld [vmem:[#allocation8 + $0x524] sm:$0xf]
    %v3664 = vld [vmem:[#allocation8 + $0x528] sm:$0xf]
    %v3665 = vld [vmem:[#allocation8 + $0x52c] sm:$0xf]
    %v3666 = vld [vmem:[#allocation8 + $0x530] sm:$0xf]
    %v3667 = vld [vmem:[#allocation8 + $0x534] sm:$0xf]
    %v3668 = vld [vmem:[#allocation8 + $0x538] sm:$0xf]
    %v3669 = vld [vmem:[#allocation8 + $0x53c] sm:$0xf]
    %v3670 = vld [vmem:[#allocation8 + $0x540] sm:$0xf]
    %v3671 = vld [vmem:[#allocation8 + $0x544] sm:$0xf]
    %v3672 = vld [vmem:[#allocation8 + $0x548] sm:$0xf]
    %v3673 = vld [vmem:[#allocation8 + $0x54c] sm:$0xf]
    %v3674 = vld [vmem:[#allocation8 + $0x550] sm:$0xf]
    %v3675 = vld [vmem:[#allocation8 + $0x554] sm:$0xf]
    %v3676 = vld [vmem:[#allocation8 + $0x558] sm:$0xf]
    %v3677 = vld [vmem:[#allocation8 + $0x55c] sm:$0xf]
    %v3678 = vld [vmem:[#allocation8 + $0x560] sm:$0xf]
    %v3679 = vld [vmem:[#allocation8 + $0x564] sm:$0xf]
    %v3680 = vld [vmem:[#allocation8 + $0x568] sm:$0xf]
    %v3681 = vld [vmem:[#allocation8 + $0x56c] sm:$0xf]
    %v3682 = vld [vmem:[#allocation8 + $0x570] sm:$0xf]
    %v3683 = vld [vmem:[#allocation8 + $0x574] sm:$0xf]
    %v3684 = vld [vmem:[#allocation8 + $0x578] sm:$0xf]
    %v3685 = vld [vmem:[#allocation8 + $0x57c] sm:$0xf]
    %v3686 = vld [vmem:[#allocation8 + $0x580] sm:$0xf]
    %v3687 = vld [vmem:[#allocation8 + $0x584] sm:$0xf]
    %v3688 = vld [vmem:[#allocation8 + $0x588] sm:$0xf]
    %v3689 = vld [vmem:[#allocation8 + $0x58c] sm:$0xf]
    %v3690 = vld [vmem:[#allocation8 + $0x590] sm:$0xf]
    %v3691 = vld [vmem:[#allocation8 + $0x594] sm:$0xf]
    %v3692 = vld [vmem:[#allocation8 + $0x598] sm:$0xf]
    %v3693 = vld [vmem:[#allocation8 + $0x59c] sm:$0xf]
    %v3694 = vld [vmem:[#allocation8 + $0x5a0] sm:$0xf]
    %v3695 = vld [vmem:[#allocation8 + $0x5a4] sm:$0xf]
    %v3696 = vld [vmem:[#allocation8 + $0x5a8] sm:$0xf]
    %v3697 = vld [vmem:[#allocation8 + $0x5ac] sm:$0xf]
    %v3698 = vld [vmem:[#allocation8 + $0x5b0] sm:$0xf]
    %v3699 = vld [vmem:[#allocation8 + $0x5b4] sm:$0xf]
    %v3700 = vld [vmem:[#allocation8 + $0x5b8] sm:$0xf]
    %v3701 = vld [vmem:[#allocation8 + $0x5bc] sm:$0xf]
    %v3702 = vld [vmem:[#allocation8 + $0x5c0] sm:$0xf]
    %v3703 = vld [vmem:[#allocation8 + $0x5c4] sm:$0xf]
    %v3704 = vld [vmem:[#allocation8 + $0x5c8] sm:$0xf]
    %v3705 = vld [vmem:[#allocation8 + $0x5cc] sm:$0xf]
    %v3706 = vld [vmem:[#allocation8 + $0x5d0] sm:$0xf]
    %v3707 = vld [vmem:[#allocation8 + $0x5d4] sm:$0xf]
    %v3708 = vld [vmem:[#allocation8 + $0x5d8] sm:$0xf]
    %v3709 = vld [vmem:[#allocation8 + $0x5dc] sm:$0xf]
    %v3710 = vld [vmem:[#allocation8 + $0x5e0] sm:$0xf]
    %v3711 = vld [vmem:[#allocation8 + $0x5e4] sm:$0xf]
    %v3712 = vld [vmem:[#allocation8 + $0x5e8] sm:$0xf]
    %v3713 = vld [vmem:[#allocation8 + $0x5ec] sm:$0xf]
    %v3714 = vld [vmem:[#allocation8 + $0x5f0] sm:$0xf]
    %v3715 = vld [vmem:[#allocation8 + $0x5f4] sm:$0xf]
    %v3716 = vld [vmem:[#allocation8 + $0x5f8] sm:$0xf]
    %v3717 = vld [vmem:[#allocation8 + $0x5fc] sm:$0xf]
    %v3718 = vld [vmem:[#allocation8 + $0x600] sm:$0xf]
    %v3719 = vld [vmem:[#allocation8 + $0x604] sm:$0xf]
    %v3720 = vld [vmem:[#allocation8 + $0x608] sm:$0xf]
    %v3721 = vld [vmem:[#allocation8 + $0x60c] sm:$0xf]
    %v3722 = vld [vmem:[#allocation8 + $0x610] sm:$0xf]
    %v3723 = vld [vmem:[#allocation8 + $0x614] sm:$0xf]
    %v3724 = vld [vmem:[#allocation8 + $0x618] sm:$0xf]
    %v3725 = vld [vmem:[#allocation8 + $0x61c] sm:$0xf]
    %v3726 = vld [vmem:[#allocation8 + $0x620] sm:$0xf]
    %v3727 = vld [vmem:[#allocation8 + $0x624] sm:$0xf]
    %v3728 = vld [vmem:[#allocation8 + $0x628] sm:$0xf]
    %v3729 = vld [vmem:[#allocation8 + $0x62c] sm:$0xf]
    %v3730 = vld [vmem:[#allocation8 + $0x630] sm:$0xf]
    %v3731 = vld [vmem:[#allocation8 + $0x634] sm:$0xf]
    %v3732 = vld [vmem:[#allocation8 + $0x638] sm:$0xf]
    %v3733 = vld [vmem:[#allocation8 + $0x63c] sm:$0xf]
    %v3734 = vld [vmem:[#allocation8 + $0x640] sm:$0xf]
    %v3735 = vld [vmem:[#allocation8 + $0x644] sm:$0xf]
    %v3736 = vld [vmem:[#allocation8 + $0x648] sm:$0xf]
    %v3737 = vld [vmem:[#allocation8 + $0x64c] sm:$0xf]
    %v3738 = vld [vmem:[#allocation8 + $0x650] sm:$0xf]
    %v3739 = vld [vmem:[#allocation8 + $0x654] sm:$0xf]
    %v3740 = vld [vmem:[#allocation8 + $0x658] sm:$0xf]
    %v3741 = vld [vmem:[#allocation8 + $0x65c] sm:$0xf]
    %v3742 = vld [vmem:[#allocation8 + $0x660] sm:$0xf]
    %v3743 = vld [vmem:[#allocation8 + $0x664] sm:$0xf]
    %v3744 = vld [vmem:[#allocation8 + $0x668] sm:$0xf]
    %v3745 = vld [vmem:[#allocation8 + $0x66c] sm:$0xf]
    %v3746 = vld [vmem:[#allocation8 + $0x670] sm:$0xf]
    %v3747 = vld [vmem:[#allocation8 + $0x674] sm:$0xf]
    %v3748 = vld [vmem:[#allocation8 + $0x678] sm:$0xf]
    %v3749 = vld [vmem:[#allocation8 + $0x67c] sm:$0xf]
    %v3750 = vld [vmem:[#allocation10] sm:$0x1]
    %v3752 = vlaneseq
    %v3753 = vshrl.u32 %v3752, 7
    %v3754 = vsub.s32 0, %v3753
    %v3755 = vrot.slane %v3750, %v3754
    %v4173 = vunpack.c.l.b16 %v3334
    %v4174 = vunpack.c.l.b16 %v3335
    %v4175 = vunpack.c.l.b16 %v3336
    %v4176 = vunpack.c.l.b16 %v3337
    %v4177 = vunpack.c.l.b16 %v3338
    %v4178 = vunpack.c.l.b16 %v3339
    %v4179 = vunpack.c.l.b16 %v3340
    %v4180 = vunpack.c.l.b16 %v3341
    %v4181 = vunpack.c.l.b16 %v3342
    %v4182 = vunpack.c.l.b16 %v3343
    %v4183 = vunpack.c.l.b16 %v3344
    %v4184 = vunpack.c.l.b16 %v3345
    %v4185 = vunpack.c.l.b16 %v3346
    %v4186 = vunpack.c.l.b16 %v3347
    %v4187 = vunpack.c.l.b16 %v3348
    %v4188 = vunpack.c.l.b16 %v3349
    %v4189 = vunpack.c.l.b16 %v3350
    %v4190 = vunpack.c.l.b16 %v3351
    %v4191 = vunpack.c.l.b16 %v3352
    %v4192 = vunpack.c.l.b16 %v3353
    %v4193 = vunpack.c.l.b16 %v3354
    %v4194 = vunpack.c.l.b16 %v3355
    %v4195 = vunpack.c.l.b16 %v3356
    %v4196 = vunpack.c.l.b16 %v3357
    %v4197 = vunpack.c.l.b16 %v3358
    %v4198 = vunpack.c.l.b16 %v3359
    %v4199 = vunpack.c.l.b16 %v3360
    %v4200 = vunpack.c.l.b16 %v3361
    %v4201 = vunpack.c.l.b16 %v3362
    %v4202 = vunpack.c.l.b16 %v3363
    %v4203 = vunpack.c.l.b16 %v3364
    %v4204 = vunpack.c.l.b16 %v3365
    %v4205 = vunpack.c.l.b16 %v3366
    %v4206 = vunpack.c.l.b16 %v3367
    %v4207 = vunpack.c.l.b16 %v3368
    %v4208 = vunpack.c.l.b16 %v3369
    %v4209 = vunpack.c.l.b16 %v3370
    %v4210 = vunpack.c.l.b16 %v3371
    %v4211 = vunpack.c.l.b16 %v3372
    %v4212 = vunpack.c.l.b16 %v3373
    %v4213 = vunpack.c.l.b16 %v3374
    %v4214 = vunpack.c.l.b16 %v3375
    %v4215 = vunpack.c.l.b16 %v3376
    %v4216 = vunpack.c.l.b16 %v3377
    %v4217 = vunpack.c.l.b16 %v3378
    %v4218 = vunpack.c.l.b16 %v3379
    %v4219 = vunpack.c.l.b16 %v3380
    %v4220 = vunpack.c.l.b16 %v3381
    %v4221 = vunpack.c.l.b16 %v3382
    %v4222 = vunpack.c.l.b16 %v3383
    %v4223 = vunpack.c.l.b16 %v3384
    %v4224 = vunpack.c.l.b16 %v3385
    %v4225 = vunpack.c.l.b16 %v3386
    %v4226 = vunpack.c.l.b16 %v3387
    %v4227 = vunpack.c.l.b16 %v3388
    %v4228 = vunpack.c.l.b16 %v3389
    %v4229 = vunpack.c.l.b16 %v3390
    %v4230 = vunpack.c.l.b16 %v3391
    %v4231 = vunpack.c.l.b16 %v3392
    %v4232 = vunpack.c.l.b16 %v3393
    %v4233 = vunpack.c.l.b16 %v3394
    %v4234 = vunpack.c.l.b16 %v3395
    %v4235 = vunpack.c.l.b16 %v3396
    %v4236 = vunpack.c.l.b16 %v3397
    %v4237 = vunpack.c.l.b16 %v3398
    %v4238 = vunpack.c.l.b16 %v3399
    %v4239 = vunpack.c.l.b16 %v3400
    %v4240 = vunpack.c.l.b16 %v3401
    %v4241 = vunpack.c.l.b16 %v3402
    %v4242 = vunpack.c.l.b16 %v3403
    %v4243 = vunpack.c.l.b16 %v3404
    %v4244 = vunpack.c.l.b16 %v3405
    %v4245 = vunpack.c.l.b16 %v3406
    %v4246 = vunpack.c.l.b16 %v3407
    %v4247 = vunpack.c.l.b16 %v3408
    %v4248 = vunpack.c.l.b16 %v3409
    %v4249 = vunpack.c.l.b16 %v3410
    %v4250 = vunpack.c.l.b16 %v3411
    %v4251 = vunpack.c.l.b16 %v3412
    %v4252 = vunpack.c.l.b16 %v3413
    %v4253 = vunpack.c.l.b16 %v3414
    %v4254 = vunpack.c.l.b16 %v3415
    %v4255 = vunpack.c.l.b16 %v3416
    %v4256 = vunpack.c.l.b16 %v3417
    %v4257 = vunpack.c.l.b16 %v3418
    %v4258 = vunpack.c.l.b16 %v3419
    %v4259 = vunpack.c.l.b16 %v3420
    %v4260 = vunpack.c.l.b16 %v3421
    %v4261 = vunpack.c.l.b16 %v3422
    %v4262 = vunpack.c.l.b16 %v3423
    %v4263 = vunpack.c.l.b16 %v3424
    %v4264 = vunpack.c.l.b16 %v3425
    %v4265 = vunpack.c.l.b16 %v3426
    %v4266 = vunpack.c.l.b16 %v3427
    %v4267 = vunpack.c.l.b16 %v3428
    %v4268 = vunpack.c.l.b16 %v3429
    %v4269 = vunpack.c.l.b16 %v3430
    %v4270 = vunpack.c.l.b16 %v3431
    %v4271 = vunpack.c.l.b16 %v3432
    %v4272 = vunpack.c.l.b16 %v3433
    %v4273 = vunpack.c.l.b16 %v3434
    %v4274 = vunpack.c.l.b16 %v3435
    %v4275 = vunpack.c.l.b16 %v3436
    %v4276 = vunpack.c.l.b16 %v3437
    %v4277 = vunpack.c.l.b16 %v3438
    %v4278 = vunpack.c.l.b16 %v3439
    %v4279 = vunpack.c.l.b16 %v3440
    %v4280 = vunpack.c.l.b16 %v3441
    %v4281 = vunpack.c.l.b16 %v3442
    %v4282 = vunpack.c.l.b16 %v3443
    %v4283 = vunpack.c.l.b16 %v3444
    %v4284 = vunpack.c.l.b16 %v3445
    %v4285 = vunpack.c.l.b16 %v3446
    %v4286 = vunpack.c.l.b16 %v3447
    %v4287 = vunpack.c.l.b16 %v3448
    %v4288 = vunpack.c.l.b16 %v3449
    %v4289 = vunpack.c.l.b16 %v3450
    %v4290 = vunpack.c.l.b16 %v3451
    %v4291 = vunpack.c.l.b16 %v3452
    %v4292 = vunpack.c.l.b16 %v3453
    %v4293 = vunpack.c.l.b16 %v3454
    %v4294 = vunpack.c.l.b16 %v3455
    %v4295 = vunpack.c.l.b16 %v3456
    %v4296 = vunpack.c.l.b16 %v3457
    %v4297 = vunpack.c.l.b16 %v3458
    %v4298 = vunpack.c.l.b16 %v3459
    %v4299 = vunpack.c.l.b16 %v3460
    %v4300 = vunpack.c.l.b16 %v3461
    %v4301 = vunpack.c.l.b16 %v3462
    %v4302 = vunpack.c.l.b16 %v3463
    %v4303 = vunpack.c.l.b16 %v3464
    %v4304 = vunpack.c.l.b16 %v3465
    %v4305 = vunpack.c.l.b16 %v3466
    %v4306 = vunpack.c.l.b16 %v3467
    %v4307 = vunpack.c.l.b16 %v3468
    %v4308 = vunpack.c.l.b16 %v3469
    %v4309 = vunpack.c.l.b16 %v3470
    %v4310 = vunpack.c.l.b16 %v3471
    %v4311 = vunpack.c.l.b16 %v3472
    %v4312 = vunpack.c.l.b16 %v3473
    %v4313 = vunpack.c.l.b16 %v3474
    %v4314 = vunpack.c.l.b16 %v3475
    %v4315 = vunpack.c.l.b16 %v3476
    %v4316 = vunpack.c.l.b16 %v3477
    %v4317 = vunpack.c.l.b16 %v3478
    %v4318 = vunpack.c.l.b16 %v3479
    %v4319 = vunpack.c.l.b16 %v3480
    %v4320 = vunpack.c.l.b16 %v3481
    %v4321 = vunpack.c.l.b16 %v3482
    %v4322 = vunpack.c.l.b16 %v3483
    %v4323 = vunpack.c.l.b16 %v3484
    %v4324 = vunpack.c.l.b16 %v3485
    %v4325 = vunpack.c.l.b16 %v3486
    %v4326 = vunpack.c.l.b16 %v3487
    %v4327 = vunpack.c.l.b16 %v3488
    %v4328 = vunpack.c.l.b16 %v3489
    %v4329 = vunpack.c.l.b16 %v3490
    %v4330 = vunpack.c.l.b16 %v3491
    %v4331 = vunpack.c.l.b16 %v3492
    %v4332 = vunpack.c.l.b16 %v3493
    %v4333 = vunpack.c.l.b16 %v3494
    %v4334 = vunpack.c.l.b16 %v3495
    %v4335 = vunpack.c.l.b16 %v3496
    %v4336 = vunpack.c.l.b16 %v3497
    %v4337 = vunpack.c.l.b16 %v3498
    %v4338 = vunpack.c.l.b16 %v3499
    %v4339 = vunpack.c.l.b16 %v3500
    %v4340 = vunpack.c.l.b16 %v3501
    %v4341 = vunpack.c.l.b16 %v3502
    %v4342 = vunpack.c.l.b16 %v3503
    %v4343 = vunpack.c.l.b16 %v3504
    %v4344 = vunpack.c.l.b16 %v3505
    %v4345 = vunpack.c.l.b16 %v3506
    %v4346 = vunpack.c.l.b16 %v3507
    %v4347 = vunpack.c.l.b16 %v3508
    %v4348 = vunpack.c.l.b16 %v3509
    %v4349 = vunpack.c.l.b16 %v3510
    %v4350 = vunpack.c.l.b16 %v3511
    %v4351 = vunpack.c.l.b16 %v3512
    %v4352 = vunpack.c.l.b16 %v3513
    %v4353 = vunpack.c.l.b16 %v3514
    %v4354 = vunpack.c.l.b16 %v3515
    %v4355 = vunpack.c.l.b16 %v3516
    %v4356 = vunpack.c.l.b16 %v3517
    %v4357 = vunpack.c.l.b16 %v3518
    %v4358 = vunpack.c.l.b16 %v3519
    %v4359 = vunpack.c.l.b16 %v3520
    %v4360 = vunpack.c.l.b16 %v3521
    %v4361 = vunpack.c.l.b16 %v3522
    %v4362 = vunpack.c.l.b16 %v3523
    %v4363 = vunpack.c.l.b16 %v3524
    %v4364 = vunpack.c.l.b16 %v3525
    %v4365 = vunpack.c.l.b16 %v3526
    %v4366 = vunpack.c.l.b16 %v3527
    %v4367 = vunpack.c.l.b16 %v3528
    %v4368 = vunpack.c.l.b16 %v3529
    %v4369 = vunpack.c.l.b16 %v3530
    %v4370 = vunpack.c.l.b16 %v3531
    %v4371 = vunpack.c.l.b16 %v3532
    %v4372 = vunpack.c.l.b16 %v3533
    %v4373 = vunpack.c.l.b16 %v3534
    %v4374 = vunpack.c.l.b16 %v3535
    %v4375 = vunpack.c.l.b16 %v3536
    %v4376 = vunpack.c.l.b16 %v3537
    %v4377 = vunpack.c.l.b16 %v3538
    %v4378 = vunpack.c.l.b16 %v3539
    %v4379 = vunpack.c.l.b16 %v3540
    %v4380 = vunpack.c.l.b16 %v3541
    %v4381 = vunpack.c.l.b16 %v3542
    %v4382 = vunpack.c.l.b16 %v3543
    %v4383 = vunpack.c.l.b16 %v3544
    %v4384 = vunpack.c.l.b16 %v3545
    %v4385 = vunpack.c.l.b16 %v3546
    %v4386 = vunpack.c.l.b16 %v3547
    %v4387 = vunpack.c.l.b16 %v3548
    %v4388 = vunpack.c.l.b16 %v3549
    %v4389 = vunpack.c.l.b16 %v3550
    %v4390 = vunpack.c.l.b16 %v3551
    %v4391 = vunpack.c.l.b16 %v3552
    %v4392 = vunpack.c.l.b16 %v3553
    %v4393 = vunpack.c.l.b16 %v3554
    %v4394 = vunpack.c.l.b16 %v3555
    %v4395 = vunpack.c.l.b16 %v3556
    %v4396 = vunpack.c.l.b16 %v3557
    %v4397 = vunpack.c.l.b16 %v3558
    %v4398 = vunpack.c.l.b16 %v3559
    %v4399 = vunpack.c.l.b16 %v3560
    %v4400 = vunpack.c.l.b16 %v3561
    %v4401 = vunpack.c.l.b16 %v3562
    %v4402 = vunpack.c.l.b16 %v3563
    %v4403 = vunpack.c.l.b16 %v3564
    %v4404 = vunpack.c.l.b16 %v3565
    %v4405 = vunpack.c.l.b16 %v3566
    %v4406 = vunpack.c.l.b16 %v3567
    %v4407 = vunpack.c.l.b16 %v3568
    %v4408 = vunpack.c.l.b16 %v3569
    %v4409 = vunpack.c.l.b16 %v3570
    %v4410 = vunpack.c.l.b16 %v3571
    %v4411 = vunpack.c.l.b16 %v3572
    %v4412 = vunpack.c.l.b16 %v3573
    %v4413 = vunpack.c.l.b16 %v3574
    %v4414 = vunpack.c.l.b16 %v3575
    %v4415 = vunpack.c.l.b16 %v3576
    %v4416 = vunpack.c.l.b16 %v3577
    %v4417 = vunpack.c.l.b16 %v3578
    %v4418 = vunpack.c.l.b16 %v3579
    %v4419 = vunpack.c.l.b16 %v3580
    %v4420 = vunpack.c.l.b16 %v3581
    %v4421 = vunpack.c.l.b16 %v3582
    %v4422 = vunpack.c.l.b16 %v3583
    %v4423 = vunpack.c.l.b16 %v3584
    %v4424 = vunpack.c.l.b16 %v3585
    %v4425 = vunpack.c.l.b16 %v3586
    %v4426 = vunpack.c.l.b16 %v3587
    %v4427 = vunpack.c.l.b16 %v3588
    %v4428 = vunpack.c.l.b16 %v3589
    %v4429 = vunpack.c.l.b16 %v3590
    %v4430 = vunpack.c.l.b16 %v3591
    %v4431 = vunpack.c.l.b16 %v3592
    %v4432 = vunpack.c.l.b16 %v3593
    %v4433 = vunpack.c.l.b16 %v3594
    %v4434 = vunpack.c.l.b16 %v3595
    %v4435 = vunpack.c.l.b16 %v3596
    %v4436 = vunpack.c.l.b16 %v3597
    %v4437 = vunpack.c.l.b16 %v3598
    %v4438 = vunpack.c.l.b16 %v3599
    %v4439 = vunpack.c.l.b16 %v3600
    %v4440 = vunpack.c.l.b16 %v3601
    %v4441 = vunpack.c.l.b16 %v3602
    %v4442 = vunpack.c.l.b16 %v3603
    %v4443 = vunpack.c.l.b16 %v3604
    %v4444 = vunpack.c.l.b16 %v3605
    %v4445 = vunpack.c.l.b16 %v3606
    %v4446 = vunpack.c.l.b16 %v3607
    %v4447 = vunpack.c.l.b16 %v3608
    %v4448 = vunpack.c.l.b16 %v3609
    %v4449 = vunpack.c.l.b16 %v3610
    %v4450 = vunpack.c.l.b16 %v3611
    %v4451 = vunpack.c.l.b16 %v3612
    %v4452 = vunpack.c.l.b16 %v3613
    %v4453 = vunpack.c.l.b16 %v3614
    %v4454 = vunpack.c.l.b16 %v3615
    %v4455 = vunpack.c.l.b16 %v3616
    %v4456 = vunpack.c.l.b16 %v3617
    %v4457 = vunpack.c.l.b16 %v3618
    %v4458 = vunpack.c.l.b16 %v3619
    %v4459 = vunpack.c.l.b16 %v3620
    %v4460 = vunpack.c.l.b16 %v3621
    %v4461 = vunpack.c.l.b16 %v3622
    %v4462 = vunpack.c.l.b16 %v3623
    %v4463 = vunpack.c.l.b16 %v3624
    %v4464 = vunpack.c.l.b16 %v3625
    %v4465 = vunpack.c.l.b16 %v3626
    %v4466 = vunpack.c.l.b16 %v3627
    %v4467 = vunpack.c.l.b16 %v3628
    %v4468 = vunpack.c.l.b16 %v3629
    %v4469 = vunpack.c.l.b16 %v3630
    %v4470 = vunpack.c.l.b16 %v3631
    %v4471 = vunpack.c.l.b16 %v3632
    %v4472 = vunpack.c.l.b16 %v3633
    %v4473 = vunpack.c.l.b16 %v3634
    %v4474 = vunpack.c.l.b16 %v3635
    %v4475 = vunpack.c.l.b16 %v3636
    %v4476 = vunpack.c.l.b16 %v3637
    %v4477 = vunpack.c.l.b16 %v3638
    %v4478 = vunpack.c.l.b16 %v3639
    %v4479 = vunpack.c.l.b16 %v3640
    %v4480 = vunpack.c.l.b16 %v3641
    %v4481 = vunpack.c.l.b16 %v3642
    %v4482 = vunpack.c.l.b16 %v3643
    %v4483 = vunpack.c.l.b16 %v3644
    %v4484 = vunpack.c.l.b16 %v3645
    %v4485 = vunpack.c.l.b16 %v3646
    %v4486 = vunpack.c.l.b16 %v3647
    %v4487 = vunpack.c.l.b16 %v3648
    %v4488 = vunpack.c.l.b16 %v3649
    %v4489 = vunpack.c.l.b16 %v3650
    %v4490 = vunpack.c.l.b16 %v3651
    %v4491 = vunpack.c.l.b16 %v3652
    %v4492 = vunpack.c.l.b16 %v3653
    %v4493 = vunpack.c.l.b16 %v3654
    %v4494 = vunpack.c.l.b16 %v3655
    %v4495 = vunpack.c.l.b16 %v3656
    %v4496 = vunpack.c.l.b16 %v3657
    %v4497 = vunpack.c.l.b16 %v3658
    %v4498 = vunpack.c.l.b16 %v3659
    %v4499 = vunpack.c.l.b16 %v3660
    %v4500 = vunpack.c.l.b16 %v3661
    %v4501 = vunpack.c.l.b16 %v3662
    %v4502 = vunpack.c.l.b16 %v3663
    %v4503 = vunpack.c.l.b16 %v3664
    %v4504 = vunpack.c.l.b16 %v3665
    %v4505 = vunpack.c.l.b16 %v3666
    %v4506 = vunpack.c.l.b16 %v3667
    %v4507 = vunpack.c.l.b16 %v3668
    %v4508 = vunpack.c.l.b16 %v3669
    %v4509 = vunpack.c.l.b16 %v3670
    %v4510 = vunpack.c.l.b16 %v3671
    %v4511 = vunpack.c.l.b16 %v3672
    %v4512 = vunpack.c.l.b16 %v3673
    %v4513 = vunpack.c.l.b16 %v3674
    %v4514 = vunpack.c.l.b16 %v3675
    %v4515 = vunpack.c.l.b16 %v3676
    %v4516 = vunpack.c.l.b16 %v3677
    %v4517 = vunpack.c.l.b16 %v3678
    %v4518 = vunpack.c.l.b16 %v3679
    %v4519 = vunpack.c.l.b16 %v3680
    %v4520 = vunpack.c.l.b16 %v3681
    %v4521 = vunpack.c.l.b16 %v3682
    %v4522 = vunpack.c.l.b16 %v3683
    %v4523 = vunpack.c.l.b16 %v3684
    %v4524 = vunpack.c.l.b16 %v3685
    %v4525 = vunpack.c.l.b16 %v3686
    %v4526 = vunpack.c.l.b16 %v3687
    %v4527 = vunpack.c.l.b16 %v3688
    %v4528 = vunpack.c.l.b16 %v3689
    %v4529 = vunpack.c.l.b16 %v3690
    %v4530 = vunpack.c.l.b16 %v3691
    %v4531 = vunpack.c.l.b16 %v3692
    %v4532 = vunpack.c.l.b16 %v3693
    %v4533 = vunpack.c.l.b16 %v3694
    %v4534 = vunpack.c.l.b16 %v3695
    %v4535 = vunpack.c.l.b16 %v3696
    %v4536 = vunpack.c.l.b16 %v3697
    %v4537 = vunpack.c.l.b16 %v3698
    %v4538 = vunpack.c.l.b16 %v3699
    %v4539 = vunpack.c.l.b16 %v3700
    %v4540 = vunpack.c.l.b16 %v3701
    %v4541 = vunpack.c.l.b16 %v3702
    %v4542 = vunpack.c.l.b16 %v3703
    %v4543 = vunpack.c.l.b16 %v3704
    %v4544 = vunpack.c.l.b16 %v3705
    %v4545 = vunpack.c.l.b16 %v3706
    %v4546 = vunpack.c.l.b16 %v3707
    %v4547 = vunpack.c.l.b16 %v3708
    %v4548 = vunpack.c.l.b16 %v3709
    %v4549 = vunpack.c.l.b16 %v3710
    %v4550 = vunpack.c.l.b16 %v3711
    %v4551 = vunpack.c.l.b16 %v3712
    %v4552 = vunpack.c.l.b16 %v3713
    %v4553 = vunpack.c.l.b16 %v3714
    %v4554 = vunpack.c.l.b16 %v3715
    %v4555 = vunpack.c.l.b16 %v3716
    %v4556 = vunpack.c.l.b16 %v3717
    %v4557 = vunpack.c.l.b16 %v3718
    %v4558 = vunpack.c.l.b16 %v3719
    %v4559 = vunpack.c.l.b16 %v3720
    %v4560 = vunpack.c.l.b16 %v3721
    %v4561 = vunpack.c.l.b16 %v3722
    %v4562 = vunpack.c.l.b16 %v3723
    %v4563 = vunpack.c.l.b16 %v3724
    %v4564 = vunpack.c.l.b16 %v3725
    %v4565 = vunpack.c.l.b16 %v3726
    %v4566 = vunpack.c.l.b16 %v3727
    %v4567 = vunpack.c.l.b16 %v3728
    %v4568 = vunpack.c.l.b16 %v3729
    %v4569 = vunpack.c.l.b16 %v3730
    %v4570 = vunpack.c.l.b16 %v3731
    %v4571 = vunpack.c.l.b16 %v3732
    %v4572 = vunpack.c.l.b16 %v3733
    %v4573 = vunpack.c.l.b16 %v3734
    %v4574 = vunpack.c.l.b16 %v3735
    %v4575 = vunpack.c.l.b16 %v3736
    %v4576 = vunpack.c.l.b16 %v3737
    %v4577 = vunpack.c.l.b16 %v3738
    %v4578 = vunpack.c.l.b16 %v3739
    %v4579 = vunpack.c.l.b16 %v3740
    %v4580 = vunpack.c.l.b16 %v3741
    %v4581 = vunpack.c.l.b16 %v3742
    %v4582 = vunpack.c.l.b16 %v3743
    %v4583 = vunpack.c.l.b16 %v3744
    %v4584 = vunpack.c.l.b16 %v3745
    %v4585 = vunpack.c.l.b16 %v3746
    %v4586 = vunpack.c.l.b16 %v3747
    %v4587 = vunpack.c.l.b16 %v3748
    %v4588 = vunpack.c.l.b16 %v3749
    %v4589 = vpack.c.b16 %v4174, %v4173
    %v4590 = vpack.c.b16 %v4176, %v4175
    %v4591 = vpack.c.b16 %v4178, %v4177
    %v4592 = vpack.c.b16 %v4180, %v4179
    %v4593 = vpack.c.b16 %v4182, %v4181
    %v4594 = vpack.c.b16 %v4184, %v4183
    %v4595 = vpack.c.b16 %v4186, %v4185
    %v4596 = vpack.c.b16 %v4188, %v4187
    %v4597 = vpack.c.b16 %v4190, %v4189
    %v4598 = vpack.c.b16 %v4192, %v4191
    %v4599 = vpack.c.b16 %v4194, %v4193
    %v4600 = vpack.c.b16 %v4196, %v4195
    %v4601 = vpack.c.b16 %v4198, %v4197
    %v4602 = vpack.c.b16 %v4200, %v4199
    %v4603 = vpack.c.b16 %v4202, %v4201
    %v4604 = vpack.c.b16 %v4204, %v4203
    %v4605 = vpack.c.b16 %v4206, %v4205
    %v4606 = vpack.c.b16 %v4208, %v4207
    %v4607 = vpack.c.b16 %v4210, %v4209
    %v4608 = vpack.c.b16 %v4212, %v4211
    %v4609 = vpack.c.b16 %v4214, %v4213
    %v4610 = vpack.c.b16 %v4216, %v4215
    %v4611 = vpack.c.b16 %v4218, %v4217
    %v4612 = vpack.c.b16 %v4220, %v4219
    %v4613 = vpack.c.b16 %v4222, %v4221
    %v4614 = vpack.c.b16 %v4224, %v4223
    %v4615 = vpack.c.b16 %v4226, %v4225
    %v4616 = vpack.c.b16 %v4228, %v4227
    %v4617 = vpack.c.b16 %v4230, %v4229
    %v4618 = vpack.c.b16 %v4232, %v4231
    %v4619 = vpack.c.b16 %v4234, %v4233
    %v4620 = vpack.c.b16 %v4236, %v4235
    %v4621 = vpack.c.b16 %v4238, %v4237
    %v4622 = vpack.c.b16 %v4240, %v4239
    %v4623 = vpack.c.b16 %v4242, %v4241
    %v4624 = vpack.c.b16 %v4244, %v4243
    %v4625 = vpack.c.b16 %v4246, %v4245
    %v4626 = vpack.c.b16 %v4248, %v4247
    %v4627 = vpack.c.b16 %v4250, %v4249
    %v4628 = vpack.c.b16 %v4252, %v4251
    %v4629 = vpack.c.b16 %v4254, %v4253
    %v4630 = vpack.c.b16 %v4256, %v4255
    %v4631 = vpack.c.b16 %v4258, %v4257
    %v4632 = vpack.c.b16 %v4260, %v4259
    %v4633 = vpack.c.b16 %v4262, %v4261
    %v4634 = vpack.c.b16 %v4264, %v4263
    %v4635 = vpack.c.b16 %v4266, %v4265
    %v4636 = vpack.c.b16 %v4268, %v4267
    %v4637 = vpack.c.b16 %v4270, %v4269
    %v4638 = vpack.c.b16 %v4272, %v4271
    %v4639 = vpack.c.b16 %v4274, %v4273
    %v4640 = vpack.c.b16 %v4276, %v4275
    %v4641 = vpack.c.b16 %v4278, %v4277
    %v4642 = vpack.c.b16 %v4280, %v4279
    %v4643 = vpack.c.b16 %v4282, %v4281
    %v4644 = vpack.c.b16 %v4284, %v4283
    %v4645 = vpack.c.b16 %v4286, %v4285
    %v4646 = vpack.c.b16 %v4288, %v4287
    %v4647 = vpack.c.b16 %v4290, %v4289
    %v4648 = vpack.c.b16 %v4292, %v4291
    %v4649 = vpack.c.b16 %v4294, %v4293
    %v4650 = vpack.c.b16 %v4296, %v4295
    %v4651 = vpack.c.b16 %v4298, %v4297
    %v4652 = vpack.c.b16 %v4300, %v4299
    %v4653 = vpack.c.b16 %v4302, %v4301
    %v4654 = vpack.c.b16 %v4304, %v4303
    %v4655 = vpack.c.b16 %v4306, %v4305
    %v4656 = vpack.c.b16 %v4308, %v4307
    %v4657 = vpack.c.b16 %v4310, %v4309
    %v4658 = vpack.c.b16 %v4312, %v4311
    %v4659 = vpack.c.b16 %v4314, %v4313
    %v4660 = vpack.c.b16 %v4316, %v4315
    %v4661 = vpack.c.b16 %v4318, %v4317
    %v4662 = vpack.c.b16 %v4320, %v4319
    %v4663 = vpack.c.b16 %v4322, %v4321
    %v4664 = vpack.c.b16 %v4324, %v4323
    %v4665 = vpack.c.b16 %v4326, %v4325
    %v4666 = vpack.c.b16 %v4328, %v4327
    %v4667 = vpack.c.b16 %v4330, %v4329
    %v4668 = vpack.c.b16 %v4332, %v4331
    %v4669 = vpack.c.b16 %v4334, %v4333
    %v4670 = vpack.c.b16 %v4336, %v4335
    %v4671 = vpack.c.b16 %v4338, %v4337
    %v4672 = vpack.c.b16 %v4340, %v4339
    %v4673 = vpack.c.b16 %v4342, %v4341
    %v4674 = vpack.c.b16 %v4344, %v4343
    %v4675 = vpack.c.b16 %v4346, %v4345
    %v4676 = vpack.c.b16 %v4348, %v4347
    %v4677 = vpack.c.b16 %v4350, %v4349
    %v4678 = vpack.c.b16 %v4352, %v4351
    %v4679 = vpack.c.b16 %v4354, %v4353
    %v4680 = vpack.c.b16 %v4356, %v4355
    %v4681 = vpack.c.b16 %v4358, %v4357
    %v4682 = vpack.c.b16 %v4360, %v4359
    %v4683 = vpack.c.b16 %v4362, %v4361
    %v4684 = vpack.c.b16 %v4364, %v4363
    %v4685 = vpack.c.b16 %v4366, %v4365
    %v4686 = vpack.c.b16 %v4368, %v4367
    %v4687 = vpack.c.b16 %v4370, %v4369
    %v4688 = vpack.c.b16 %v4372, %v4371
    %v4689 = vpack.c.b16 %v4374, %v4373
    %v4690 = vpack.c.b16 %v4376, %v4375
    %v4691 = vpack.c.b16 %v4378, %v4377
    %v4692 = vpack.c.b16 %v4380, %v4379
    %v4693 = vpack.c.b16 %v4382, %v4381
    %v4694 = vpack.c.b16 %v4384, %v4383
    %v4695 = vpack.c.b16 %v4386, %v4385
    %v4696 = vpack.c.b16 %v4388, %v4387
    %v4697 = vpack.c.b16 %v4390, %v4389
    %v4698 = vpack.c.b16 %v4392, %v4391
    %v4699 = vpack.c.b16 %v4394, %v4393
    %v4700 = vpack.c.b16 %v4396, %v4395
    %v4701 = vpack.c.b16 %v4398, %v4397
    %v4702 = vpack.c.b16 %v4400, %v4399
    %v4703 = vpack.c.b16 %v4402, %v4401
    %v4704 = vpack.c.b16 %v4404, %v4403
    %v4705 = vpack.c.b16 %v4406, %v4405
    %v4706 = vpack.c.b16 %v4408, %v4407
    %v4707 = vpack.c.b16 %v4410, %v4409
    %v4708 = vpack.c.b16 %v4412, %v4411
    %v4709 = vpack.c.b16 %v4414, %v4413
    %v4710 = vpack.c.b16 %v4416, %v4415
    %v4711 = vpack.c.b16 %v4418, %v4417
    %v4712 = vpack.c.b16 %v4420, %v4419
    %v4713 = vpack.c.b16 %v4422, %v4421
    %v4714 = vpack.c.b16 %v4424, %v4423
    %v4715 = vpack.c.b16 %v4426, %v4425
    %v4716 = vpack.c.b16 %v4428, %v4427
    %v4717 = vpack.c.b16 %v4430, %v4429
    %v4718 = vpack.c.b16 %v4432, %v4431
    %v4719 = vpack.c.b16 %v4434, %v4433
    %v4720 = vpack.c.b16 %v4436, %v4435
    %v4721 = vpack.c.b16 %v4438, %v4437
    %v4722 = vpack.c.b16 %v4440, %v4439
    %v4723 = vpack.c.b16 %v4442, %v4441
    %v4724 = vpack.c.b16 %v4444, %v4443
    %v4725 = vpack.c.b16 %v4446, %v4445
    %v4726 = vpack.c.b16 %v4448, %v4447
    %v4727 = vpack.c.b16 %v4450, %v4449
    %v4728 = vpack.c.b16 %v4452, %v4451
    %v4729 = vpack.c.b16 %v4454, %v4453
    %v4730 = vpack.c.b16 %v4456, %v4455
    %v4731 = vpack.c.b16 %v4458, %v4457
    %v4732 = vpack.c.b16 %v4460, %v4459
    %v4733 = vpack.c.b16 %v4462, %v4461
    %v4734 = vpack.c.b16 %v4464, %v4463
    %v4735 = vpack.c.b16 %v4466, %v4465
    %v4736 = vpack.c.b16 %v4468, %v4467
    %v4737 = vpack.c.b16 %v4470, %v4469
    %v4738 = vpack.c.b16 %v4472, %v4471
    %v4739 = vpack.c.b16 %v4474, %v4473
    %v4740 = vpack.c.b16 %v4476, %v4475
    %v4741 = vpack.c.b16 %v4478, %v4477
    %v4742 = vpack.c.b16 %v4480, %v4479
    %v4743 = vpack.c.b16 %v4482, %v4481
    %v4744 = vpack.c.b16 %v4484, %v4483
    %v4745 = vpack.c.b16 %v4486, %v4485
    %v4746 = vpack.c.b16 %v4488, %v4487
    %v4747 = vpack.c.b16 %v4490, %v4489
    %v4748 = vpack.c.b16 %v4492, %v4491
    %v4749 = vpack.c.b16 %v4494, %v4493
    %v4750 = vpack.c.b16 %v4496, %v4495
    %v4751 = vpack.c.b16 %v4498, %v4497
    %v4752 = vpack.c.b16 %v4500, %v4499
    %v4753 = vpack.c.b16 %v4502, %v4501
    %v4754 = vpack.c.b16 %v4504, %v4503
    %v4755 = vpack.c.b16 %v4506, %v4505
    %v4756 = vpack.c.b16 %v4508, %v4507
    %v4757 = vpack.c.b16 %v4510, %v4509
    %v4758 = vpack.c.b16 %v4512, %v4511
    %v4759 = vpack.c.b16 %v4514, %v4513
    %v4760 = vpack.c.b16 %v4516, %v4515
    %v4761 = vpack.c.b16 %v4518, %v4517
    %v4762 = vpack.c.b16 %v4520, %v4519
    %v4763 = vpack.c.b16 %v4522, %v4521
    %v4764 = vpack.c.b16 %v4524, %v4523
    %v4765 = vpack.c.b16 %v4526, %v4525
    %v4766 = vpack.c.b16 %v4528, %v4527
    %v4767 = vpack.c.b16 %v4530, %v4529
    %v4768 = vpack.c.b16 %v4532, %v4531
    %v4769 = vpack.c.b16 %v4534, %v4533
    %v4770 = vpack.c.b16 %v4536, %v4535
    %v4771 = vpack.c.b16 %v4538, %v4537
    %v4772 = vpack.c.b16 %v4540, %v4539
    %v4773 = vpack.c.b16 %v4542, %v4541
    %v4774 = vpack.c.b16 %v4544, %v4543
    %v4775 = vpack.c.b16 %v4546, %v4545
    %v4776 = vpack.c.b16 %v4548, %v4547
    %v4777 = vpack.c.b16 %v4550, %v4549
    %v4778 = vpack.c.b16 %v4552, %v4551
    %v4779 = vpack.c.b16 %v4554, %v4553
    %v4780 = vpack.c.b16 %v4556, %v4555
    %v4781 = vpack.c.b16 %v4558, %v4557
    %v4782 = vpack.c.b16 %v4560, %v4559
    %v4783 = vpack.c.b16 %v4562, %v4561
    %v4784 = vpack.c.b16 %v4564, %v4563
    %v4785 = vpack.c.b16 %v4566, %v4565
    %v4786 = vpack.c.b16 %v4568, %v4567
    %v4787 = vpack.c.b16 %v4570, %v4569
    %v4788 = vpack.c.b16 %v4572, %v4571
    %v4789 = vpack.c.b16 %v4574, %v4573
    %v4790 = vpack.c.b16 %v4576, %v4575
    %v4791 = vpack.c.b16 %v4578, %v4577
    %v4792 = vpack.c.b16 %v4580, %v4579
    %v4793 = vpack.c.b16 %v4582, %v4581
    %v4794 = vpack.c.b16 %v4584, %v4583
    %v4795 = vpack.c.b16 %v4586, %v4585
    %v4796 = vpack.c.b16 %v4588, %v4587
    %5005 = vmatprep.subr.bf16.mxu0 0
    %5006 = vmatpush1.bf16.msra.mxu0 %v4589
    %5007 = vmatprep.subr.bf16.mxu0 0
    %5008 = vmatpush1.bf16.msra.mxu0 %v4590
    %5009 = vmatprep.subr.bf16.mxu0 0
    %5010 = vmatpush1.bf16.msra.mxu0 %v4591
    %5011 = vmatprep.subr.bf16.mxu0 0
    %5012 = vmatpush1.bf16.msra.mxu0 %v4592
    %5013 = vmatprep.subr.bf16.mxu0 0
    %5014 = vmatpush1.bf16.msra.mxu0 %v4593
    %5015 = vmatprep.subr.bf16.mxu0 0
    %5016 = vmatpush1.bf16.msra.mxu0 %v4594
    %5017 = vmatprep.subr.bf16.mxu0 0
    %5018 = vmatpush1.bf16.msra.mxu0 %v4595
    %5019 = vmatprep.subr.bf16.mxu0 0
    %5020 = vmatpush1.bf16.msra.mxu0 %v4596
    %5021 = vmatprep.subr.bf16.mxu0 0
    %5022 = vmatpush1.bf16.msra.mxu0 %v4597
    %5023 = vmatprep.subr.bf16.mxu0 0
    %5024 = vmatpush1.bf16.msra.mxu0 %v4598
    %5025 = vmatprep.subr.bf16.mxu0 0
    %5026 = vmatpush1.bf16.msra.mxu0 %v4599
    %5027 = vmatprep.subr.bf16.mxu0 0
    %5028 = vmatpush1.bf16.msra.mxu0 %v4600
    %5029 = vmatprep.subr.bf16.mxu0 0
    %5030 = vmatpush1.bf16.msra.mxu0 %v4601
    %5031 = vmatprep.subr.bf16.mxu0 0
    %5032 = vmatpush1.bf16.msra.mxu0 %v4602
    %5033 = vmatprep.subr.bf16.mxu0 0
    %5034 = vmatpush1.bf16.msra.mxu0 %v4603
    %5035 = vmatprep.subr.bf16.mxu0 0
    %5036 = vmatpush1.bf16.msra.mxu0 %v4604
    %5037 = vmatprep.mubr.bf16.mxu0 %v3309
    %5038 = vmatmul.mubr.bf16.gmra.mrb[0].mxu0 %v3075
    %v5039 = vpop.f32.mrb[0].mxu0
    %v5040 = vadd.f32 %v3755, %v5039
    %v5041 = vpop.f32.mrb[0].mxu0
    %v5042 = vpop.f32.mrb[0].mxu0
    %v5043 = vadd.f32 %v3755, %v5042
    %v5044 = vpop.f32.mrb[0].mxu0
    %5045 = vdwg.mxu0
    %5046 = vmatprep.subr.bf16.mxu0 0
    %5047 = vmatpush1.bf16.msra.mxu0 %v4605
    %5048 = vmatprep.subr.bf16.mxu0 0
    %5049 = vmatpush1.bf16.msra.mxu0 %v4606
    %5050 = vmatprep.subr.bf16.mxu0 0
    %5051 = vmatpush1.bf16.msra.mxu0 %v4607
    %5052 = vmatprep.subr.bf16.mxu0 0
    %5053 = vmatpush1.bf16.msra.mxu0 %v4608
    %5054 = vmatprep.subr.bf16.mxu0 0
    %5055 = vmatpush1.bf16.msra.mxu0 %v4609
    %5056 = vmatprep.subr.bf16.mxu0 0
    %5057 = vmatpush1.bf16.msra.mxu0 %v4610
    %5058 = vmatprep.subr.bf16.mxu0 0
    %5059 = vmatpush1.bf16.msra.mxu0 %v4611
    %5060 = vmatprep.subr.bf16.mxu0 0
    %5061 = vmatpush1.bf16.msra.mxu0 %v4612
    %5062 = vmatprep.subr.bf16.mxu0 0
    %5063 = vmatpush1.bf16.msra.mxu0 %v4613
    %5064 = vmatprep.subr.bf16.mxu0 0
    %5065 = vmatpush1.bf16.msra.mxu0 %v4614
    %5066 = vmatprep.subr.bf16.mxu0 0
    %5067 = vmatpush1.bf16.msra.mxu0 %v4615
    %5068 = vmatprep.subr.bf16.mxu0 0
    %5069 = vmatpush1.bf16.msra.mxu0 %v4616
    %5070 = vmatprep.subr.bf16.mxu0 0
    %5071 = vmatpush1.bf16.msra.mxu0 %v4617
    %5072 = vmatprep.subr.bf16.mxu0 0
    %5073 = vmatpush1.bf16.msra.mxu0 %v4618
    %5074 = vmatprep.subr.bf16.mxu0 0
    %5075 = vmatpush1.bf16.msra.mxu0 %v4619
    %5076 = vmatprep.subr.bf16.mxu0 0
    %5077 = vmatpush1.bf16.msra.mxu0 %v4620
    %5078 = vmatprep.mubr.bf16.mxu0 %v3311
    %5079 = vmatmul.mubr.bf16.gmra.mrb[0].mxu0 %v3310
    %v5080 = vpop.f32.mrb[0].mxu0
    %v5081 = vadd.f32 %v5040, %v5080
    %v5082 = vpop.f32.mrb[0].mxu0
    %v5083 = vpop.f32.mrb[0].mxu0
    %v5084 = vadd.f32 %v5043, %v5083
    %v5085 = vpop.f32.mrb[0].mxu0
    %5086 = vdwg.mxu0
    %5087 = vmatprep.subr.bf16.mxu0 0
    %5088 = vmatpush1.bf16.msra.mxu0 %v4621
    %5089 = vmatprep.subr.bf16.mxu0 0
    %5090 = vmatpush1.bf16.msra.mxu0 %v4622
    %5091 = vmatprep.subr.bf16.mxu0 0
    %5092 = vmatpush1.bf16.msra.mxu0 %v4623
    %5093 = vmatprep.subr.bf16.mxu0 0
    %5094 = vmatpush1.bf16.msra.mxu0 %v4624
    %5095 = vmatprep.subr.bf16.mxu0 0
    %5096 = vmatpush1.bf16.msra.mxu0 %v4625
    %5097 = vmatprep.subr.bf16.mxu0 0
    %5098 = vmatpush1.bf16.msra.mxu0 %v4626
    %5099 = vmatprep.subr.bf16.mxu0 0
    %5100 = vmatpush1.bf16.msra.mxu0 %v4627
    %5101 = vmatprep.subr.bf16.mxu0 0
    %5102 = vmatpush1.bf16.msra.mxu0 %v4628
    %5103 = vmatprep.subr.bf16.mxu0 0
    %5104 = vmatpush1.bf16.msra.mxu0 %v4629
    %5105 = vmatprep.subr.bf16.mxu0 0
    %5106 = vmatpush1.bf16.msra.mxu0 %v4630
    %5107 = vmatprep.subr.bf16.mxu0 0
    %5108 = vmatpush1.bf16.msra.mxu0 %v4631
    %5109 = vmatprep.subr.bf16.mxu0 0
    %5110 = vmatpush1.bf16.msra.mxu0 %v4632
    %5111 = vmatprep.subr.bf16.mxu0 0
    %5112 = vmatpush1.bf16.msra.mxu0 %v4633
    %5113 = vmatprep.subr.bf16.mxu0 0
    %5114 = vmatpush1.bf16.msra.mxu0 %v4634
    %5115 = vmatprep.subr.bf16.mxu0 0
    %5116 = vmatpush1.bf16.msra.mxu0 %v4635
    %5117 = vmatprep.subr.bf16.mxu0 0
    %5118 = vmatpush1.bf16.msra.mxu0 %v4636
    %5119 = vmatprep.mubr.bf16.mxu0 %v3313
    %5120 = vmatmul.mubr.bf16.gmra.mrb[0].mxu0 %v3312
    %v5121 = vpop.f32.mrb[0].mxu0
    %v5122 = vadd.f32 %v5081, %v5121
    %v5123 = vpop.f32.mrb[0].mxu0
    %v5124 = vpop.f32.mrb[0].mxu0
    %v5125 = vadd.f32 %v5084, %v5124
    %v5126 = vpop.f32.mrb[0].mxu0
    %5127 = vdwg.mxu0
    %5128 = vmatprep.subr.bf16.mxu0 0
    %5129 = vmatpush1.bf16.msra.mxu0 %v4637
    %5130 = vmatprep.subr.bf16.mxu0 0
    %5131 = vmatpush1.bf16.msra.mxu0 %v4638
    %5132 = vmatprep.subr.bf16.mxu0 0
    %5133 = vmatpush1.bf16.msra.mxu0 %v4639
    %5134 = vmatprep.subr.bf16.mxu0 0
    %5135 = vmatpush1.bf16.msra.mxu0 %v4640
    %5136 = vmatprep.subr.bf16.mxu0 0
    %5137 = vmatpush1.bf16.msra.mxu0 %v4641
    %5138 = vmatprep.subr.bf16.mxu0 0
    %5139 = vmatpush1.bf16.msra.mxu0 %v4642
    %5140 = vmatprep.subr.bf16.mxu0 0
    %5141 = vmatpush1.bf16.msra.mxu0 %v4643
    %5142 = vmatprep.subr.bf16.mxu0 0
    %5143 = vmatpush1.bf16.msra.mxu0 %v4644
    %5144 = vmatprep.subr.bf16.mxu0 0
    %5145 = vmatpush1.bf16.msra.mxu0 %v4645
    %5146 = vmatprep.subr.bf16.mxu0 0
    %5147 = vmatpush1.bf16.msra.mxu0 %v4646
    %5148 = vmatprep.subr.bf16.mxu0 0
    %5149 = vmatpush1.bf16.msra.mxu0 %v4647
    %5150 = vmatprep.subr.bf16.mxu0 0
    %5151 = vmatpush1.bf16.msra.mxu0 %v4648
    %5152 = vmatprep.subr.bf16.mxu0 0
    %5153 = vmatpush1.bf16.msra.mxu0 %v4649
    %5154 = vmatprep.subr.bf16.mxu0 0
    %5155 = vmatpush1.bf16.msra.mxu0 %v4650
    %5156 = vmatprep.subr.bf16.mxu0 0
    %5157 = vmatpush1.bf16.msra.mxu0 %v4651
    %5158 = vmatprep.subr.bf16.mxu0 0
    %5159 = vmatpush1.bf16.msra.mxu0 %v4652
    %5160 = vmatprep.mubr.bf16.mxu0 %v3315
    %5161 = vmatmul.mubr.bf16.gmra.mrb[0].mxu0 %v3314
    %v5162 = vpop.f32.mrb[0].mxu0
    %v5163 = vadd.f32 %v5122, %v5162
    %v5164 = vpop.f32.mrb[0].mxu0
    %v5165 = vpop.f32.mrb[0].mxu0
    %v5166 = vadd.f32 %v5125, %v5165
    %v5167 = vpop.f32.mrb[0].mxu0
    %5168 = vdwg.mxu0
    %5169 = vmatprep.subr.bf16.mxu0 0
    %5170 = vmatpush1.bf16.msra.mxu0 %v4653
    %5171 = vmatprep.subr.bf16.mxu0 0
    %5172 = vmatpush1.bf16.msra.mxu0 %v4654
    %5173 = vmatprep.subr.bf16.mxu0 0
    %5174 = vmatpush1.bf16.msra.mxu0 %v4655
    %5175 = vmatprep.subr.bf16.mxu0 0
    %5176 = vmatpush1.bf16.msra.mxu0 %v4656
    %5177 = vmatprep.subr.bf16.mxu0 0
    %5178 = vmatpush1.bf16.msra.mxu0 %v4657
    %5179 = vmatprep.subr.bf16.mxu0 0
    %5180 = vmatpush1.bf16.msra.mxu0 %v4658
    %5181 = vmatprep.subr.bf16.mxu0 0
    %5182 = vmatpush1.bf16.msra.mxu0 %v4659
    %5183 = vmatprep.subr.bf16.mxu0 0
    %5184 = vmatpush1.bf16.msra.mxu0 %v4660
    %5185 = vmatprep.subr.bf16.mxu0 0
    %5186 = vmatpush1.bf16.msra.mxu0 %v4661
    %5187 = vmatprep.subr.bf16.mxu0 0
    %5188 = vmatpush1.bf16.msra.mxu0 %v4662
    %5189 = vmatprep.subr.bf16.mxu0 0
    %5190 = vmatpush1.bf16.msra.mxu0 %v4663
    %5191 = vmatprep.subr.bf16.mxu0 0
    %5192 = vmatpush1.bf16.msra.mxu0 %v4664
    %5193 = vmatprep.subr.bf16.mxu0 0
    %5194 = vmatpush1.bf16.msra.mxu0 %v4665
    %5195 = vmatprep.subr.bf16.mxu0 0
    %5196 = vmatpush1.bf16.msra.mxu0 %v4666
    %5197 = vmatprep.subr.bf16.mxu0 0
    %5198 = vmatpush1.bf16.msra.mxu0 %v4667
    %5199 = vmatprep.subr.bf16.mxu0 0
    %5200 = vmatpush1.bf16.msra.mxu0 %v4668
    %5201 = vmatprep.mubr.bf16.mxu0 %v3317
    %5202 = vmatmul.mubr.bf16.gmra.mrb[0].mxu0 %v3316
    %v5203 = vpop.f32.mrb[0].mxu0
    %v5204 = vadd.f32 %v5163, %v5203
    %v5205 = vpop.f32.mrb[0].mxu0
    %v5206 = vpop.f32.mrb[0].mxu0
    %v5207 = vadd.f32 %v5166, %v5206
    %v5208 = vpop.f32.mrb[0].mxu0
    %5209 = vdwg.mxu0
    %5210 = vmatprep.subr.bf16.mxu0 0
    %5211 = vmatpush1.bf16.msra.mxu0 %v4669
    %5212 = vmatprep.subr.bf16.mxu0 0
    %5213 = vmatpush1.bf16.msra.mxu0 %v4670
    %5214 = vmatprep.subr.bf16.mxu0 0
    %5215 = vmatpush1.bf16.msra.mxu0 %v4671
    %5216 = vmatprep.subr.bf16.mxu0 0
    %5217 = vmatpush1.bf16.msra.mxu0 %v4672
    %5218 = vmatprep.subr.bf16.mxu0 0
    %5219 = vmatpush1.bf16.msra.mxu0 %v4673
    %5220 = vmatprep.subr.bf16.mxu0 0
    %5221 = vmatpush1.bf16.msra.mxu0 %v4674
    %5222 = vmatprep.subr.bf16.mxu0 0
    %5223 = vmatpush1.bf16.msra.mxu0 %v4675
    %5224 = vmatprep.subr.bf16.mxu0 0
    %5225 = vmatpush1.bf16.msra.mxu0 %v4676
    %5226 = vmatprep.subr.bf16.mxu0 0
    %5227 = vmatpush1.bf16.msra.mxu0 %v4677
    %5228 = vmatprep.subr.bf16.mxu0 0
    %5229 = vmatpush1.bf16.msra.mxu0 %v4678
    %5230 = vmatprep.subr.bf16.mxu0 0
    %5231 = vmatpush1.bf16.msra.mxu0 %v4679
    %5232 = vmatprep.subr.bf16.mxu0 0
    %5233 = vmatpush1.bf16.msra.mxu0 %v4680
    %5234 = vmatprep.subr.bf16.mxu0 0
    %5235 = vmatpush1.bf16.msra.mxu0 %v4681
    %5236 = vmatprep.subr.bf16.mxu0 0
    %5237 = vmatpush1.bf16.msra.mxu0 %v4682
    %5238 = vmatprep.subr.bf16.mxu0 0
    %5239 = vmatpush1.bf16.msra.mxu0 %v4683
    %5240 = vmatprep.subr.bf16.mxu0 0
    %5241 = vmatpush1.bf16.msra.mxu0 %v4684
    %5242 = vmatprep.mubr.bf16.mxu0 %v3319
    %5243 = vmatmul.mubr.bf16.gmra.mrb[0].mxu0 %v3318
    %v5244 = vpop.f32.mrb[0].mxu0
    %v5245 = vadd.f32 %v5204, %v5244
    %v5246 = vpop.f32.mrb[0].mxu0
    %v5247 = vpop.f32.mrb[0].mxu0
    %v5248 = vadd.f32 %v5207, %v5247
    %v5249 = vpop.f32.mrb[0].mxu0
    %5250 = vdwg.mxu0
    %5251 = vmatprep.subr.bf16.mxu0 0
    %5252 = vmatpush1.bf16.msra.mxu0 %v4685
    %5253 = vmatprep.subr.bf16.mxu0 0
    %5254 = vmatpush1.bf16.msra.mxu0 %v4686
    %5255 = vmatprep.subr.bf16.mxu0 0
    %5256 = vmatpush1.bf16.msra.mxu0 %v4687
    %5257 = vmatprep.subr.bf16.mxu0 0
    %5258 = vmatpush1.bf16.msra.mxu0 %v4688
    %5259 = vmatprep.subr.bf16.mxu0 0
    %5260 = vmatpush1.bf16.msra.mxu0 %v4689
    %5261 = vmatprep.subr.bf16.mxu0 0
    %5262 = vmatpush1.bf16.msra.mxu0 %v4690
    %5263 = vmatprep.subr.bf16.mxu0 0
    %5264 = vmatpush1.bf16.msra.mxu0 %v4691
    %5265 = vmatprep.subr.bf16.mxu0 0
    %5266 = vmatpush1.bf16.msra.mxu0 %v4692
    %5267 = vmatprep.subr.bf16.mxu0 0
    %5268 = vmatpush1.bf16.msra.mxu0 %v4693
    %5269 = vmatprep.subr.bf16.mxu0 0
    %5270 = vmatpush1.bf16.msra.mxu0 %v4694
    %5271 = vmatprep.subr.bf16.mxu0 0
    %5272 = vmatpush1.bf16.msra.mxu0 %v4695
    %5273 = vmatprep.subr.bf16.mxu0 0
    %5274 = vmatpush1.bf16.msra.mxu0 %v4696
    %5275 = vmatprep.subr.bf16.mxu0 0
    %5276 = vmatpush1.bf16.msra.mxu0 %v4697
    %5277 = vmatprep.subr.bf16.mxu0 0
    %5278 = vmatpush1.bf16.msra.mxu0 %v4698
    %5279 = vmatprep.subr.bf16.mxu0 0
    %5280 = vmatpush1.bf16.msra.mxu0 %v4699
    %5281 = vmatprep.subr.bf16.mxu0 0
    %5282 = vmatpush1.bf16.msra.mxu0 %v4700
    %5283 = vmatprep.mubr.bf16.mxu0 %v3321
    %5284 = vmatmul.mubr.bf16.gmra.mrb[0].mxu0 %v3320
    %v5285 = vpop.f32.mrb[0].mxu0
    %v5286 = vadd.f32 %v5245, %v5285
    %v5287 = vpop.f32.mrb[0].mxu0
    %v5288 = vpop.f32.mrb[0].mxu0
    %v5289 = vadd.f32 %v5248, %v5288
    %v5290 = vpop.f32.mrb[0].mxu0
    %5291 = vdwg.mxu0
    %5292 = vmatprep.subr.bf16.mxu0 0
    %5293 = vmatpush1.bf16.msra.mxu0 %v4701
    %5294 = vmatprep.subr.bf16.mxu0 0
    %5295 = vmatpush1.bf16.msra.mxu0 %v4702
    %5296 = vmatprep.subr.bf16.mxu0 0
    %5297 = vmatpush1.bf16.msra.mxu0 %v4703
    %5298 = vmatprep.subr.bf16.mxu0 0
    %5299 = vmatpush1.bf16.msra.mxu0 %v4704
    %5300 = vmatprep.subr.bf16.mxu0 0
    %5301 = vmatpush1.bf16.msra.mxu0 %v4705
    %5302 = vmatprep.subr.bf16.mxu0 0
    %5303 = vmatpush1.bf16.msra.mxu0 %v4706
    %5304 = vmatprep.subr.bf16.mxu0 0
    %5305 = vmatpush1.bf16.msra.mxu0 %v4707
    %5306 = vmatprep.subr.bf16.mxu0 0
    %5307 = vmatpush1.bf16.msra.mxu0 %v4708
    %5308 = vmatprep.subr.bf16.mxu0 0
    %5309 = vmatpush1.bf16.msra.mxu0 %v4709
    %5310 = vmatprep.subr.bf16.mxu0 0
    %5311 = vmatpush1.bf16.msra.mxu0 %v4710
    %5312 = vmatprep.subr.bf16.mxu0 0
    %5313 = vmatpush1.bf16.msra.mxu0 %v4711
    %5314 = vmatprep.subr.bf16.mxu0 0
    %5315 = vmatpush1.bf16.msra.mxu0 %v4712
    %5316 = vmatprep.subr.bf16.mxu0 0
    %5317 = vmatpush1.bf16.msra.mxu0 %v4713
    %5318 = vmatprep.subr.bf16.mxu0 0
    %5319 = vmatpush1.bf16.msra.mxu0 %v4714
    %5320 = vmatprep.subr.bf16.mxu0 0
    %5321 = vmatpush1.bf16.msra.mxu0 %v4715
    %5322 = vmatprep.subr.bf16.mxu0 0
    %5323 = vmatpush1.bf16.msra.mxu0 %v4716
    %5324 = vmatprep.mubr.bf16.mxu0 %v3323
    %5325 = vmatmul.mubr.bf16.gmra.mrb[0].mxu0 %v3322
    %v5326 = vpop.f32.mrb[0].mxu0
    %v5327 = vadd.f32 %v5286, %v5326
    %v5328 = vpop.f32.mrb[0].mxu0
    %v5329 = vpop.f32.mrb[0].mxu0
    %v5330 = vadd.f32 %v5289, %v5329
    %v5331 = vpop.f32.mrb[0].mxu0
    %5332 = vdwg.mxu0
    %5333 = vmatprep.subr.bf16.mxu0 0
    %5334 = vmatpush1.bf16.msra.mxu0 %v4717
    %5335 = vmatprep.subr.bf16.mxu0 0
    %5336 = vmatpush1.bf16.msra.mxu0 %v4718
    %5337 = vmatprep.subr.bf16.mxu0 0
    %5338 = vmatpush1.bf16.msra.mxu0 %v4719
    %5339 = vmatprep.subr.bf16.mxu0 0
    %5340 = vmatpush1.bf16.msra.mxu0 %v4720
    %5341 = vmatprep.subr.bf16.mxu0 0
    %5342 = vmatpush1.bf16.msra.mxu0 %v4721
    %5343 = vmatprep.subr.bf16.mxu0 0
    %5344 = vmatpush1.bf16.msra.mxu0 %v4722
    %5345 = vmatprep.subr.bf16.mxu0 0
    %5346 = vmatpush1.bf16.msra.mxu0 %v4723
    %5347 = vmatprep.subr.bf16.mxu0 0
    %5348 = vmatpush1.bf16.msra.mxu0 %v4724
    %5349 = vmatprep.subr.bf16.mxu0 0
    %5350 = vmatpush1.bf16.msra.mxu0 %v4725
    %5351 = vmatprep.subr.bf16.mxu0 0
    %5352 = vmatpush1.bf16.msra.mxu0 %v4726
    %5353 = vmatprep.subr.bf16.mxu0 0
    %5354 = vmatpush1.bf16.msra.mxu0 %v4727
    %5355 = vmatprep.subr.bf16.mxu0 0
    %5356 = vmatpush1.bf16.msra.mxu0 %v4728
    %5357 = vmatprep.subr.bf16.mxu0 0
    %5358 = vmatpush1.bf16.msra.mxu0 %v4729
    %5359 = vmatprep.subr.bf16.mxu0 0
    %5360 = vmatpush1.bf16.msra.mxu0 %v4730
    %5361 = vmatprep.subr.bf16.mxu0 0
    %5362 = vmatpush1.bf16.msra.mxu0 %v4731
    %5363 = vmatprep.subr.bf16.mxu0 0
    %5364 = vmatpush1.bf16.msra.mxu0 %v4732
    %5365 = vmatprep.mubr.bf16.mxu0 %v3325
    %5366 = vmatmul.mubr.bf16.gmra.mrb[0].mxu0 %v3324
    %v5367 = vpop.f32.mrb[0].mxu0
    %v5368 = vadd.f32 %v5327, %v5367
    %v5369 = vpop.f32.mrb[0].mxu0
    %v5370 = vpop.f32.mrb[0].mxu0
    %v5371 = vadd.f32 %v5330, %v5370
    %v5372 = vpop.f32.mrb[0].mxu0
    %5373 = vdwg.mxu0
    %5374 = vmatprep.subr.bf16.mxu0 0
    %5375 = vmatpush1.bf16.msra.mxu0 %v4733
    %5376 = vmatprep.subr.bf16.mxu0 0
    %5377 = vmatpush1.bf16.msra.mxu0 %v4734
    %5378 = vmatprep.subr.bf16.mxu0 0
    %5379 = vmatpush1.bf16.msra.mxu0 %v4735
    %5380 = vmatprep.subr.bf16.mxu0 0
    %5381 = vmatpush1.bf16.msra.mxu0 %v4736
    %5382 = vmatprep.subr.bf16.mxu0 0
    %5383 = vmatpush1.bf16.msra.mxu0 %v4737
    %5384 = vmatprep.subr.bf16.mxu0 0
    %5385 = vmatpush1.bf16.msra.mxu0 %v4738
    %5386 = vmatprep.subr.bf16.mxu0 0
    %5387 = vmatpush1.bf16.msra.mxu0 %v4739
    %5388 = vmatprep.subr.bf16.mxu0 0
    %5389 = vmatpush1.bf16.msra.mxu0 %v4740
    %5390 = vmatprep.subr.bf16.mxu0 0
    %5391 = vmatpush1.bf16.msra.mxu0 %v4741
    %5392 = vmatprep.subr.bf16.mxu0 0
    %5393 = vmatpush1.bf16.msra.mxu0 %v4742
    %5394 = vmatprep.subr.bf16.mxu0 0
    %5395 = vmatpush1.bf16.msra.mxu0 %v4743
    %5396 = vmatprep.subr.bf16.mxu0 0
    %5397 = vmatpush1.bf16.msra.mxu0 %v4744
    %5398 = vmatprep.subr.bf16.mxu0 0
    %5399 = vmatpush1.bf16.msra.mxu0 %v4745
    %5400 = vmatprep.subr.bf16.mxu0 0
    %5401 = vmatpush1.bf16.msra.mxu0 %v4746
    %5402 = vmatprep.subr.bf16.mxu0 0
    %5403 = vmatpush1.bf16.msra.mxu0 %v4747
    %5404 = vmatprep.subr.bf16.mxu0 0
    %5405 = vmatpush1.bf16.msra.mxu0 %v4748
    %5406 = vmatprep.mubr.bf16.mxu0 %v3327
    %5407 = vmatmul.mubr.bf16.gmra.mrb[0].mxu0 %v3326
    %v5408 = vpop.f32.mrb[0].mxu0
    %v5409 = vadd.f32 %v5368, %v5408
    %v5410 = vpop.f32.mrb[0].mxu0
    %v5411 = vpop.f32.mrb[0].mxu0
    %v5412 = vadd.f32 %v5371, %v5411
    %v5413 = vpop.f32.mrb[0].mxu0
    %5414 = vdwg.mxu0
    %5415 = vmatprep.subr.bf16.mxu0 0
    %5416 = vmatpush1.bf16.msra.mxu0 %v4749
    %5417 = vmatprep.subr.bf16.mxu0 0
    %5418 = vmatpush1.bf16.msra.mxu0 %v4750
    %5419 = vmatprep.subr.bf16.mxu0 0
    %5420 = vmatpush1.bf16.msra.mxu0 %v4751
    %5421 = vmatprep.subr.bf16.mxu0 0
    %5422 = vmatpush1.bf16.msra.mxu0 %v4752
    %5423 = vmatprep.subr.bf16.mxu0 0
    %5424 = vmatpush1.bf16.msra.mxu0 %v4753
    %5425 = vmatprep.subr.bf16.mxu0 0
    %5426 = vmatpush1.bf16.msra.mxu0 %v4754
    %5427 = vmatprep.subr.bf16.mxu0 0
    %5428 = vmatpush1.bf16.msra.mxu0 %v4755
    %5429 = vmatprep.subr.bf16.mxu0 0
    %5430 = vmatpush1.bf16.msra.mxu0 %v4756
    %5431 = vmatprep.subr.bf16.mxu0 0
    %5432 = vmatpush1.bf16.msra.mxu0 %v4757
    %5433 = vmatprep.subr.bf16.mxu0 0
    %5434 = vmatpush1.bf16.msra.mxu0 %v4758
    %5435 = vmatprep.subr.bf16.mxu0 0
    %5436 = vmatpush1.bf16.msra.mxu0 %v4759
    %5437 = vmatprep.subr.bf16.mxu0 0
    %5438 = vmatpush1.bf16.msra.mxu0 %v4760
    %5439 = vmatprep.subr.bf16.mxu0 0
    %5440 = vmatpush1.bf16.msra.mxu0 %v4761
    %5441 = vmatprep.subr.bf16.mxu0 0
    %5442 = vmatpush1.bf16.msra.mxu0 %v4762
    %5443 = vmatprep.subr.bf16.mxu0 0
    %5444 = vmatpush1.bf16.msra.mxu0 %v4763
    %5445 = vmatprep.subr.bf16.mxu0 0
    %5446 = vmatpush1.bf16.msra.mxu0 %v4764
    %5447 = vmatprep.mubr.bf16.mxu0 %v3329
    %5448 = vmatmul.mubr.bf16.gmra.mrb[0].mxu0 %v3328
    %v5449 = vpop.f32.mrb[0].mxu0
    %v5450 = vadd.f32 %v5409, %v5449
    %v5451 = vpop.f32.mrb[0].mxu0
    %v5452 = vpop.f32.mrb[0].mxu0
    %v5453 = vadd.f32 %v5412, %v5452
    %v5454 = vpop.f32.mrb[0].mxu0
    %5455 = vdwg.mxu0
    %5456 = vmatprep.subr.bf16.mxu0 0
    %5457 = vmatpush1.bf16.msra.mxu0 %v4765
    %5458 = vmatprep.subr.bf16.mxu0 0
    %5459 = vmatpush1.bf16.msra.mxu0 %v4766
    %5460 = vmatprep.subr.bf16.mxu0 0
    %5461 = vmatpush1.bf16.msra.mxu0 %v4767
    %5462 = vmatprep.subr.bf16.mxu0 0
    %5463 = vmatpush1.bf16.msra.mxu0 %v4768
    %5464 = vmatprep.subr.bf16.mxu0 0
    %5465 = vmatpush1.bf16.msra.mxu0 %v4769
    %5466 = vmatprep.subr.bf16.mxu0 0
    %5467 = vmatpush1.bf16.msra.mxu0 %v4770
    %5468 = vmatprep.subr.bf16.mxu0 0
    %5469 = vmatpush1.bf16.msra.mxu0 %v4771
    %5470 = vmatprep.subr.bf16.mxu0 0
    %5471 = vmatpush1.bf16.msra.mxu0 %v4772
    %5472 = vmatprep.subr.bf16.mxu0 0
    %5473 = vmatpush1.bf16.msra.mxu0 %v4773
    %5474 = vmatprep.subr.bf16.mxu0 0
    %5475 = vmatpush1.bf16.msra.mxu0 %v4774
    %5476 = vmatprep.subr.bf16.mxu0 0
    %5477 = vmatpush1.bf16.msra.mxu0 %v4775
    %5478 = vmatprep.subr.bf16.mxu0 0
    %5479 = vmatpush1.bf16.msra.mxu0 %v4776
    %5480 = vmatprep.subr.bf16.mxu0 0
    %5481 = vmatpush1.bf16.msra.mxu0 %v4777
    %5482 = vmatprep.subr.bf16.mxu0 0
    %5483 = vmatpush1.bf16.msra.mxu0 %v4778
    %5484 = vmatprep.subr.bf16.mxu0 0
    %5485 = vmatpush1.bf16.msra.mxu0 %v4779
    %5486 = vmatprep.subr.bf16.mxu0 0
    %5487 = vmatpush1.bf16.msra.mxu0 %v4780
    %5488 = vmatprep.mubr.bf16.mxu0 %v3331
    %5489 = vmatmul.mubr.bf16.gmra.mrb[0].mxu0 %v3330
    %v5490 = vpop.f32.mrb[0].mxu0
    %v5491 = vadd.f32 %v5450, %v5490
    %v5492 = vpop.f32.mrb[0].mxu0
    %v5493 = vpop.f32.mrb[0].mxu0
    %v5494 = vadd.f32 %v5453, %v5493
    %v5495 = vpop.f32.mrb[0].mxu0
    %5496 = vdwg.mxu0
    %5497 = vmatprep.subr.bf16.mxu0 0
    %5498 = vmatpush1.bf16.msra.mxu0 %v4781
    %5499 = vmatprep.subr.bf16.mxu0 0
    %5500 = vmatpush1.bf16.msra.mxu0 %v4782
    %5501 = vmatprep.subr.bf16.mxu0 0
    %5502 = vmatpush1.bf16.msra.mxu0 %v4783
    %5503 = vmatprep.subr.bf16.mxu0 0
    %5504 = vmatpush1.bf16.msra.mxu0 %v4784
    %5505 = vmatprep.subr.bf16.mxu0 0
    %5506 = vmatpush1.bf16.msra.mxu0 %v4785
    %5507 = vmatprep.subr.bf16.mxu0 0
    %5508 = vmatpush1.bf16.msra.mxu0 %v4786
    %5509 = vmatprep.subr.bf16.mxu0 0
    %5510 = vmatpush1.bf16.msra.mxu0 %v4787
    %5511 = vmatprep.subr.bf16.mxu0 0
    %5512 = vmatpush1.bf16.msra.mxu0 %v4788
    %5513 = vmatprep.subr.bf16.mxu0 0
    %5514 = vmatpush1.bf16.msra.mxu0 %v4789
    %5515 = vmatprep.subr.bf16.mxu0 0
    %5516 = vmatpush1.bf16.msra.mxu0 %v4790
    %5517 = vmatprep.subr.bf16.mxu0 0
    %5518 = vmatpush1.bf16.msra.mxu0 %v4791
    %5519 = vmatprep.subr.bf16.mxu0 0
    %5520 = vmatpush1.bf16.msra.mxu0 %v4792
    %5521 = vmatprep.subr.bf16.mxu0 0
    %5522 = vmatpush1.bf16.msra.mxu0 %v4793
    %5523 = vmatprep.subr.bf16.mxu0 0
    %5524 = vmatpush1.bf16.msra.mxu0 %v4794
    %5525 = vmatprep.subr.bf16.mxu0 0
    %5526 = vmatpush1.bf16.msra.mxu0 %v4795
    %5527 = vmatprep.subr.bf16.mxu0 0
    %5528 = vmatpush1.bf16.msra.mxu0 %v4796
    %5529 = vmatprep.mubr.bf16.mxu0 %v3333
    %5530 = vmatmul.mubr.bf16.gmra.mrb[0].mxu0 %v3332
    %v5531 = vpop.f32.mrb[0].mxu0
    %v5532 = vadd.f32 %v5491, %v5531
    %v5533 = vpop.f32.mrb[0].mxu0
    %v5534 = vpop.f32.mrb[0].mxu0
    %v5535 = vadd.f32 %v5494, %v5534
    %v5536 = vpop.f32.mrb[0].mxu0
    %5537 = vdwg.mxu0
    %vm5538 = vcmp.gt.f32.partialorder %v5532, 0.0
    %vm5539 = vcmp.gt.f32.partialorder %v5535, 0.0
    %v5540 = vmin.f32 %v5532, 0.0
    %v5541 = vmin.f32 %v5535, 0.0
    %v5542 = vmul.f32 %v5540, 1.442695
    %v5543 = vpow.pop %v5542
    %v5544 = vmul.f32 %v5541, 1.442695
    %v5545 = vpow.pop %v5544
    %v5546 = vsub.f32 %v5543, 1.0
    %v5547 = vsub.f32 %v5545, 1.0
    %v5548 = vsel %vm5538, %v5532, %v5546
    %v5549 = vsel %vm5539, %v5535, %v5547
    %v5550 = vpack.c.bf16 %v5549, %v5548
    %v5551 = vld [vmem:[%s9] sm:$0xf]
    %v5552 = vld [vmem:[%s9 + $0x4] sm:$0xf]
    %v5553 = vld [vmem:[%s9 + $0x8] sm:$0xf]
    %v5554 = vld [vmem:[%s9 + $0xc] sm:$0xf]
    %v5555 = vld [vmem:[%s9 + $0x10] sm:$0xf]
    %v5556 = vld [vmem:[%s9 + $0x14] sm:$0xf]
    %v5557 = vld [vmem:[%s9 + $0x18] sm:$0xf]
    %v5558 = vld [vmem:[%s9 + $0x1c] sm:$0xf]
    %v5559 = vld [vmem:[%s9 + $0x20] sm:$0xf]
    %v5560 = vld [vmem:[%s9 + $0x24] sm:$0xf]
    %v5561 = vld [vmem:[%s9 + $0x28] sm:$0xf]
    %v5562 = vld [vmem:[%s9 + $0x2c] sm:$0xf]
    %v5563 = vld [vmem:[%s9 + $0x30] sm:$0xf]
    %v5564 = vld [vmem:[%s9 + $0x34] sm:$0xf]
    %v5565 = vld [vmem:[%s9 + $0x38] sm:$0xf]
    %v5566 = vld [vmem:[%s9 + $0x3c] sm:$0xf]
    %v5567 = vld [vmem:[%s9 + $0x40] sm:$0xf]
    %v5568 = vld [vmem:[%s9 + $0x44] sm:$0xf]
    %v5569 = vld [vmem:[%s9 + $0x48] sm:$0xf]
    %v5570 = vld [vmem:[%s9 + $0x4c] sm:$0xf]
    %v5571 = vld [vmem:[%s9 + $0x50] sm:$0xf]
    %v5572 = vld [vmem:[%s9 + $0x54] sm:$0xf]
    %v5573 = vld [vmem:[%s9 + $0x58] sm:$0xf]
    %v5574 = vld [vmem:[%s9 + $0x5c] sm:$0xf]
    %v5575 = vld [vmem:[%s9 + $0x60] sm:$0xf]
    %v5576 = vld [vmem:[%s9 + $0x64] sm:$0xf]
    %v5577 = vld [vmem:[%s9 + $0x68] sm:$0xf]
    %v5578 = vld [vmem:[%s9 + $0x6c] sm:$0xf]
    %v5579 = vld [vmem:[%s9 + $0x70] sm:$0xf]
    %v5580 = vld [vmem:[%s9 + $0x74] sm:$0xf]
    %v5581 = vld [vmem:[%s9 + $0x78] sm:$0xf]
    %v5582 = vld [vmem:[%s9 + $0x7c] sm:$0xf]
    %v5583 = vld [vmem:[%s9 + $0x80] sm:$0xf]
    %v5584 = vld [vmem:[%s9 + $0x84] sm:$0xf]
    %v5585 = vld [vmem:[%s9 + $0x88] sm:$0xf]
    %v5586 = vld [vmem:[%s9 + $0x8c] sm:$0xf]
    %v5587 = vld [vmem:[%s9 + $0x90] sm:$0xf]
    %v5588 = vld [vmem:[%s9 + $0x94] sm:$0xf]
    %v5589 = vld [vmem:[%s9 + $0x98] sm:$0xf]
    %v5590 = vld [vmem:[%s9 + $0x9c] sm:$0xf]
    %v5591 = vld [vmem:[%s9 + $0xa0] sm:$0xf]
    %v5592 = vld [vmem:[%s9 + $0xa4] sm:$0xf]
    %v5593 = vld [vmem:[%s9 + $0xa8] sm:$0xf]
    %v5594 = vld [vmem:[%s9 + $0xac] sm:$0xf]
    %v5595 = vld [vmem:[%s9 + $0xb0] sm:$0xf]
    %v5596 = vld [vmem:[%s9 + $0xb4] sm:$0xf]
    %v5597 = vld [vmem:[%s9 + $0xb8] sm:$0xf]
    %v5598 = vld [vmem:[%s9 + $0xbc] sm:$0xf]
    %v5599 = vld [vmem:[%s9 + $0xc0] sm:$0xf]
    %v5600 = vld [vmem:[%s9 + $0xc4] sm:$0xf]
    %v5601 = vld [vmem:[%s9 + $0xc8] sm:$0xf]
    %v5602 = vld [vmem:[%s9 + $0xcc] sm:$0xf]
    %v5603 = vld [vmem:[%s9 + $0xd0] sm:$0xf]
    %v5604 = vld [vmem:[%s9 + $0xd4] sm:$0xf]
    %v5605 = vld [vmem:[%s9 + $0xd8] sm:$0xf]
    %v5606 = vld [vmem:[%s9 + $0xdc] sm:$0xf]
    %v5607 = vld [vmem:[%s9 + $0xe0] sm:$0xf]
    %v5608 = vld [vmem:[%s9 + $0xe4] sm:$0xf]
    %v5609 = vld [vmem:[%s9 + $0xe8] sm:$0xf]
    %v5610 = vld [vmem:[%s9 + $0xec] sm:$0xf]
    %v5611 = vld [vmem:[%s9 + $0xf0] sm:$0xf]
    %v5612 = vld [vmem:[%s9 + $0xf4] sm:$0xf]
    %v5613 = vld [vmem:[%s9 + $0xf8] sm:$0xf]
    %v5614 = vld [vmem:[%s9 + $0xfc] sm:$0xf]
    %v5615 = vld [vmem:[%s10] sm:$0x1]
    %v5617 = vlaneseq
    %v5618 = vshrl.u32 %v5617, 7
    %v5619 = vsub.s32 0, %v5618
    %v5620 = vrot.slane %v5615, %v5619
    %v5686 = vunpack.c.l.b16 %v5551
    %v5687 = vunpack.c.l.b16 %v5552
    %v5688 = vunpack.c.l.b16 %v5553
    %v5689 = vunpack.c.l.b16 %v5554
    %v5690 = vunpack.c.l.b16 %v5555
    %v5691 = vunpack.c.l.b16 %v5556
    %v5692 = vunpack.c.l.b16 %v5557
    %v5693 = vunpack.c.l.b16 %v5558
    %v5694 = vunpack.c.l.b16 %v5559
    %v5695 = vunpack.c.l.b16 %v5560
    %v5696 = vunpack.c.l.b16 %v5561
    %v5697 = vunpack.c.l.b16 %v5562
    %v5698 = vunpack.c.l.b16 %v5563
    %v5699 = vunpack.c.l.b16 %v5564
    %v5700 = vunpack.c.l.b16 %v5565
    %v5701 = vunpack.c.l.b16 %v5566
    %v5702 = vunpack.c.l.b16 %v5567
    %v5703 = vunpack.c.l.b16 %v5568
    %v5704 = vunpack.c.l.b16 %v5569
    %v5705 = vunpack.c.l.b16 %v5570
    %v5706 = vunpack.c.l.b16 %v5571
    %v5707 = vunpack.c.l.b16 %v5572
    %v5708 = vunpack.c.l.b16 %v5573
    %v5709 = vunpack.c.l.b16 %v5574
    %v5710 = vunpack.c.l.b16 %v5575
    %v5711 = vunpack.c.l.b16 %v5576
    %v5712 = vunpack.c.l.b16 %v5577
    %v5713 = vunpack.c.l.b16 %v5578
    %v5714 = vunpack.c.l.b16 %v5579
    %v5715 = vunpack.c.l.b16 %v5580
    %v5716 = vunpack.c.l.b16 %v5581
    %v5717 = vunpack.c.l.b16 %v5582
    %v5718 = vunpack.c.l.b16 %v5583
    %v5719 = vunpack.c.l.b16 %v5584
    %v5720 = vunpack.c.l.b16 %v5585
    %v5721 = vunpack.c.l.b16 %v5586
    %v5722 = vunpack.c.l.b16 %v5587
    %v5723 = vunpack.c.l.b16 %v5588
    %v5724 = vunpack.c.l.b16 %v5589
    %v5725 = vunpack.c.l.b16 %v5590
    %v5726 = vunpack.c.l.b16 %v5591
    %v5727 = vunpack.c.l.b16 %v5592
    %v5728 = vunpack.c.l.b16 %v5593
    %v5729 = vunpack.c.l.b16 %v5594
    %v5730 = vunpack.c.l.b16 %v5595
    %v5731 = vunpack.c.l.b16 %v5596
    %v5732 = vunpack.c.l.b16 %v5597
    %v5733 = vunpack.c.l.b16 %v5598
    %v5734 = vunpack.c.l.b16 %v5599
    %v5735 = vunpack.c.l.b16 %v5600
    %v5736 = vunpack.c.l.b16 %v5601
    %v5737 = vunpack.c.l.b16 %v5602
    %v5738 = vunpack.c.l.b16 %v5603
    %v5739 = vunpack.c.l.b16 %v5604
    %v5740 = vunpack.c.l.b16 %v5605
    %v5741 = vunpack.c.l.b16 %v5606
    %v5742 = vunpack.c.l.b16 %v5607
    %v5743 = vunpack.c.l.b16 %v5608
    %v5744 = vunpack.c.l.b16 %v5609
    %v5745 = vunpack.c.l.b16 %v5610
    %v5746 = vunpack.c.l.b16 %v5611
    %v5747 = vunpack.c.l.b16 %v5612
    %v5748 = vunpack.c.l.b16 %v5613
    %v5749 = vunpack.c.l.b16 %v5614
    %v5750 = vpack.c.b16 %v5687, %v5686
    %v5751 = vpack.c.b16 %v5689, %v5688
    %v5752 = vpack.c.b16 %v5691, %v5690
    %v5753 = vpack.c.b16 %v5693, %v5692
    %v5754 = vpack.c.b16 %v5695, %v5694
    %v5755 = vpack.c.b16 %v5697, %v5696
    %v5756 = vpack.c.b16 %v5699, %v5698
    %v5757 = vpack.c.b16 %v5701, %v5700
    %v5758 = vpack.c.b16 %v5703, %v5702
    %v5759 = vpack.c.b16 %v5705, %v5704
    %v5760 = vpack.c.b16 %v5707, %v5706
    %v5761 = vpack.c.b16 %v5709, %v5708
    %v5762 = vpack.c.b16 %v5711, %v5710
    %v5763 = vpack.c.b16 %v5713, %v5712
    %v5764 = vpack.c.b16 %v5715, %v5714
    %v5765 = vpack.c.b16 %v5717, %v5716
    %v5766 = vpack.c.b16 %v5719, %v5718
    %v5767 = vpack.c.b16 %v5721, %v5720
    %v5768 = vpack.c.b16 %v5723, %v5722
    %v5769 = vpack.c.b16 %v5725, %v5724
    %v5770 = vpack.c.b16 %v5727, %v5726
    %v5771 = vpack.c.b16 %v5729, %v5728
    %v5772 = vpack.c.b16 %v5731, %v5730
    %v5773 = vpack.c.b16 %v5733, %v5732
    %v5774 = vpack.c.b16 %v5735, %v5734
    %v5775 = vpack.c.b16 %v5737, %v5736
    %v5776 = vpack.c.b16 %v5739, %v5738
    %v5777 = vpack.c.b16 %v5741, %v5740
    %v5778 = vpack.c.b16 %v5743, %v5742
    %v5779 = vpack.c.b16 %v5745, %v5744
    %v5780 = vpack.c.b16 %v5747, %v5746
    %v5781 = vpack.c.b16 %v5749, %v5748
    %5814 = vmatprep.subr.bf16.mxu0 0
    %5815 = vmatpush1.bf16.msra.mxu0 %v5750
    %5816 = vmatprep.subr.bf16.mxu0 0
    %5817 = vmatpush1.bf16.msra.mxu0 %v5751
    %5818 = vmatprep.subr.bf16.mxu0 0
    %5819 = vmatpush1.bf16.msra.mxu0 %v5752
    %5820 = vmatprep.subr.bf16.mxu0 0
    %5821 = vmatpush1.bf16.msra.mxu0 %v5753
    %5822 = vmatprep.subr.bf16.mxu0 0
    %5823 = vmatpush1.bf16.msra.mxu0 %v5754
    %5824 = vmatprep.subr.bf16.mxu0 0
    %5825 = vmatpush1.bf16.msra.mxu0 %v5755
    %5826 = vmatprep.subr.bf16.mxu0 0
    %5827 = vmatpush1.bf16.msra.mxu0 %v5756
    %5828 = vmatprep.subr.bf16.mxu0 0
    %5829 = vmatpush1.bf16.msra.mxu0 %v5757
    %5830 = vmatprep.subr.bf16.mxu0 0
    %5831 = vmatpush1.bf16.msra.mxu0 %v5758
    %5832 = vmatprep.subr.bf16.mxu0 0
    %5833 = vmatpush1.bf16.msra.mxu0 %v5759
    %5834 = vmatprep.subr.bf16.mxu0 0
    %5835 = vmatpush1.bf16.msra.mxu0 %v5760
    %5836 = vmatprep.subr.bf16.mxu0 0
    %5837 = vmatpush1.bf16.msra.mxu0 %v5761
    %5838 = vmatprep.subr.bf16.mxu0 0
    %5839 = vmatpush1.bf16.msra.mxu0 %v5762
    %5840 = vmatprep.subr.bf16.mxu0 0
    %5841 = vmatpush1.bf16.msra.mxu0 %v5763
    %5842 = vmatprep.subr.bf16.mxu0 0
    %5843 = vmatpush1.bf16.msra.mxu0 %v5764
    %5844 = vmatprep.subr.bf16.mxu0 0
    %5845 = vmatpush1.bf16.msra.mxu0 %v5765
    %5846 = vmatprep.mubr.bf16.mxu0 %v2834
    %5847 = vmatmul.mubr.bf16.gmra.mrb[0].mxu0 %v108
    %v5848 = vpop.f32.mrb[0].mxu0
    %v5849 = vadd.f32 %v5620, %v5848
    %v5850 = vpop.f32.mrb[0].mxu0
    %v5851 = vpop.f32.mrb[0].mxu0
    %v5852 = vadd.f32 %v5620, %v5851
    %v5853 = vpop.f32.mrb[0].mxu0
    %5854 = vdwg.mxu0
    %5855 = vmatprep.subr.bf16.mxu0 0
    %5856 = vmatpush1.bf16.msra.mxu0 %v5766
    %5857 = vmatprep.subr.bf16.mxu0 0
    %5858 = vmatpush1.bf16.msra.mxu0 %v5767
    %5859 = vmatprep.subr.bf16.mxu0 0
    %5860 = vmatpush1.bf16.msra.mxu0 %v5768
    %5861 = vmatprep.subr.bf16.mxu0 0
    %5862 = vmatpush1.bf16.msra.mxu0 %v5769
    %5863 = vmatprep.subr.bf16.mxu0 0
    %5864 = vmatpush1.bf16.msra.mxu0 %v5770
    %5865 = vmatprep.subr.bf16.mxu0 0
    %5866 = vmatpush1.bf16.msra.mxu0 %v5771
    %5867 = vmatprep.subr.bf16.mxu0 0
    %5868 = vmatpush1.bf16.msra.mxu0 %v5772
    %5869 = vmatprep.subr.bf16.mxu0 0
    %5870 = vmatpush1.bf16.msra.mxu0 %v5773
    %5871 = vmatprep.subr.bf16.mxu0 0
    %5872 = vmatpush1.bf16.msra.mxu0 %v5774
    %5873 = vmatprep.subr.bf16.mxu0 0
    %5874 = vmatpush1.bf16.msra.mxu0 %v5775
    %5875 = vmatprep.subr.bf16.mxu0 0
    %5876 = vmatpush1.bf16.msra.mxu0 %v5776
    %5877 = vmatprep.subr.bf16.mxu0 0
    %5878 = vmatpush1.bf16.msra.mxu0 %v5777
    %5879 = vmatprep.subr.bf16.mxu0 0
    %5880 = vmatpush1.bf16.msra.mxu0 %v5778
    %5881 = vmatprep.subr.bf16.mxu0 0
    %5882 = vmatpush1.bf16.msra.mxu0 %v5779
    %5883 = vmatprep.subr.bf16.mxu0 0
    %5884 = vmatpush1.bf16.msra.mxu0 %v5780
    %5885 = vmatprep.subr.bf16.mxu0 0
    %5886 = vmatpush1.bf16.msra.mxu0 %v5781
    %5887 = vmatprep.mubr.bf16.mxu0 %v5550
    %5888 = vmatmul.mubr.bf16.gmra.mrb[0].mxu0 %v3075
    %v5889 = vpop.f32.mrb[0].mxu0
    %v5890 = vadd.f32 %v5849, %v5889
    %v5891 = vpop.f32.mrb[0].mxu0
    %v5892 = vpop.f32.mrb[0].mxu0
    %v5893 = vadd.f32 %v5852, %v5892
    %v5894 = vpop.f32.mrb[0].mxu0
    %5895 = vdwg.mxu0
    %5896 = vst [vmem:[#allocation11] sm:$0xff] %v5890
    %5897 = vst [vmem:[#allocation11 + $0x8] sm:$0xff] %v5893
    // Predicated region
    $region66: #{tpu_custom_call.1} parent=1 // pred_check
      _
    $region67: #{tpu_custom_call.1} parent=1 // pred_check_branch
      %5899 = sbr.rel (0) target = $region69
    $region68: #{tpu_custom_call.1} parent=1 // pred_region
      %s5901 = ssub.s32 256, 256
      %5902 = vsyncadd [#allocation4], %s5901
      %s5903 = sshll.u32 [#allocation11], 4
      %s5904 = int_to_ptr.vmem [resolvable:$true] %s5903
      %5909 = dma.vmem_to_hbm [thread:$0]  %s5904, 256, %s11, [#allocation4], 128, 128, 8
    $region69: #{tpu_custom_call.1} parent=1 // pred_fallthru
      _
    // Predicated region
    $region70: #{tpu_custom_call.1} parent=1 // pred_check
      _
    $region71: #{tpu_custom_call.1} parent=1 // pred_check_branch
      %5911 = sbr.rel (0) target = $region73
    $region72: #{tpu_custom_call.1} parent=1 // pred_region
      %5912 = dma.done [#allocation4], 256
    $region73: #{tpu_custom_call.1} parent=1 // pred_fallthru
      _
    %5913 = vsyncpa [#allocation3], 1
    %5914 = vsyncpa [#allocation6], 1
    %5915 = vsyncpa [#allocation9], 1
    %5916 = vsyncpa [#allocation4], 1

</llo_original>
